<compile_context>
chip_gen: v7x
topology: tpu7x:2x2x1
jax: 0.10.0
libtpu: 0.0.40
codegen_flags: <defaults>
</compile_context>

<pallas_src>
import jax
import jax.numpy as jnp
from jax.experimental import pallas as pl
from jax.experimental.pallas import tpu as pltpu

NUM_CLASSES = 3
LATENT = 2
L_IN = 73          # fc4 expects 4*70 features -> input length 70 + 3 = 73
SEG = 128          # lanes per batch element inside the packed layout

# ----------------------------- parameter layout --------------------------------
# (name, kind, Cout, Cin); kinds: "k3" conv k=3, "k1" conv k=1,
# "cin1" conv k=3 with Cin=1 (VPU path), "dc" ConvTranspose1d k=2.
_CONV_LAYERS = [
    ("conv1_1", "cin1", 16, 1),
    ("conv1_2", "k3", 16, 16),
    ("conv2_1", "k3", 32, 16),
    ("conv2_2", "k3", 32, 32),
    ("conv3_1", "k3", 32, 32),
    ("conv3_2", "k3", 32, 32),
    ("conv3_3", "k1", 4, 32),
    ("btl1",    "k3", 1, 16),
    ("btlu1",   "cin1", 16, 1),
    ("btl2",    "k3", 8, 32),
    ("btlu2",   "k3", 32, 8),
    ("btl3",    "k3", 8, 32),
    ("btlu3",   "k3", 32, 8),
    ("deconv1", "dc", 1, 16),
    ("deconv2", "dc", 16, 32),
    ("deconv3", "dc", 32, 32),
]


def _blob_rows(kind, cout):
    return 2 * cout if kind == "dc" else cout


def _blob_cols(kind, cin):
    return {"cin1": 4, "k3": 3 * cin + 1, "k1": cin + 1, "dc": cin + 1}[kind]


_OFF = {}
_r = 0
for _n, _k, _co, _ci in _CONV_LAYERS:
    _OFF[_n] = _r
    _r += -(-_blob_rows(_k, _co) // 8) * 8          # 8-aligned row offsets
R_TOTAL = _r                                        # 376

_PRELU_ORDER = ["prelu1_1", "prelu1_2", "prelu2_1", "prelu2_2", "prelu3_1",
                "prelu3_2", "prelu3_3", "prelubtl1", "prelubtl2", "prelubtl3",
                "prelud1", "prelud2", "prelud3"]
_SLOPE_IDX = {n: i for i, n in enumerate(_PRELU_ORDER)}


def _pack_weight_blob(P):
    """Pack every conv/deconv weight (bias folded in) into one (R_TOTAL, 128) blob."""
    blob = jnp.zeros((R_TOTAL, SEG), jnp.float32)
    for name, kind, cout, cin in _CONV_LAYERS:
        w = P[name + ".w"].astype(jnp.float32)
        b = P[name + ".b"].astype(jnp.float32)
        if kind == "cin1":                       # Conv1d(1, cout, 3): w (cout, 1, 3)
            blk = jnp.concatenate([w[:, 0, :], b[:, None]], axis=1)          # (cout, 4)
        elif kind == "k3":                       # w (cout, cin, 3)
            blk = jnp.concatenate([w[:, :, 0], w[:, :, 1], w[:, :, 2],
                                   b[:, None]], axis=1)                      # (cout, 3cin+1)
        elif kind == "k1":                       # w (cout, cin, 1)
            blk = jnp.concatenate([w[:, :, 0], b[:, None]], axis=1)          # (cout, cin+1)
        else:                                    # "dc": ConvTranspose1d: w (cin, cout, 2)
            top = jnp.concatenate([w[:, :, 0].T, b[:, None]], axis=1)        # bias in W0 half
            bot = jnp.concatenate([w[:, :, 1].T,
                                   jnp.zeros((cout, 1), jnp.float32)], axis=1)
            blk = jnp.concatenate([top, bot], axis=0)                        # (2cout, cin+1)
        off = _OFF[name]
        blob = blob.at[off:off + blk.shape[0], :blk.shape[1]].set(blk)
    return blob


# ------------------------------- Pallas kernel ---------------------------------

def _dhrnet_kernel(x_ref, w_ref, slope_ref,
                   x4c_ref, g0_ref, z3_ref, z2_ref, z1_ref):
    f32 = jnp.float32
    x = x_ref[0].astype(f32)                                   # (1, N)
    N = x.shape[1]
    ones = jnp.ones((1, N), f32)
    lane = jax.lax.broadcasted_iota(jnp.int32, (1, N), 1) & (SEG - 1)

    def mask(v, length):                 # zero the per-element padding columns
        return jnp.where(lane < length, v, 0.0)

    def prelu(v, name):
        a = slope_ref[_SLOPE_IDX[name]]
        return jnp.where(v >= 0.0, v, a * v)

    def sh_r(v):                         # v[t-1]; boundary column explicitly zero
        zc = jnp.zeros((v.shape[0], 1), f32)
        return jnp.concatenate([zc, v[:, :N - 1]], axis=1)

    def sh_l(v):                         # v[t+1]
        zc = jnp.zeros((v.shape[0], 1), f32)
        return jnp.concatenate([v[:, 1:], zc], axis=1)

    def wslab(name, rows, cols):
        off = _OFF[name]
        return w_ref[off:off + rows, 0:cols]

    def conv3(v, name, cout, cin):       # fused 3-tap conv + bias as one matmul
        W = wslab(name, cout, 3 * cin + 1)
        xs = jnp.concatenate([sh_r(v), v, sh_l(v), ones], axis=0)
        return jnp.dot(W, xs, preferred_element_type=f32)

    def conv1x1(v, name, cout, cin):     # k=1 conv + bias
        W = wslab(name, cout, cin + 1)
        xs = jnp.concatenate([v, ones], axis=0)
        return jnp.dot(W, xs, preferred_element_type=f32)

    def conv3_cin1(v, name, cout):       # Cin=1 conv on the VPU (no MXU)
        W = wslab(name, cout, 4)                                # [w0 | w1 | w2 | b]
        return (W[:, 0:1] * sh_r(v) + W[:, 1:2] * v
                + W[:, 2:3] * sh_l(v) + W[:, 3:4])

    def deconv2(v, name, cout, cin):     # fused ConvTranspose1d(k=2) as one matmul
        W = wslab(name, 2 * cout, cin + 1)
        xs = jnp.concatenate([v, ones], axis=0)
        y2 = jnp.dot(W, xs, preferred_element_type=f32)
        return y2[0:cout] + sh_r(y2[cout:2 * cout])

    def maxpool(v):                      # max_pool1d(kernel=2, stride=1)
        return jnp.maximum(v, sh_l(v))

    # ----- encoder -----
    x1 = mask(prelu(conv3_cin1(x, "conv1_1", 16), "prelu1_1"), 73)
    x1 = mask(prelu(conv3(x1, "conv1_2", 16, 16), "prelu1_2"), 73)
    x1 = mask(maxpool(x1), 72)                                   # (16, N) valid 72

    x2 = mask(prelu(conv3(x1, "conv2_1", 32, 16), "prelu2_1"), 72)
    x2 = mask(prelu(conv3(x2, "conv2_2", 32, 32), "prelu2_2"), 72)
    x2 = mask(maxpool(x2), 71)                                   # (32, N) valid 71

    x3 = mask(prelu(conv3(x2, "conv3_1", 32, 32), "prelu3_1"), 71)
    x3 = mask(prelu(conv3(x3, "conv3_2", 32, 32), "prelu3_2"), 71)
    x3 = mask(maxpool(x3), 70)                                   # (32, N) valid 70

    x4c = mask(prelu(conv1x1(x3, "conv3_3", 4, 32), "prelu3_3"), 70)   # (4, N)

    # ----- bottlenecks -----
    z3 = mask(prelu(conv3(x3, "btl3", 8, 32), "prelubtl3"), 70)
    z2 = mask(prelu(conv3(x2, "btl2", 8, 32), "prelubtl2"), 71)
    z1 = mask(prelu(conv3(x1, "btl1", 1, 16), "prelubtl1"), 72)

    j3 = mask(conv3(z3, "btlu3", 32, 8), 70)
    j2 = mask(conv3(z2, "btlu2", 32, 8), 71)
    j1 = mask(conv3_cin1(z1, "btlu1", 16), 72)

    # ----- decoder -----
    g2 = mask(prelu(deconv2(j3, "deconv3", 32, 32), "prelud3"), 71)
    g1 = mask(prelu(deconv2(j2 + g2, "deconv2", 16, 32), "prelud2"), 72)
    g0 = mask(prelu(deconv2(j1 + g1, "deconv1", 1, 16), "prelud1"), 73)

    x4c_ref[0] = x4c
    g0_ref[0] = g0
    z3_ref[0] = z3
    z2_ref[0] = z2
    z1_ref[0] = z1


# --------------------------------- wrapper -------------------------------------

def _next_pow2(n):
    return 1 if n <= 1 else 1 << (n - 1).bit_length()


@jax.jit
def dhrnet_forward(x, params):
    B = x.shape[0]
    Bt = min(64, _next_pow2(B))              # batch tile (VMEM-safe on v7x's 64 MiB)
    n_tiles = -(-B // Bt)
    Bp = n_tiles * Bt
    N = Bt * SEG

    # pack the batch tile along the lane axis: element b -> lanes [b*128, b*128+73)
    xp = jnp.pad(x.astype(jnp.float32),
                 ((0, Bp - B), (0, 0), (0, SEG - L_IN)))         # (Bp, 1, 128)
    xp = xp.reshape(n_tiles, Bt, 1, SEG).transpose(0, 2, 1, 3).reshape(n_tiles, 1, N)

    blob = _pack_weight_blob(params)                             # (376, 128)
    slopes = jnp.stack([params[n].reshape(()) for n in _PRELU_ORDER]).astype(jnp.float32)

    grid_spec = pltpu.PrefetchScalarGridSpec(
        num_scalar_prefetch=0,
        grid=(n_tiles,),
        in_specs=[
            pl.BlockSpec((1, 1, N), lambda t: (t, 0, 0)),
            pl.BlockSpec((R_TOTAL, SEG), lambda t: (0, 0)),
            pl.BlockSpec(memory_space=pltpu.MemorySpace.SMEM),
        ],
        out_specs=(
            pl.BlockSpec((1, 4, N), lambda t: (t, 0, 0)),   # x4c
            pl.BlockSpec((1, 1, N), lambda t: (t, 0, 0)),   # g0
            pl.BlockSpec((1, 8, N), lambda t: (t, 0, 0)),   # z3
            pl.BlockSpec((1, 8, N), lambda t: (t, 0, 0)),   # z2
            pl.BlockSpec((1, 1, N), lambda t: (t, 0, 0)),   # z1
        ),
    )
    out_shape = (
        jax.ShapeDtypeStruct((n_tiles, 4, N), jnp.float32),
        jax.ShapeDtypeStruct((n_tiles, 1, N), jnp.float32),
        jax.ShapeDtypeStruct((n_tiles, 8, N), jnp.float32),
        jax.ShapeDtypeStruct((n_tiles, 8, N), jnp.float32),
        jax.ShapeDtypeStruct((n_tiles, 1, N), jnp.float32),
    )

    flops = 2_600_000 * Bp                                    # ~1.3 MMAC / element
    bytes_accessed = 4 * (Bp * SEG * (1 + 4 + 1 + 8 + 8 + 1) + R_TOTAL * SEG + 64)

    x4c_p, g0_p, z3_p, z2_p, z1_p = pl.pallas_call(
        _dhrnet_kernel,
        out_shape=out_shape,
        grid_spec=grid_spec,
        compiler_params=pltpu.CompilerParams(dimension_semantics=("parallel",)),
        cost_estimate=pl.CostEstimate(flops=flops, transcendentals=0,
                                      bytes_accessed=bytes_accessed),
    )(xp, blob, slopes)

    def unpack(p, length):
        C = p.shape[1]
        q = p.reshape(n_tiles, C, Bt, SEG).transpose(0, 2, 1, 3).reshape(Bp, C, SEG)
        return q[:B, :, :length]

    x4c = unpack(x4c_p, 70)                                   # (B, 4, 70)
    g0 = unpack(g0_p, 73)
    z3 = unpack(z3_p, 70)
    z2 = unpack(z2_p, 71)
    z1 = unpack(z1_p, 72)

    # fc head (tiny; needs batch-major layout -> done here, see TODO(synk) above)
    h = x4c.reshape(B, 4 * 70)
    a4 = params["prelufc4"].reshape(())
    y4 = h @ params["fc4.w"].T + params["fc4.b"]
    y4 = jnp.where(y4 >= 0.0, y4, a4 * y4)
    y5 = y4 @ params["fc5.w"].T + params["fc5.b"]

    # matches PyTorch return: (x5, x4, g0, [z3, z2, z1])
    return y5, y4, g0, [z3, z2, z1]


# ------------------------- parameters & pure-JAX reference ---------------------

def init_params(key):
    specs = {
        "conv1_1.w": (16, 1, 3),  "conv1_1.b": (16,),
        "conv1_2.w": (16, 16, 3), "conv1_2.b": (16,),
        "conv2_1.w": (32, 16, 3), "conv2_1.b": (32,),
        "conv2_2.w": (32, 32, 3), "conv2_2.b": (32,),
        "conv3_1.w": (32, 32, 3), "conv3_1.b": (32,),
        "conv3_2.w": (32, 32, 3), "conv3_2.b": (32,),
        "conv3_3.w": (4, 32, 1),  "conv3_3.b": (4,),
        "btl1.w": (1, 16, 3),     "btl1.b": (1,),
        "btlu1.w": (16, 1, 3),    "btlu1.b": (16,),
        "btl2.w": (8, 32, 3),     "btl2.b": (8,),
        "btlu2.w": (32, 8, 3),    "btlu2.b": (32,),
        "btl3.w": (8, 32, 3),     "btl3.b": (8,),
        "btlu3.w": (32, 8, 3),    "btlu3.b": (32,),
        "deconv1.w": (16, 1, 2),  "deconv1.b": (1,),     # ConvTranspose1d: (Cin, Cout, K)
        "deconv2.w": (32, 16, 2), "deconv2.b": (16,),
        "deconv3.w": (32, 32, 2), "deconv3.b": (32,),
        "fc4.w": (LATENT, 4 * 70), "fc4.b": (LATENT,),
        "fc5.w": (NUM_CLASSES, LATENT), "fc5.b": (NUM_CLASSES,),
    }
    P = {}
    for i, (name, shape) in enumerate(specs.items()):
        k = jax.random.fold_in(key, i)
        scale = 0.05 if name.endswith(".b") else 0.15
        P[name] = scale * jax.random.normal(k, shape, jnp.float32)
    for name in _PRELU_ORDER + ["prelufc4"]:
        P[name] = jnp.full((1,), 0.25, jnp.float32)        # PyTorch PReLU default
    return P


def _ref_prelu(v, a):
    return jnp.where(v >= 0.0, v, a * v)


def _ref_conv1d(x, w, b, pad):
    cout, cin, K = w.shape
    L = x.shape[1]
    xp = jnp.pad(x, ((0, 0), (pad, pad)))
    Lout = L + 2 * pad - K + 1
    y = jnp.zeros((cout, Lout), jnp.float32)
    for k in range(K):
        y = y + jnp.dot(w[:, :, k], xp[:, k:k + Lout])
    return y + b[:, None]


def _ref_deconv1d(x, w, b):
    W0, W1 = w[:, :, 0].T, w[:, :, 1].T
    ya, yb = jnp.dot(W0, x), jnp.dot(W1, x)
    z = jnp.zeros((ya.shape[0], 1), ya.dtype)
    return jnp.concatenate([ya, z], 1) + jnp.concatenate([z, yb], 1) + b[:, None]


def _ref_forward_single(x, P):
    pr = lambda v, n: _ref_prelu(v, P[n].reshape(()))
    mp = lambda v: jnp.maximum(v[:, :-1], v[:, 1:])
    x1 = pr(_ref_conv1d(x, P["conv1_1.w"], P["conv1_1.b"], 1), "prelu1_1")
    x1 = pr(_ref_conv1d(x1, P["conv1_2.w"], P["conv1_2.b"], 1), "prelu1_2")
    x1 = mp(x1)
    x2 = pr(_ref_conv1d(x1, P["conv2_1.w"], P["conv2_1.b"], 1), "prelu2_1")
    x2 = pr(_ref_conv1d(x2, P["conv2_2.w"], P["conv2_2.b"], 1), "prelu2_2")
    x2 = mp(x2)
    x3 = pr(_ref_conv1d(x2, P["conv3_1.w"], P["conv3_1.b"], 1), "prelu3_1")
    x3 = pr(_ref_conv1d(x3, P["conv3_2.w"], P["conv3_2.b"], 1), "prelu3_2")
    x3 = mp(x3)
    x4c = pr(_ref_conv1d(x3, P["conv3_3.w"], P["conv3_3.b"], 0), "prelu3_3")
    h = x4c.reshape(-1)
    y4 = _ref_prelu(P["fc4.w"] @ h + P["fc4.b"], P["prelufc4"].reshape(()))
    y5 = P["fc5.w"] @ y4 + P["fc5.b"]
    z3 = pr(_ref_conv1d(x3, P["btl3.w"], P["btl3.b"], 1), "prelubtl3")
    z2 = pr(_ref_conv1d(x2, P["btl2.w"], P["btl2.b"], 1), "prelubtl2")
    z1 = pr(_ref_conv1d(x1, P["btl1.w"], P["btl1.b"], 1), "prelubtl1")
    j3 = _ref_conv1d(z3, P["btlu3.w"], P["btlu3.b"], 1)
    j2 = _ref_conv1d(z2, P["btlu2.w"], P["btlu2.b"], 1)
    j1 = _ref_conv1d(z1, P["btlu1.w"], P["btlu1.b"], 1)
    g2 = pr(_ref_deconv1d(j3, P["deconv3.w"], P["deconv3.b"]), "prelud3")
    g1 = pr(_ref_deconv1d(j2 + g2, P["deconv2.w"], P["deconv2.b"]), "prelud2")
    g0 = pr(_ref_deconv1d(j1 + g1, P["deconv1.w"], P["deconv1.b"]), "prelud1")
    return y5, y4, g0, z3, z2, z1


def reference_forward(x, P):
    y5, y4, g0, z3, z2, z1 = jax.vmap(lambda xb: _ref_forward_single(xb, P))(x)
    return y5, y4, g0, [z3, z2, z1]


# ----------------------------------- main ---------------------------------------

if __name__ == "__main__":
    key = jax.random.PRNGKey(0)
    kx, kp = jax.random.split(key)

    B = 2
    x = jax.random.normal(kx, (B, 1, L_IN), jnp.float32)
    params = init_params(kp)

    outs = dhrnet_forward(x, params)
    outs = jax.block_until_ready(outs)

    refs = reference_forward(x, params)
    for o, r in zip(jax.tree_util.tree_leaves(outs), jax.tree_util.tree_leaves(refs)):
        assert o.shape == r.shape, (o.shape, r.shape)
        err = float(jnp.max(jnp.abs(o - r)))
        assert jnp.allclose(o, r, atol=1e-3, rtol=1e-3), err

    print("KERNEL_OK")
</pallas_src>

<mosaic_0001>
module attributes {stable_mosaic.version = 11 : i64} {
  func.func @_dhrnet_kernel(%arg0: i32, %arg1: memref<1x1x256xf32, #tpu.memory_space<vmem>>, %arg2: memref<376x128xf32, #tpu.memory_space<vmem>>, %arg3: memref<13xf32, #tpu.memory_space<smem>>, %arg4: memref<1x4x256xf32, #tpu.memory_space<vmem>>, %arg5: memref<1x1x256xf32, #tpu.memory_space<vmem>>, %arg6: memref<1x8x256xf32, #tpu.memory_space<vmem>>, %arg7: memref<1x8x256xf32, #tpu.memory_space<vmem>>, %arg8: memref<1x1x256xf32, #tpu.memory_space<vmem>>) attributes {dimension_semantics = [#tpu.dimension_semantics<parallel>], iteration_bounds = array<i64: 1>, scalar_prefetch = 0 : i64, scratch_operands = 0 : i64, tpu.core_type = #tpu.core_type<tc>, window_params = [{transform_indices = @transform_0, window_bounds = array<i64: 1, 1, 256>}, {pipeline_mode = #tpu.pipeline_mode<synchronous>, transform_indices = @transform_1, window_bounds = array<i64: 376, 128>}, {transform_indices = @transform_2, window_bounds = array<i64: 13>}, {transform_indices = @transform_3, window_bounds = array<i64: 1, 4, 256>}, {transform_indices = @transform_4, window_bounds = array<i64: 1, 1, 256>}, {transform_indices = @transform_5, window_bounds = array<i64: 1, 8, 256>}, {transform_indices = @transform_6, window_bounds = array<i64: 1, 8, 256>}, {transform_indices = @transform_7, window_bounds = array<i64: 1, 1, 256>}]} {
    %c0 = arith.constant 0 : index
    %c0_0 = arith.constant 0 : index
    %c0_1 = arith.constant 0 : index
    %0 = vector.load %arg1[%c0, %c0_0, %c0_1] : memref<1x1x256xf32, #tpu.memory_space<vmem>>, vector<1x1x256xf32>
    %1 = vector.shape_cast %0 : vector<1x1x256xf32> to vector<1x256xf32>
    %cst = arith.constant 1.000000e+00 : f32
    %2 = vector.broadcast %cst : f32 to vector<1x256xf32>
    %3 = tpu.iota {dimensions = array<i32: 1>} : vector<1x256xi32>
    %c127_i32 = arith.constant 127 : i32
    %4 = vector.broadcast %c127_i32 : i32 to vector<1x256xi32>
    %5 = arith.andi %3, %4 : vector<1x256xi32>
    %c0_2 = arith.constant 0 : index
    %c0_3 = arith.constant 0 : index
    %6 = vector.load %arg2[%c0_2, %c0_3] : memref<376x128xf32, #tpu.memory_space<vmem>>, vector<16x4xf32>
    %7 = vector.extract_strided_slice %6 {offsets = [0, 0], sizes = [16, 1], strides = [1, 1]} : vector<16x4xf32> to vector<16x1xf32>
    %cst_4 = arith.constant 0.000000e+00 : f32
    %8 = vector.broadcast %cst_4 : f32 to vector<1x1xf32>
    %9 = vector.extract_strided_slice %1 {offsets = [0, 0], sizes = [1, 255], strides = [1, 1]} : vector<1x256xf32> to vector<1x255xf32>
    %10 = tpu.concatenate %8, %9 in 1 : vector<1x1xf32>, vector<1x255xf32> -> vector<1x256xf32>
    %11 = vector.broadcast %7 : vector<16x1xf32> to vector<16x256xf32>
    %12 = vector.broadcast %10 : vector<1x256xf32> to vector<16x256xf32>
    %13 = arith.mulf %11, %12 : vector<16x256xf32>
    %14 = vector.extract_strided_slice %6 {offsets = [0, 1], sizes = [16, 1], strides = [1, 1]} : vector<16x4xf32> to vector<16x1xf32>
    %15 = vector.broadcast %14 : vector<16x1xf32> to vector<16x256xf32>
    %16 = vector.broadcast %1 : vector<1x256xf32> to vector<16x256xf32>
    %17 = arith.mulf %15, %16 : vector<16x256xf32>
    %18 = arith.addf %13, %17 : vector<16x256xf32>
    %19 = vector.extract_strided_slice %6 {offsets = [0, 2], sizes = [16, 1], strides = [1, 1]} : vector<16x4xf32> to vector<16x1xf32>
    %cst_5 = arith.constant 0.000000e+00 : f32
    %20 = vector.broadcast %cst_5 : f32 to vector<1x1xf32>
    %21 = vector.extract_strided_slice %1 {offsets = [0, 1], sizes = [1, 255], strides = [1, 1]} : vector<1x256xf32> to vector<1x255xf32>
    %22 = tpu.concatenate %21, %20 in 1 : vector<1x255xf32>, vector<1x1xf32> -> vector<1x256xf32>
    %23 = vector.broadcast %19 : vector<16x1xf32> to vector<16x256xf32>
    %24 = vector.broadcast %22 : vector<1x256xf32> to vector<16x256xf32>
    %25 = arith.mulf %23, %24 : vector<16x256xf32>
    %26 = arith.addf %18, %25 : vector<16x256xf32>
    %27 = vector.extract_strided_slice %6 {offsets = [0, 3], sizes = [16, 1], strides = [1, 1]} : vector<16x4xf32> to vector<16x1xf32>
    %28 = vector.broadcast %27 : vector<16x1xf32> to vector<16x256xf32>
    %29 = arith.addf %26, %28 : vector<16x256xf32>
    %c0_6 = arith.constant 0 : index
    %30 = memref.load %arg3[%c0_6] : memref<13xf32, #tpu.memory_space<smem>>
    %cst_7 = arith.constant 0.000000e+00 : f32
    %31 = vector.broadcast %cst_7 : f32 to vector<16x256xf32>
    %32 = arith.cmpf oge, %29, %31 : vector<16x256xf32>
    %33 = vector.broadcast %30 : f32 to vector<16x256xf32>
    %34 = arith.mulf %33, %29 : vector<16x256xf32>
    %35 = arith.select %32, %29, %34 : vector<16x256xi1>, vector<16x256xf32>
    %c73_i32 = arith.constant 73 : i32
    %36 = vector.broadcast %c73_i32 : i32 to vector<1x256xi32>
    %37 = arith.cmpi slt, %5, %36 : vector<1x256xi32>
    %cst_8 = arith.constant 0.000000e+00 : f32
    %38 = vector.shape_cast %37 : vector<1x256xi1> to vector<1x256xi1>
    %39 = vector.broadcast %38 : vector<1x256xi1> to vector<16x256xi1>
    %40 = vector.broadcast %cst_8 : f32 to vector<16x256xf32>
    %41 = arith.select %39, %35, %40 : vector<16x256xi1>, vector<16x256xf32>
    %c16 = arith.constant 16 : index
    %c0_9 = arith.constant 0 : index
    %42 = vector.load %arg2[%c16, %c0_9] : memref<376x128xf32, #tpu.memory_space<vmem>>, vector<16x49xf32>
    %cst_10 = arith.constant 0.000000e+00 : f32
    %43 = vector.broadcast %cst_10 : f32 to vector<16x1xf32>
    %44 = vector.extract_strided_slice %41 {offsets = [0, 0], sizes = [16, 255], strides = [1, 1]} : vector<16x256xf32> to vector<16x255xf32>
    %45 = tpu.concatenate %43, %44 in 1 : vector<16x1xf32>, vector<16x255xf32> -> vector<16x256xf32>
    %cst_11 = arith.constant 0.000000e+00 : f32
    %46 = vector.broadcast %cst_11 : f32 to vector<16x1xf32>
    %47 = vector.extract_strided_slice %41 {offsets = [0, 1], sizes = [16, 255], strides = [1, 1]} : vector<16x256xf32> to vector<16x255xf32>
    %48 = tpu.concatenate %47, %46 in 1 : vector<16x255xf32>, vector<16x1xf32> -> vector<16x256xf32>
    %49 = tpu.concatenate %45, %41, %48, %2 in 0 : vector<16x256xf32>, vector<16x256xf32>, vector<16x256xf32>, vector<1x256xf32> -> vector<49x256xf32>
    %cst_12 = arith.constant dense<0.000000e+00> : vector<16x256xf32>
    %50 = tpu.matmul %42, %49, %cst_12 {dimension_numbers = #tpu.dot_dimension_numbers<[1], [0], [0], [1], [0, 0, 1, 1], [], []>} : vector<16x49xf32>, vector<49x256xf32>, vector<16x256xf32> -> vector<16x256xf32>
    %c1 = arith.constant 1 : index
    %51 = memref.load %arg3[%c1] : memref<13xf32, #tpu.memory_space<smem>>
    %cst_13 = arith.constant 0.000000e+00 : f32
    %52 = vector.broadcast %cst_13 : f32 to vector<16x256xf32>
    %53 = arith.cmpf oge, %50, %52 : vector<16x256xf32>
    %54 = vector.broadcast %51 : f32 to vector<16x256xf32>
    %55 = arith.mulf %54, %50 : vector<16x256xf32>
    %56 = arith.select %53, %50, %55 : vector<16x256xi1>, vector<16x256xf32>
    %c73_i32_14 = arith.constant 73 : i32
    %57 = vector.broadcast %c73_i32_14 : i32 to vector<1x256xi32>
    %58 = arith.cmpi slt, %5, %57 : vector<1x256xi32>
    %cst_15 = arith.constant 0.000000e+00 : f32
    %59 = vector.shape_cast %58 : vector<1x256xi1> to vector<1x256xi1>
    %60 = vector.broadcast %59 : vector<1x256xi1> to vector<16x256xi1>
    %61 = vector.broadcast %cst_15 : f32 to vector<16x256xf32>
    %62 = arith.select %60, %56, %61 : vector<16x256xi1>, vector<16x256xf32>
    %cst_16 = arith.constant 0.000000e+00 : f32
    %63 = vector.broadcast %cst_16 : f32 to vector<16x1xf32>
    %64 = vector.extract_strided_slice %62 {offsets = [0, 1], sizes = [16, 255], strides = [1, 1]} : vector<16x256xf32> to vector<16x255xf32>
    %65 = tpu.concatenate %64, %63 in 1 : vector<16x255xf32>, vector<16x1xf32> -> vector<16x256xf32>
    %66 = arith.maximumf %62, %65 : vector<16x256xf32>
    %c72_i32 = arith.constant 72 : i32
    %67 = vector.broadcast %c72_i32 : i32 to vector<1x256xi32>
    %68 = arith.cmpi slt, %5, %67 : vector<1x256xi32>
    %cst_17 = arith.constant 0.000000e+00 : f32
    %69 = vector.shape_cast %68 : vector<1x256xi1> to vector<1x256xi1>
    %70 = vector.broadcast %69 : vector<1x256xi1> to vector<16x256xi1>
    %71 = vector.broadcast %cst_17 : f32 to vector<16x256xf32>
    %72 = arith.select %70, %66, %71 : vector<16x256xi1>, vector<16x256xf32>
    %c32 = arith.constant 32 : index
    %c0_18 = arith.constant 0 : index
    %73 = vector.load %arg2[%c32, %c0_18] : memref<376x128xf32, #tpu.memory_space<vmem>>, vector<32x49xf32>
    %cst_19 = arith.constant 0.000000e+00 : f32
    %74 = vector.broadcast %cst_19 : f32 to vector<16x1xf32>
    %75 = vector.extract_strided_slice %72 {offsets = [0, 0], sizes = [16, 255], strides = [1, 1]} : vector<16x256xf32> to vector<16x255xf32>
    %76 = tpu.concatenate %74, %75 in 1 : vector<16x1xf32>, vector<16x255xf32> -> vector<16x256xf32>
    %cst_20 = arith.constant 0.000000e+00 : f32
    %77 = vector.broadcast %cst_20 : f32 to vector<16x1xf32>
    %78 = vector.extract_strided_slice %72 {offsets = [0, 1], sizes = [16, 255], strides = [1, 1]} : vector<16x256xf32> to vector<16x255xf32>
    %79 = tpu.concatenate %78, %77 in 1 : vector<16x255xf32>, vector<16x1xf32> -> vector<16x256xf32>
    %80 = tpu.concatenate %76, %72, %79, %2 in 0 : vector<16x256xf32>, vector<16x256xf32>, vector<16x256xf32>, vector<1x256xf32> -> vector<49x256xf32>
    %cst_21 = arith.constant dense<0.000000e+00> : vector<32x256xf32>
    %81 = tpu.matmul %73, %80, %cst_21 {dimension_numbers = #tpu.dot_dimension_numbers<[1], [0], [0], [1], [0, 0, 1, 1], [], []>} : vector<32x49xf32>, vector<49x256xf32>, vector<32x256xf32> -> vector<32x256xf32>
    %c2 = arith.constant 2 : index
    %82 = memref.load %arg3[%c2] : memref<13xf32, #tpu.memory_space<smem>>
    %cst_22 = arith.constant 0.000000e+00 : f32
    %83 = vector.broadcast %cst_22 : f32 to vector<32x256xf32>
    %84 = arith.cmpf oge, %81, %83 : vector<32x256xf32>
    %85 = vector.broadcast %82 : f32 to vector<32x256xf32>
    %86 = arith.mulf %85, %81 : vector<32x256xf32>
    %87 = arith.select %84, %81, %86 : vector<32x256xi1>, vector<32x256xf32>
    %c72_i32_23 = arith.constant 72 : i32
    %88 = vector.broadcast %c72_i32_23 : i32 to vector<1x256xi32>
    %89 = arith.cmpi slt, %5, %88 : vector<1x256xi32>
    %cst_24 = arith.constant 0.000000e+00 : f32
    %90 = vector.shape_cast %89 : vector<1x256xi1> to vector<1x256xi1>
    %91 = vector.broadcast %90 : vector<1x256xi1> to vector<32x256xi1>
    %92 = vector.broadcast %cst_24 : f32 to vector<32x256xf32>
    %93 = arith.select %91, %87, %92 : vector<32x256xi1>, vector<32x256xf32>
    %c64 = arith.constant 64 : index
    %c0_25 = arith.constant 0 : index
    %94 = vector.load %arg2[%c64, %c0_25] : memref<376x128xf32, #tpu.memory_space<vmem>>, vector<32x97xf32>
    %cst_26 = arith.constant 0.000000e+00 : f32
    %95 = vector.broadcast %cst_26 : f32 to vector<32x1xf32>
    %96 = vector.extract_strided_slice %93 {offsets = [0, 0], sizes = [32, 255], strides = [1, 1]} : vector<32x256xf32> to vector<32x255xf32>
    %97 = tpu.concatenate %95, %96 in 1 : vector<32x1xf32>, vector<32x255xf32> -> vector<32x256xf32>
    %cst_27 = arith.constant 0.000000e+00 : f32
    %98 = vector.broadcast %cst_27 : f32 to vector<32x1xf32>
    %99 = vector.extract_strided_slice %93 {offsets = [0, 1], sizes = [32, 255], strides = [1, 1]} : vector<32x256xf32> to vector<32x255xf32>
    %100 = tpu.concatenate %99, %98 in 1 : vector<32x255xf32>, vector<32x1xf32> -> vector<32x256xf32>
    %101 = tpu.concatenate %97, %93, %100, %2 in 0 : vector<32x256xf32>, vector<32x256xf32>, vector<32x256xf32>, vector<1x256xf32> -> vector<97x256xf32>
    %cst_28 = arith.constant dense<0.000000e+00> : vector<32x256xf32>
    %102 = tpu.matmul %94, %101, %cst_28 {dimension_numbers = #tpu.dot_dimension_numbers<[1], [0], [0], [1], [0, 0, 1, 1], [], []>} : vector<32x97xf32>, vector<97x256xf32>, vector<32x256xf32> -> vector<32x256xf32>
    %c3 = arith.constant 3 : index
    %103 = memref.load %arg3[%c3] : memref<13xf32, #tpu.memory_space<smem>>
    %cst_29 = arith.constant 0.000000e+00 : f32
    %104 = vector.broadcast %cst_29 : f32 to vector<32x256xf32>
    %105 = arith.cmpf oge, %102, %104 : vector<32x256xf32>
    %106 = vector.broadcast %103 : f32 to vector<32x256xf32>
    %107 = arith.mulf %106, %102 : vector<32x256xf32>
    %108 = arith.select %105, %102, %107 : vector<32x256xi1>, vector<32x256xf32>
    %c72_i32_30 = arith.constant 72 : i32
    %109 = vector.broadcast %c72_i32_30 : i32 to vector<1x256xi32>
    %110 = arith.cmpi slt, %5, %109 : vector<1x256xi32>
    %cst_31 = arith.constant 0.000000e+00 : f32
    %111 = vector.shape_cast %110 : vector<1x256xi1> to vector<1x256xi1>
    %112 = vector.broadcast %111 : vector<1x256xi1> to vector<32x256xi1>
    %113 = vector.broadcast %cst_31 : f32 to vector<32x256xf32>
    %114 = arith.select %112, %108, %113 : vector<32x256xi1>, vector<32x256xf32>
    %cst_32 = arith.constant 0.000000e+00 : f32
    %115 = vector.broadcast %cst_32 : f32 to vector<32x1xf32>
    %116 = vector.extract_strided_slice %114 {offsets = [0, 1], sizes = [32, 255], strides = [1, 1]} : vector<32x256xf32> to vector<32x255xf32>
    %117 = tpu.concatenate %116, %115 in 1 : vector<32x255xf32>, vector<32x1xf32> -> vector<32x256xf32>
    %118 = arith.maximumf %114, %117 : vector<32x256xf32>
    %c71_i32 = arith.constant 71 : i32
    %119 = vector.broadcast %c71_i32 : i32 to vector<1x256xi32>
    %120 = arith.cmpi slt, %5, %119 : vector<1x256xi32>
    %cst_33 = arith.constant 0.000000e+00 : f32
    %121 = vector.shape_cast %120 : vector<1x256xi1> to vector<1x256xi1>
    %122 = vector.broadcast %121 : vector<1x256xi1> to vector<32x256xi1>
    %123 = vector.broadcast %cst_33 : f32 to vector<32x256xf32>
    %124 = arith.select %122, %118, %123 : vector<32x256xi1>, vector<32x256xf32>
    %c96 = arith.constant 96 : index
    %c0_34 = arith.constant 0 : index
    %125 = vector.load %arg2[%c96, %c0_34] : memref<376x128xf32, #tpu.memory_space<vmem>>, vector<32x97xf32>
    %cst_35 = arith.constant 0.000000e+00 : f32
    %126 = vector.broadcast %cst_35 : f32 to vector<32x1xf32>
    %127 = vector.extract_strided_slice %124 {offsets = [0, 0], sizes = [32, 255], strides = [1, 1]} : vector<32x256xf32> to vector<32x255xf32>
    %128 = tpu.concatenate %126, %127 in 1 : vector<32x1xf32>, vector<32x255xf32> -> vector<32x256xf32>
    %cst_36 = arith.constant 0.000000e+00 : f32
    %129 = vector.broadcast %cst_36 : f32 to vector<32x1xf32>
    %130 = vector.extract_strided_slice %124 {offsets = [0, 1], sizes = [32, 255], strides = [1, 1]} : vector<32x256xf32> to vector<32x255xf32>
    %131 = tpu.concatenate %130, %129 in 1 : vector<32x255xf32>, vector<32x1xf32> -> vector<32x256xf32>
    %132 = tpu.concatenate %128, %124, %131, %2 in 0 : vector<32x256xf32>, vector<32x256xf32>, vector<32x256xf32>, vector<1x256xf32> -> vector<97x256xf32>
    %cst_37 = arith.constant dense<0.000000e+00> : vector<32x256xf32>
    %133 = tpu.matmul %125, %132, %cst_37 {dimension_numbers = #tpu.dot_dimension_numbers<[1], [0], [0], [1], [0, 0, 1, 1], [], []>} : vector<32x97xf32>, vector<97x256xf32>, vector<32x256xf32> -> vector<32x256xf32>
    %c4 = arith.constant 4 : index
    %134 = memref.load %arg3[%c4] : memref<13xf32, #tpu.memory_space<smem>>
    %cst_38 = arith.constant 0.000000e+00 : f32
    %135 = vector.broadcast %cst_38 : f32 to vector<32x256xf32>
    %136 = arith.cmpf oge, %133, %135 : vector<32x256xf32>
    %137 = vector.broadcast %134 : f32 to vector<32x256xf32>
    %138 = arith.mulf %137, %133 : vector<32x256xf32>
    %139 = arith.select %136, %133, %138 : vector<32x256xi1>, vector<32x256xf32>
    %c71_i32_39 = arith.constant 71 : i32
    %140 = vector.broadcast %c71_i32_39 : i32 to vector<1x256xi32>
    %141 = arith.cmpi slt, %5, %140 : vector<1x256xi32>
    %cst_40 = arith.constant 0.000000e+00 : f32
    %142 = vector.shape_cast %141 : vector<1x256xi1> to vector<1x256xi1>
    %143 = vector.broadcast %142 : vector<1x256xi1> to vector<32x256xi1>
    %144 = vector.broadcast %cst_40 : f32 to vector<32x256xf32>
    %145 = arith.select %143, %139, %144 : vector<32x256xi1>, vector<32x256xf32>
    %c128 = arith.constant 128 : index
    %c0_41 = arith.constant 0 : index
    %146 = vector.load %arg2[%c128, %c0_41] : memref<376x128xf32, #tpu.memory_space<vmem>>, vector<32x97xf32>
    %cst_42 = arith.constant 0.000000e+00 : f32
    %147 = vector.broadcast %cst_42 : f32 to vector<32x1xf32>
    %148 = vector.extract_strided_slice %145 {offsets = [0, 0], sizes = [32, 255], strides = [1, 1]} : vector<32x256xf32> to vector<32x255xf32>
    %149 = tpu.concatenate %147, %148 in 1 : vector<32x1xf32>, vector<32x255xf32> -> vector<32x256xf32>
    %cst_43 = arith.constant 0.000000e+00 : f32
    %150 = vector.broadcast %cst_43 : f32 to vector<32x1xf32>
    %151 = vector.extract_strided_slice %145 {offsets = [0, 1], sizes = [32, 255], strides = [1, 1]} : vector<32x256xf32> to vector<32x255xf32>
    %152 = tpu.concatenate %151, %150 in 1 : vector<32x255xf32>, vector<32x1xf32> -> vector<32x256xf32>
    %153 = tpu.concatenate %149, %145, %152, %2 in 0 : vector<32x256xf32>, vector<32x256xf32>, vector<32x256xf32>, vector<1x256xf32> -> vector<97x256xf32>
    %cst_44 = arith.constant dense<0.000000e+00> : vector<32x256xf32>
    %154 = tpu.matmul %146, %153, %cst_44 {dimension_numbers = #tpu.dot_dimension_numbers<[1], [0], [0], [1], [0, 0, 1, 1], [], []>} : vector<32x97xf32>, vector<97x256xf32>, vector<32x256xf32> -> vector<32x256xf32>
    %c5 = arith.constant 5 : index
    %155 = memref.load %arg3[%c5] : memref<13xf32, #tpu.memory_space<smem>>
    %cst_45 = arith.constant 0.000000e+00 : f32
    %156 = vector.broadcast %cst_45 : f32 to vector<32x256xf32>
    %157 = arith.cmpf oge, %154, %156 : vector<32x256xf32>
    %158 = vector.broadcast %155 : f32 to vector<32x256xf32>
    %159 = arith.mulf %158, %154 : vector<32x256xf32>
    %160 = arith.select %157, %154, %159 : vector<32x256xi1>, vector<32x256xf32>
    %c71_i32_46 = arith.constant 71 : i32
    %161 = vector.broadcast %c71_i32_46 : i32 to vector<1x256xi32>
    %162 = arith.cmpi slt, %5, %161 : vector<1x256xi32>
    %cst_47 = arith.constant 0.000000e+00 : f32
    %163 = vector.shape_cast %162 : vector<1x256xi1> to vector<1x256xi1>
    %164 = vector.broadcast %163 : vector<1x256xi1> to vector<32x256xi1>
    %165 = vector.broadcast %cst_47 : f32 to vector<32x256xf32>
    %166 = arith.select %164, %160, %165 : vector<32x256xi1>, vector<32x256xf32>
    %cst_48 = arith.constant 0.000000e+00 : f32
    %167 = vector.broadcast %cst_48 : f32 to vector<32x1xf32>
    %168 = vector.extract_strided_slice %166 {offsets = [0, 1], sizes = [32, 255], strides = [1, 1]} : vector<32x256xf32> to vector<32x255xf32>
    %169 = tpu.concatenate %168, %167 in 1 : vector<32x255xf32>, vector<32x1xf32> -> vector<32x256xf32>
    %170 = arith.maximumf %166, %169 : vector<32x256xf32>
    %c70_i32 = arith.constant 70 : i32
    %171 = vector.broadcast %c70_i32 : i32 to vector<1x256xi32>
    %172 = arith.cmpi slt, %5, %171 : vector<1x256xi32>
    %cst_49 = arith.constant 0.000000e+00 : f32
    %173 = vector.shape_cast %172 : vector<1x256xi1> to vector<1x256xi1>
    %174 = vector.broadcast %173 : vector<1x256xi1> to vector<32x256xi1>
    %175 = vector.broadcast %cst_49 : f32 to vector<32x256xf32>
    %176 = arith.select %174, %170, %175 : vector<32x256xi1>, vector<32x256xf32>
    %c160 = arith.constant 160 : index
    %c0_50 = arith.constant 0 : index
    %177 = vector.load %arg2[%c160, %c0_50] : memref<376x128xf32, #tpu.memory_space<vmem>>, vector<4x33xf32>
    %178 = tpu.concatenate %176, %2 in 0 : vector<32x256xf32>, vector<1x256xf32> -> vector<33x256xf32>
    %cst_51 = arith.constant dense<0.000000e+00> : vector<4x256xf32>
    %179 = tpu.matmul %177, %178, %cst_51 {dimension_numbers = #tpu.dot_dimension_numbers<[1], [0], [0], [1], [0, 0, 1, 1], [], []>} : vector<4x33xf32>, vector<33x256xf32>, vector<4x256xf32> -> vector<4x256xf32>
    %c6 = arith.constant 6 : index
    %180 = memref.load %arg3[%c6] : memref<13xf32, #tpu.memory_space<smem>>
    %cst_52 = arith.constant 0.000000e+00 : f32
    %181 = vector.broadcast %cst_52 : f32 to vector<4x256xf32>
    %182 = arith.cmpf oge, %179, %181 : vector<4x256xf32>
    %183 = vector.broadcast %180 : f32 to vector<4x256xf32>
    %184 = arith.mulf %183, %179 : vector<4x256xf32>
    %185 = arith.select %182, %179, %184 : vector<4x256xi1>, vector<4x256xf32>
    %c70_i32_53 = arith.constant 70 : i32
    %186 = vector.broadcast %c70_i32_53 : i32 to vector<1x256xi32>
    %187 = arith.cmpi slt, %5, %186 : vector<1x256xi32>
    %cst_54 = arith.constant 0.000000e+00 : f32
    %188 = vector.shape_cast %187 : vector<1x256xi1> to vector<1x256xi1>
    %189 = vector.broadcast %188 : vector<1x256xi1> to vector<4x256xi1>
    %190 = vector.broadcast %cst_54 : f32 to vector<4x256xf32>
    %191 = arith.select %189, %185, %190 : vector<4x256xi1>, vector<4x256xf32>
    %c232 = arith.constant 232 : index
    %c0_55 = arith.constant 0 : index
    %192 = vector.load %arg2[%c232, %c0_55] : memref<376x128xf32, #tpu.memory_space<vmem>>, vector<8x97xf32>
    %cst_56 = arith.constant 0.000000e+00 : f32
    %193 = vector.broadcast %cst_56 : f32 to vector<32x1xf32>
    %194 = vector.extract_strided_slice %176 {offsets = [0, 0], sizes = [32, 255], strides = [1, 1]} : vector<32x256xf32> to vector<32x255xf32>
    %195 = tpu.concatenate %193, %194 in 1 : vector<32x1xf32>, vector<32x255xf32> -> vector<32x256xf32>
    %cst_57 = arith.constant 0.000000e+00 : f32
    %196 = vector.broadcast %cst_57 : f32 to vector<32x1xf32>
    %197 = vector.extract_strided_slice %176 {offsets = [0, 1], sizes = [32, 255], strides = [1, 1]} : vector<32x256xf32> to vector<32x255xf32>
    %198 = tpu.concatenate %197, %196 in 1 : vector<32x255xf32>, vector<32x1xf32> -> vector<32x256xf32>
    %199 = tpu.concatenate %195, %176, %198, %2 in 0 : vector<32x256xf32>, vector<32x256xf32>, vector<32x256xf32>, vector<1x256xf32> -> vector<97x256xf32>
    %cst_58 = arith.constant dense<0.000000e+00> : vector<8x256xf32>
    %200 = tpu.matmul %192, %199, %cst_58 {dimension_numbers = #tpu.dot_dimension_numbers<[1], [0], [0], [1], [0, 0, 1, 1], [], []>} : vector<8x97xf32>, vector<97x256xf32>, vector<8x256xf32> -> vector<8x256xf32>
    %c9 = arith.constant 9 : index
    %201 = memref.load %arg3[%c9] : memref<13xf32, #tpu.memory_space<smem>>
    %cst_59 = arith.constant 0.000000e+00 : f32
    %202 = vector.broadcast %cst_59 : f32 to vector<8x256xf32>
    %203 = arith.cmpf oge, %200, %202 : vector<8x256xf32>
    %204 = vector.broadcast %201 : f32 to vector<8x256xf32>
    %205 = arith.mulf %204, %200 : vector<8x256xf32>
    %206 = arith.select %203, %200, %205 : vector<8x256xi1>, vector<8x256xf32>
    %c70_i32_60 = arith.constant 70 : i32
    %207 = vector.broadcast %c70_i32_60 : i32 to vector<1x256xi32>
    %208 = arith.cmpi slt, %5, %207 : vector<1x256xi32>
    %cst_61 = arith.constant 0.000000e+00 : f32
    %209 = vector.shape_cast %208 : vector<1x256xi1> to vector<1x256xi1>
    %210 = vector.broadcast %209 : vector<1x256xi1> to vector<8x256xi1>
    %211 = vector.broadcast %cst_61 : f32 to vector<8x256xf32>
    %212 = arith.select %210, %206, %211 : vector<8x256xi1>, vector<8x256xf32>
    %c192 = arith.constant 192 : index
    %c0_62 = arith.constant 0 : index
    %213 = vector.load %arg2[%c192, %c0_62] : memref<376x128xf32, #tpu.memory_space<vmem>>, vector<8x97xf32>
    %cst_63 = arith.constant 0.000000e+00 : f32
    %214 = vector.broadcast %cst_63 : f32 to vector<32x1xf32>
    %215 = vector.extract_strided_slice %124 {offsets = [0, 0], sizes = [32, 255], strides = [1, 1]} : vector<32x256xf32> to vector<32x255xf32>
    %216 = tpu.concatenate %214, %215 in 1 : vector<32x1xf32>, vector<32x255xf32> -> vector<32x256xf32>
    %cst_64 = arith.constant 0.000000e+00 : f32
    %217 = vector.broadcast %cst_64 : f32 to vector<32x1xf32>
    %218 = vector.extract_strided_slice %124 {offsets = [0, 1], sizes = [32, 255], strides = [1, 1]} : vector<32x256xf32> to vector<32x255xf32>
    %219 = tpu.concatenate %218, %217 in 1 : vector<32x255xf32>, vector<32x1xf32> -> vector<32x256xf32>
    %220 = tpu.concatenate %216, %124, %219, %2 in 0 : vector<32x256xf32>, vector<32x256xf32>, vector<32x256xf32>, vector<1x256xf32> -> vector<97x256xf32>
    %cst_65 = arith.constant dense<0.000000e+00> : vector<8x256xf32>
    %221 = tpu.matmul %213, %220, %cst_65 {dimension_numbers = #tpu.dot_dimension_numbers<[1], [0], [0], [1], [0, 0, 1, 1], [], []>} : vector<8x97xf32>, vector<97x256xf32>, vector<8x256xf32> -> vector<8x256xf32>
    %c8 = arith.constant 8 : index
    %222 = memref.load %arg3[%c8] : memref<13xf32, #tpu.memory_space<smem>>
    %cst_66 = arith.constant 0.000000e+00 : f32
    %223 = vector.broadcast %cst_66 : f32 to vector<8x256xf32>
    %224 = arith.cmpf oge, %221, %223 : vector<8x256xf32>
    %225 = vector.broadcast %222 : f32 to vector<8x256xf32>
    %226 = arith.mulf %225, %221 : vector<8x256xf32>
    %227 = arith.select %224, %221, %226 : vector<8x256xi1>, vector<8x256xf32>
    %c71_i32_67 = arith.constant 71 : i32
    %228 = vector.broadcast %c71_i32_67 : i32 to vector<1x256xi32>
    %229 = arith.cmpi slt, %5, %228 : vector<1x256xi32>
    %cst_68 = arith.constant 0.000000e+00 : f32
    %230 = vector.shape_cast %229 : vector<1x256xi1> to vector<1x256xi1>
    %231 = vector.broadcast %230 : vector<1x256xi1> to vector<8x256xi1>
    %232 = vector.broadcast %cst_68 : f32 to vector<8x256xf32>
    %233 = arith.select %231, %227, %232 : vector<8x256xi1>, vector<8x256xf32>
    %c168 = arith.constant 168 : index
    %c0_69 = arith.constant 0 : index
    %234 = vector.load %arg2[%c168, %c0_69] : memref<376x128xf32, #tpu.memory_space<vmem>>, vector<1x49xf32>
    %cst_70 = arith.constant 0.000000e+00 : f32
    %235 = vector.broadcast %cst_70 : f32 to vector<16x1xf32>
    %236 = vector.extract_strided_slice %72 {offsets = [0, 0], sizes = [16, 255], strides = [1, 1]} : vector<16x256xf32> to vector<16x255xf32>
    %237 = tpu.concatenate %235, %236 in 1 : vector<16x1xf32>, vector<16x255xf32> -> vector<16x256xf32>
    %cst_71 = arith.constant 0.000000e+00 : f32
    %238 = vector.broadcast %cst_71 : f32 to vector<16x1xf32>
    %239 = vector.extract_strided_slice %72 {offsets = [0, 1], sizes = [16, 255], strides = [1, 1]} : vector<16x256xf32> to vector<16x255xf32>
    %240 = tpu.concatenate %239, %238 in 1 : vector<16x255xf32>, vector<16x1xf32> -> vector<16x256xf32>
    %241 = tpu.concatenate %237, %72, %240, %2 in 0 : vector<16x256xf32>, vector<16x256xf32>, vector<16x256xf32>, vector<1x256xf32> -> vector<49x256xf32>
    %cst_72 = arith.constant dense<0.000000e+00> : vector<1x256xf32>
    %242 = tpu.matmul %234, %241, %cst_72 {dimension_numbers = #tpu.dot_dimension_numbers<[1], [0], [0], [1], [0, 0, 1, 1], [], []>} : vector<1x49xf32>, vector<49x256xf32>, vector<1x256xf32> -> vector<1x256xf32>
    %c7 = arith.constant 7 : index
    %243 = memref.load %arg3[%c7] : memref<13xf32, #tpu.memory_space<smem>>
    %cst_73 = arith.constant 0.000000e+00 : f32
    %244 = vector.broadcast %cst_73 : f32 to vector<1x256xf32>
    %245 = arith.cmpf oge, %242, %244 : vector<1x256xf32>
    %246 = vector.broadcast %243 : f32 to vector<1x256xf32>
    %247 = arith.mulf %246, %242 : vector<1x256xf32>
    %248 = arith.select %245, %242, %247 : vector<1x256xi1>, vector<1x256xf32>
    %c72_i32_74 = arith.constant 72 : i32
    %249 = vector.broadcast %c72_i32_74 : i32 to vector<1x256xi32>
    %250 = arith.cmpi slt, %5, %249 : vector<1x256xi32>
    %cst_75 = arith.constant 0.000000e+00 : f32
    %251 = vector.broadcast %cst_75 : f32 to vector<1x256xf32>
    %252 = arith.select %250, %248, %251 : vector<1x256xi1>, vector<1x256xf32>
    %c240 = arith.constant 240 : index
    %c0_76 = arith.constant 0 : index
    %253 = vector.load %arg2[%c240, %c0_76] : memref<376x128xf32, #tpu.memory_space<vmem>>, vector<32x25xf32>
    %cst_77 = arith.constant 0.000000e+00 : f32
    %254 = vector.broadcast %cst_77 : f32 to vector<8x1xf32>
    %255 = vector.extract_strided_slice %212 {offsets = [0, 0], sizes = [8, 255], strides = [1, 1]} : vector<8x256xf32> to vector<8x255xf32>
    %256 = tpu.concatenate %254, %255 in 1 : vector<8x1xf32>, vector<8x255xf32> -> vector<8x256xf32>
    %cst_78 = arith.constant 0.000000e+00 : f32
    %257 = vector.broadcast %cst_78 : f32 to vector<8x1xf32>
    %258 = vector.extract_strided_slice %212 {offsets = [0, 1], sizes = [8, 255], strides = [1, 1]} : vector<8x256xf32> to vector<8x255xf32>
    %259 = tpu.concatenate %258, %257 in 1 : vector<8x255xf32>, vector<8x1xf32> -> vector<8x256xf32>
    %260 = tpu.concatenate %256, %212, %259, %2 in 0 : vector<8x256xf32>, vector<8x256xf32>, vector<8x256xf32>, vector<1x256xf32> -> vector<25x256xf32>
    %cst_79 = arith.constant dense<0.000000e+00> : vector<32x256xf32>
    %261 = tpu.matmul %253, %260, %cst_79 {dimension_numbers = #tpu.dot_dimension_numbers<[1], [0], [0], [1], [0, 0, 1, 1], [], []>} : vector<32x25xf32>, vector<25x256xf32>, vector<32x256xf32> -> vector<32x256xf32>
    %c70_i32_80 = arith.constant 70 : i32
    %262 = vector.broadcast %c70_i32_80 : i32 to vector<1x256xi32>
    %263 = arith.cmpi slt, %5, %262 : vector<1x256xi32>
    %cst_81 = arith.constant 0.000000e+00 : f32
    %264 = vector.shape_cast %263 : vector<1x256xi1> to vector<1x256xi1>
    %265 = vector.broadcast %264 : vector<1x256xi1> to vector<32x256xi1>
    %266 = vector.broadcast %cst_81 : f32 to vector<32x256xf32>
    %267 = arith.select %265, %261, %266 : vector<32x256xi1>, vector<32x256xf32>
    %c200 = arith.constant 200 : index
    %c0_82 = arith.constant 0 : index
    %268 = vector.load %arg2[%c200, %c0_82] : memref<376x128xf32, #tpu.memory_space<vmem>>, vector<32x25xf32>
    %cst_83 = arith.constant 0.000000e+00 : f32
    %269 = vector.broadcast %cst_83 : f32 to vector<8x1xf32>
    %270 = vector.extract_strided_slice %233 {offsets = [0, 0], sizes = [8, 255], strides = [1, 1]} : vector<8x256xf32> to vector<8x255xf32>
    %271 = tpu.concatenate %269, %270 in 1 : vector<8x1xf32>, vector<8x255xf32> -> vector<8x256xf32>
    %cst_84 = arith.constant 0.000000e+00 : f32
    %272 = vector.broadcast %cst_84 : f32 to vector<8x1xf32>
    %273 = vector.extract_strided_slice %233 {offsets = [0, 1], sizes = [8, 255], strides = [1, 1]} : vector<8x256xf32> to vector<8x255xf32>
    %274 = tpu.concatenate %273, %272 in 1 : vector<8x255xf32>, vector<8x1xf32> -> vector<8x256xf32>
    %275 = tpu.concatenate %271, %233, %274, %2 in 0 : vector<8x256xf32>, vector<8x256xf32>, vector<8x256xf32>, vector<1x256xf32> -> vector<25x256xf32>
    %cst_85 = arith.constant dense<0.000000e+00> : vector<32x256xf32>
    %276 = tpu.matmul %268, %275, %cst_85 {dimension_numbers = #tpu.dot_dimension_numbers<[1], [0], [0], [1], [0, 0, 1, 1], [], []>} : vector<32x25xf32>, vector<25x256xf32>, vector<32x256xf32> -> vector<32x256xf32>
    %c71_i32_86 = arith.constant 71 : i32
    %277 = vector.broadcast %c71_i32_86 : i32 to vector<1x256xi32>
    %278 = arith.cmpi slt, %5, %277 : vector<1x256xi32>
    %cst_87 = arith.constant 0.000000e+00 : f32
    %279 = vector.shape_cast %278 : vector<1x256xi1> to vector<1x256xi1>
    %280 = vector.broadcast %279 : vector<1x256xi1> to vector<32x256xi1>
    %281 = vector.broadcast %cst_87 : f32 to vector<32x256xf32>
    %282 = arith.select %280, %276, %281 : vector<32x256xi1>, vector<32x256xf32>
    %c176 = arith.constant 176 : index
    %c0_88 = arith.constant 0 : index
    %283 = vector.load %arg2[%c176, %c0_88] : memref<376x128xf32, #tpu.memory_space<vmem>>, vector<16x4xf32>
    %284 = vector.extract_strided_slice %283 {offsets = [0, 0], sizes = [16, 1], strides = [1, 1]} : vector<16x4xf32> to vector<16x1xf32>
    %cst_89 = arith.constant 0.000000e+00 : f32
    %285 = vector.broadcast %cst_89 : f32 to vector<1x1xf32>
    %286 = vector.extract_strided_slice %252 {offsets = [0, 0], sizes = [1, 255], strides = [1, 1]} : vector<1x256xf32> to vector<1x255xf32>
    %287 = tpu.concatenate %285, %286 in 1 : vector<1x1xf32>, vector<1x255xf32> -> vector<1x256xf32>
    %288 = vector.broadcast %284 : vector<16x1xf32> to vector<16x256xf32>
    %289 = vector.broadcast %287 : vector<1x256xf32> to vector<16x256xf32>
    %290 = arith.mulf %288, %289 : vector<16x256xf32>
    %291 = vector.extract_strided_slice %283 {offsets = [0, 1], sizes = [16, 1], strides = [1, 1]} : vector<16x4xf32> to vector<16x1xf32>
    %292 = vector.broadcast %291 : vector<16x1xf32> to vector<16x256xf32>
    %293 = vector.broadcast %252 : vector<1x256xf32> to vector<16x256xf32>
    %294 = arith.mulf %292, %293 : vector<16x256xf32>
    %295 = arith.addf %290, %294 : vector<16x256xf32>
    %296 = vector.extract_strided_slice %283 {offsets = [0, 2], sizes = [16, 1], strides = [1, 1]} : vector<16x4xf32> to vector<16x1xf32>
    %cst_90 = arith.constant 0.000000e+00 : f32
    %297 = vector.broadcast %cst_90 : f32 to vector<1x1xf32>
    %298 = vector.extract_strided_slice %252 {offsets = [0, 1], sizes = [1, 255], strides = [1, 1]} : vector<1x256xf32> to vector<1x255xf32>
    %299 = tpu.concatenate %298, %297 in 1 : vector<1x255xf32>, vector<1x1xf32> -> vector<1x256xf32>
    %300 = vector.broadcast %296 : vector<16x1xf32> to vector<16x256xf32>
    %301 = vector.broadcast %299 : vector<1x256xf32> to vector<16x256xf32>
    %302 = arith.mulf %300, %301 : vector<16x256xf32>
    %303 = arith.addf %295, %302 : vector<16x256xf32>
    %304 = vector.extract_strided_slice %283 {offsets = [0, 3], sizes = [16, 1], strides = [1, 1]} : vector<16x4xf32> to vector<16x1xf32>
    %305 = vector.broadcast %304 : vector<16x1xf32> to vector<16x256xf32>
    %306 = arith.addf %303, %305 : vector<16x256xf32>
    %c72_i32_91 = arith.constant 72 : i32
    %307 = vector.broadcast %c72_i32_91 : i32 to vector<1x256xi32>
    %308 = arith.cmpi slt, %5, %307 : vector<1x256xi32>
    %cst_92 = arith.constant 0.000000e+00 : f32
    %309 = vector.shape_cast %308 : vector<1x256xi1> to vector<1x256xi1>
    %310 = vector.broadcast %309 : vector<1x256xi1> to vector<16x256xi1>
    %311 = vector.broadcast %cst_92 : f32 to vector<16x256xf32>
    %312 = arith.select %310, %306, %311 : vector<16x256xi1>, vector<16x256xf32>
    %c312 = arith.constant 312 : index
    %c0_93 = arith.constant 0 : index
    %313 = vector.load %arg2[%c312, %c0_93] : memref<376x128xf32, #tpu.memory_space<vmem>>, vector<64x33xf32>
    %314 = tpu.concatenate %267, %2 in 0 : vector<32x256xf32>, vector<1x256xf32> -> vector<33x256xf32>
    %cst_94 = arith.constant dense<0.000000e+00> : vector<64x256xf32>
    %315 = tpu.matmul %313, %314, %cst_94 {dimension_numbers = #tpu.dot_dimension_numbers<[1], [0], [0], [1], [0, 0, 1, 1], [], []>} : vector<64x33xf32>, vector<33x256xf32>, vector<64x256xf32> -> vector<64x256xf32>
    %316 = vector.extract_strided_slice %315 {offsets = [0, 0], sizes = [32, 256], strides = [1, 1]} : vector<64x256xf32> to vector<32x256xf32>
    %317 = vector.extract_strided_slice %315 {offsets = [32, 0], sizes = [32, 256], strides = [1, 1]} : vector<64x256xf32> to vector<32x256xf32>
    %cst_95 = arith.constant 0.000000e+00 : f32
    %318 = vector.broadcast %cst_95 : f32 to vector<32x1xf32>
    %319 = vector.extract_strided_slice %317 {offsets = [0, 0], sizes = [32, 255], strides = [1, 1]} : vector<32x256xf32> to vector<32x255xf32>
    %320 = tpu.concatenate %318, %319 in 1 : vector<32x1xf32>, vector<32x255xf32> -> vector<32x256xf32>
    %321 = arith.addf %316, %320 : vector<32x256xf32>
    %c12 = arith.constant 12 : index
    %322 = memref.load %arg3[%c12] : memref<13xf32, #tpu.memory_space<smem>>
    %cst_96 = arith.constant 0.000000e+00 : f32
    %323 = vector.broadcast %cst_96 : f32 to vector<32x256xf32>
    %324 = arith.cmpf oge, %321, %323 : vector<32x256xf32>
    %325 = vector.broadcast %322 : f32 to vector<32x256xf32>
    %326 = arith.mulf %325, %321 : vector<32x256xf32>
    %327 = arith.select %324, %321, %326 : vector<32x256xi1>, vector<32x256xf32>
    %c71_i32_97 = arith.constant 71 : i32
    %328 = vector.broadcast %c71_i32_97 : i32 to vector<1x256xi32>
    %329 = arith.cmpi slt, %5, %328 : vector<1x256xi32>
    %cst_98 = arith.constant 0.000000e+00 : f32
    %330 = vector.shape_cast %329 : vector<1x256xi1> to vector<1x256xi1>
    %331 = vector.broadcast %330 : vector<1x256xi1> to vector<32x256xi1>
    %332 = vector.broadcast %cst_98 : f32 to vector<32x256xf32>
    %333 = arith.select %331, %327, %332 : vector<32x256xi1>, vector<32x256xf32>
    %334 = arith.addf %282, %333 : vector<32x256xf32>
    %c280 = arith.constant 280 : index
    %c0_99 = arith.constant 0 : index
    %335 = vector.load %arg2[%c280, %c0_99] : memref<376x128xf32, #tpu.memory_space<vmem>>, vector<32x33xf32>
    %336 = tpu.concatenate %334, %2 in 0 : vector<32x256xf32>, vector<1x256xf32> -> vector<33x256xf32>
    %cst_100 = arith.constant dense<0.000000e+00> : vector<32x256xf32>
    %337 = tpu.matmul %335, %336, %cst_100 {dimension_numbers = #tpu.dot_dimension_numbers<[1], [0], [0], [1], [0, 0, 1, 1], [], []>} : vector<32x33xf32>, vector<33x256xf32>, vector<32x256xf32> -> vector<32x256xf32>
    %338 = vector.extract_strided_slice %337 {offsets = [0, 0], sizes = [16, 256], strides = [1, 1]} : vector<32x256xf32> to vector<16x256xf32>
    %339 = vector.extract_strided_slice %337 {offsets = [16, 0], sizes = [16, 256], strides = [1, 1]} : vector<32x256xf32> to vector<16x256xf32>
    %cst_101 = arith.constant 0.000000e+00 : f32
    %340 = vector.broadcast %cst_101 : f32 to vector<16x1xf32>
    %341 = vector.extract_strided_slice %339 {offsets = [0, 0], sizes = [16, 255], strides = [1, 1]} : vector<16x256xf32> to vector<16x255xf32>
    %342 = tpu.concatenate %340, %341 in 1 : vector<16x1xf32>, vector<16x255xf32> -> vector<16x256xf32>
    %343 = arith.addf %338, %342 : vector<16x256xf32>
    %c11 = arith.constant 11 : index
    %344 = memref.load %arg3[%c11] : memref<13xf32, #tpu.memory_space<smem>>
    %cst_102 = arith.constant 0.000000e+00 : f32
    %345 = vector.broadcast %cst_102 : f32 to vector<16x256xf32>
    %346 = arith.cmpf oge, %343, %345 : vector<16x256xf32>
    %347 = vector.broadcast %344 : f32 to vector<16x256xf32>
    %348 = arith.mulf %347, %343 : vector<16x256xf32>
    %349 = arith.select %346, %343, %348 : vector<16x256xi1>, vector<16x256xf32>
    %c72_i32_103 = arith.constant 72 : i32
    %350 = vector.broadcast %c72_i32_103 : i32 to vector<1x256xi32>
    %351 = arith.cmpi slt, %5, %350 : vector<1x256xi32>
    %cst_104 = arith.constant 0.000000e+00 : f32
    %352 = vector.shape_cast %351 : vector<1x256xi1> to vector<1x256xi1>
    %353 = vector.broadcast %352 : vector<1x256xi1> to vector<16x256xi1>
    %354 = vector.broadcast %cst_104 : f32 to vector<16x256xf32>
    %355 = arith.select %353, %349, %354 : vector<16x256xi1>, vector<16x256xf32>
    %356 = arith.addf %312, %355 : vector<16x256xf32>
    %c272 = arith.constant 272 : index
    %c0_105 = arith.constant 0 : index
    %357 = vector.load %arg2[%c272, %c0_105] : memref<376x128xf32, #tpu.memory_space<vmem>>, vector<2x17xf32>
    %358 = tpu.concatenate %356, %2 in 0 : vector<16x256xf32>, vector<1x256xf32> -> vector<17x256xf32>
    %cst_106 = arith.constant dense<0.000000e+00> : vector<2x256xf32>
    %359 = tpu.matmul %357, %358, %cst_106 {dimension_numbers = #tpu.dot_dimension_numbers<[1], [0], [0], [1], [0, 0, 1, 1], [], []>} : vector<2x17xf32>, vector<17x256xf32>, vector<2x256xf32> -> vector<2x256xf32>
    %360 = vector.extract_strided_slice %359 {offsets = [0, 0], sizes = [1, 256], strides = [1, 1]} : vector<2x256xf32> to vector<1x256xf32>
    %361 = vector.extract_strided_slice %359 {offsets = [1, 0], sizes = [1, 256], strides = [1, 1]} : vector<2x256xf32> to vector<1x256xf32>
    %cst_107 = arith.constant 0.000000e+00 : f32
    %362 = vector.broadcast %cst_107 : f32 to vector<1x1xf32>
    %363 = vector.extract_strided_slice %361 {offsets = [0, 0], sizes = [1, 255], strides = [1, 1]} : vector<1x256xf32> to vector<1x255xf32>
    %364 = tpu.concatenate %362, %363 in 1 : vector<1x1xf32>, vector<1x255xf32> -> vector<1x256xf32>
    %365 = arith.addf %360, %364 : vector<1x256xf32>
    %c10 = arith.constant 10 : index
    %366 = memref.load %arg3[%c10] : memref<13xf32, #tpu.memory_space<smem>>
    %cst_108 = arith.constant 0.000000e+00 : f32
    %367 = vector.broadcast %cst_108 : f32 to vector<1x256xf32>
    %368 = arith.cmpf oge, %365, %367 : vector<1x256xf32>
    %369 = vector.broadcast %366 : f32 to vector<1x256xf32>
    %370 = arith.mulf %369, %365 : vector<1x256xf32>
    %371 = arith.select %368, %365, %370 : vector<1x256xi1>, vector<1x256xf32>
    %c73_i32_109 = arith.constant 73 : i32
    %372 = vector.broadcast %c73_i32_109 : i32 to vector<1x256xi32>
    %373 = arith.cmpi slt, %5, %372 : vector<1x256xi32>
    %cst_110 = arith.constant 0.000000e+00 : f32
    %374 = vector.broadcast %cst_110 : f32 to vector<1x256xf32>
    %375 = arith.select %373, %371, %374 : vector<1x256xi1>, vector<1x256xf32>
    %c0_111 = arith.constant 0 : index
    %c0_112 = arith.constant 0 : index
    %c0_113 = arith.constant 0 : index
    %376 = vector.load %arg4[%c0_111, %c0_112, %c0_113] : memref<1x4x256xf32, #tpu.memory_space<vmem>>, vector<1x4x256xf32>
    %377 = vector.shape_cast %376 : vector<1x4x256xf32> to vector<4x256xf32>
    %378 = vector.shape_cast %191 : vector<4x256xf32> to vector<1x4x256xf32>
    tpu.vector_store %arg4[%c0_111, %c0_112, %c0_113], %378 {strides = array<i32>} : memref<1x4x256xf32, #tpu.memory_space<vmem>>, vector<1x4x256xf32>,
    %c0_114 = arith.constant 0 : index
    %c0_115 = arith.constant 0 : index
    %c0_116 = arith.constant 0 : index
    %379 = vector.load %arg5[%c0_114, %c0_115, %c0_116] : memref<1x1x256xf32, #tpu.memory_space<vmem>>, vector<1x1x256xf32>
    %380 = vector.shape_cast %379 : vector<1x1x256xf32> to vector<1x256xf32>
    %381 = vector.shape_cast %375 : vector<1x256xf32> to vector<1x1x256xf32>
    tpu.vector_store %arg5[%c0_114, %c0_115, %c0_116], %381 {strides = array<i32>} : memref<1x1x256xf32, #tpu.memory_space<vmem>>, vector<1x1x256xf32>,
    %c0_117 = arith.constant 0 : index
    %c0_118 = arith.constant 0 : index
    %c0_119 = arith.constant 0 : index
    %382 = vector.load %arg6[%c0_117, %c0_118, %c0_119] : memref<1x8x256xf32, #tpu.memory_space<vmem>>, vector<1x8x256xf32>
    %383 = vector.shape_cast %382 : vector<1x8x256xf32> to vector<8x256xf32>
    %384 = vector.shape_cast %212 : vector<8x256xf32> to vector<1x8x256xf32>
    tpu.vector_store %arg6[%c0_117, %c0_118, %c0_119], %384 {strides = array<i32>} : memref<1x8x256xf32, #tpu.memory_space<vmem>>, vector<1x8x256xf32>,
    %c0_120 = arith.constant 0 : index
    %c0_121 = arith.constant 0 : index
    %c0_122 = arith.constant 0 : index
    %385 = vector.load %arg7[%c0_120, %c0_121, %c0_122] : memref<1x8x256xf32, #tpu.memory_space<vmem>>, vector<1x8x256xf32>
    %386 = vector.shape_cast %385 : vector<1x8x256xf32> to vector<8x256xf32>
    %387 = vector.shape_cast %233 : vector<8x256xf32> to vector<1x8x256xf32>
    tpu.vector_store %arg7[%c0_120, %c0_121, %c0_122], %387 {strides = array<i32>} : memref<1x8x256xf32, #tpu.memory_space<vmem>>, vector<1x8x256xf32>,
    %c0_123 = arith.constant 0 : index
    %c0_124 = arith.constant 0 : index
    %c0_125 = arith.constant 0 : index
    %388 = vector.load %arg8[%c0_123, %c0_124, %c0_125] : memref<1x1x256xf32, #tpu.memory_space<vmem>>, vector<1x1x256xf32>
    %389 = vector.shape_cast %388 : vector<1x1x256xf32> to vector<1x256xf32>
    %390 = vector.shape_cast %252 : vector<1x256xf32> to vector<1x1x256xf32>
    tpu.vector_store %arg8[%c0_123, %c0_124, %c0_125], %390 {strides = array<i32>} : memref<1x1x256xf32, #tpu.memory_space<vmem>>, vector<1x1x256xf32>,
    return
  }
  func.func @transform_0(%arg0: i32) -> (i32, i32, i32) {
    %c0_i32 = arith.constant 0 : i32
    %c0_i32_0 = arith.constant 0 : i32
    %c0_i32_1 = arith.constant 0 : i32
    return %arg0, %c0_i32, %c0_i32_0 : i32, i32, i32
  }
  func.func @transform_1(%arg0: i32) -> (i32, i32) {
    %c0_i32 = arith.constant 0 : i32
    %c0_i32_0 = arith.constant 0 : i32
    %c0_i32_1 = arith.constant 0 : i32
    return %c0_i32, %c0_i32_0 : i32, i32
  }
  func.func @transform_2(%arg0: i32) -> i32 {
    %c0_i32 = arith.constant 0 : i32
    %c0_i32_0 = arith.constant 0 : i32
    return %c0_i32 : i32
  }
  func.func @transform_3(%arg0: i32) -> (i32, i32, i32) {
    %c0_i32 = arith.constant 0 : i32
    %c0_i32_0 = arith.constant 0 : i32
    %c0_i32_1 = arith.constant 0 : i32
    return %arg0, %c0_i32, %c0_i32_0 : i32, i32, i32
  }
  func.func @transform_4(%arg0: i32) -> (i32, i32, i32) {
    %c0_i32 = arith.constant 0 : i32
    %c0_i32_0 = arith.constant 0 : i32
    %c0_i32_1 = arith.constant 0 : i32
    return %arg0, %c0_i32, %c0_i32_0 : i32, i32, i32
  }
  func.func @transform_5(%arg0: i32) -> (i32, i32, i32) {
    %c0_i32 = arith.constant 0 : i32
    %c0_i32_0 = arith.constant 0 : i32
    %c0_i32_1 = arith.constant 0 : i32
    return %arg0, %c0_i32, %c0_i32_0 : i32, i32, i32
  }
  func.func @transform_6(%arg0: i32) -> (i32, i32, i32) {
    %c0_i32 = arith.constant 0 : i32
    %c0_i32_0 = arith.constant 0 : i32
    %c0_i32_1 = arith.constant 0 : i32
    return %arg0, %c0_i32, %c0_i32_0 : i32, i32, i32
  }
  func.func @transform_7(%arg0: i32) -> (i32, i32, i32) {
    %c0_i32 = arith.constant 0 : i32
    %c0_i32_0 = arith.constant 0 : i32
    %c0_i32_1 = arith.constant 0 : i32
    return %arg0, %c0_i32, %c0_i32_0 : i32, i32, i32
  }
}

</mosaic_0001>

<llo_original>
// kernel: dhrnet_forward.1
$region0: #{dhrnet_forward.1}
  #allocation0 [shape = 'u32[]', space=smem, size = 0x4, offset = 0x4, fixed_abs, tag = 'smem constant byte address 0x4 - core index']
  #allocation1 [shape = 'u32[144,128]{1,0:T(1,128)}', space=vmem, size = 0x12000, scoped, tag = 'internal scratch']
  %s0 = inlined_call_operand.vmem [shape: f32[1,1,256], index: 0, kind: input, shape index: {}]
  %s1 = inlined_call_operand.vmem [shape: f32[376,128], index: 1, kind: input, shape index: {}]
  %s2 = inlined_call_operand.vmem [shape: f32[13], index: 2, kind: input, shape index: {}]
  %s3 = inlined_call_operand.vmem [shape: f32[1,4,256], index: 3, kind: output, shape index: {0}]
  %s4 = inlined_call_operand.hbm [shape: f32[1,1,256], index: 4, kind: output, shape index: {1}]
  %s5 = inlined_call_operand.vmem [shape: f32[1,8,256], index: 5, kind: output, shape index: {2}]
  %s6 = inlined_call_operand.vmem [shape: f32[1,8,256], index: 6, kind: output, shape index: {3}]
  %s7 = inlined_call_operand.hbm [shape: f32[1,1,256], index: 7, kind: output, shape index: {4}]
  %8 = xla_tuple %s3, %s4, %s5, %s6, %s7
  %s9 = sld [smem:[#allocation0]]
  $region58: #{dhrnet_forward.1} parent=0
    _
  %s11 = ssub.s32 1, %s9
  %s12 = scalar_select 0, %s11, %s9
  $region1: #{dhrnet_forward.1} parent=0
    #allocation2 [shape = 'u8[512]{0}', space=smem, size = 0x200, scoped, tag = 'input window, operand 2, single buffered']
    #allocation3 [shape = 's32[1]{0}', space=sflag, size = 0x4, scoped, tag = 'scoped memory for dhrnet_forward.1']
    #allocation4 [shape = 's32[1]{0}', space=sflag, size = 0x4, scoped, tag = 'scoped memory for dhrnet_forward.1']
    #allocation5 [shape = 'u8[1024]{0}', space=vmem, size = 0x400, scoped, tag = 'output window, operand 1, single buffered']
    #allocation6 [shape = 'u8[1024]{0}', space=vmem, size = 0x400, scoped, tag = 'output window, operand 4, single buffered']
    #allocation7 [shape = 's32[1]{0}', space=sflag, size = 0x4, scoped, tag = 'scoped memory for dhrnet_forward.1']
    %13 = vsyncpa [#allocation4], 0
    %14 = vsyncpa [#allocation3], 0
    %15 = vsyncpa [#allocation7], 0
    // Predicated region
    $region2: #{dhrnet_forward.1} parent=1 // pred_check
      _
    $region3: #{dhrnet_forward.1} parent=1 // pred_check_branch
      %17 = sbr.rel (0) target = $region5
    $region4: #{dhrnet_forward.1} parent=1 // pred_region
      _
    $region5: #{dhrnet_forward.1} parent=1 // pred_fallthru
      _
    // Predicated region
    $region6: #{dhrnet_forward.1} parent=1 // pred_check
      _
    $region7: #{dhrnet_forward.1} parent=1 // pred_check_branch
      %19 = sbr.rel (0) target = $region9
    $region8: #{dhrnet_forward.1} parent=1 // pred_region
      _
    $region9: #{dhrnet_forward.1} parent=1 // pred_fallthru
      _
    // Predicated region
    $region10: #{dhrnet_forward.1} parent=1 // pred_check
      _
    $region11: #{dhrnet_forward.1} parent=1 // pred_check_branch
      %21 = sbr.rel (0) target = $region13
    $region12: #{dhrnet_forward.1} parent=1 // pred_region
      %s23 = ssub.s32 16, 16
      %24 = vsyncadd [#allocation4], %s23
      %s26 = sshll.u32 %s2, 4
      %s27 = int_to_ptr.vmem [resolvable:$true] %s26
      %29 = dma.vmem_to_smem %s27, 16, [#allocation2], [#allocation4]
    $region13: #{dhrnet_forward.1} parent=1 // pred_fallthru
      _
    // Predicated region
    $region14: #{dhrnet_forward.1} parent=1 // pred_check
      _
    $region15: #{dhrnet_forward.1} parent=1 // pred_check_branch
      %31 = sbr.rel (0) target = $region17
    $region16: #{dhrnet_forward.1} parent=1 // pred_region
      %32 = dma.done [#allocation4], 16
    $region17: #{dhrnet_forward.1} parent=1 // pred_fallthru
      _
    %33 = sfence
    %v34 = vld [vmem:[%s0] sm:$0x3]
    %v35 = vlaneseq
    %v36 = vand.u32 %v35, 127
    %v37 = vadd.s32 %v36, 128
    %v38 = vand.u32 %v36, 127
    %v39 = vand.u32 %v37, 127
    %v40 = vld [vmem:[%s1] sm:$0xff]
    %v41 = vld [vmem:[%s1 + $0x8] sm:$0xff]
    %v43 = vlaneseq
    %v44 = vshrl.u32 %v43, 7
    %v45 = vsub.s32 0, %v44
    %v46 = vrot.slane %v34, %v45
    %v47 = vlaneseq
    %v48 = vshrl.u32 %v47, 7
    %v49 = vsub.s32 1, %v48
    %v50 = vrot.slane %v34, %v49
    %51 = vrot.lane.b32.xlu0 %v46, 1
    %v52 = vpop.permute.xlu0 %51
    %53 = vrot.lane.b32.xlu0 %v50, 1
    %v54 = vpop.permute.xlu0 %53
    %vm55 = vcmask 7168
    %v56 = vsel %vm55, %v52, %v54
    %v59 = vsel %vm55, 0.0, %v52
    %61 = vset.pattern.permute.xlu0 0
    %62 = vperm.xlu0 %61, %v40
    %v63 = vpop.permute.xlu0 %62
    %66 = vset.pattern.permute.xlu0 0
    %67 = vperm.xlu0 %66, %v41
    %v68 = vpop.permute.xlu0 %67
    %v70 = vlaneseq
    %v71 = vshrl.u32 %v70, 7
    %v72 = vsub.s32 0, %v71
    %v73 = vrot.slane %v59, %v72
    %v74 = vlaneseq
    %v75 = vshrl.u32 %v74, 7
    %v76 = vsub.s32 0, %v75
    %v77 = vrot.slane %v56, %v76
    %v78 = vmul.f32 %v63, %v73
    %v79 = vmul.f32 %v63, %v77
    %v80 = vmul.f32 %v68, %v73
    %v81 = vmul.f32 %v68, %v77
    %82 = vset.pattern.permute.xlu0 1
    %83 = vperm.xlu0 %82, %v40
    %v84 = vpop.permute.xlu0 %83
    %86 = vset.pattern.permute.xlu0 1
    %87 = vperm.xlu0 %86, %v41
    %v88 = vpop.permute.xlu0 %87
    %v92 = vmul.f32 %v84, %v46
    %v93 = vmul.f32 %v84, %v50
    %v94 = vmul.f32 %v88, %v46
    %v95 = vmul.f32 %v88, %v50
    %v96 = vadd.f32 %v78, %v92
    %v97 = vadd.f32 %v79, %v93
    %v98 = vadd.f32 %v80, %v94
    %v99 = vadd.f32 %v81, %v95
    %100 = vrot.lane.b32.xlu0 %v46, 127
    %v101 = vpop.permute.xlu0 %100
    %102 = vrot.lane.b32.xlu0 %v50, 127
    %v103 = vpop.permute.xlu0 %102
    %vm104 = vcmask 1039360
    %v105 = vsel %vm104, %v101, %v103
    %v108 = vsel %vm104, %v103, 0.0
    %109 = vset.pattern.permute.xlu0 2
    %110 = vperm.xlu0 %109, %v40
    %v111 = vpop.permute.xlu0 %110
    %113 = vset.pattern.permute.xlu0 2
    %114 = vperm.xlu0 %113, %v41
    %v115 = vpop.permute.xlu0 %114
    %v117 = vlaneseq
    %v118 = vshrl.u32 %v117, 7
    %v119 = vsub.s32 0, %v118
    %v120 = vrot.slane %v105, %v119
    %v121 = vlaneseq
    %v122 = vshrl.u32 %v121, 7
    %v123 = vsub.s32 0, %v122
    %v124 = vrot.slane %v108, %v123
    %v125 = vmul.f32 %v111, %v120
    %v126 = vmul.f32 %v111, %v124
    %v127 = vmul.f32 %v115, %v120
    %v128 = vmul.f32 %v115, %v124
    %v129 = vadd.f32 %v96, %v125
    %v130 = vadd.f32 %v97, %v126
    %v131 = vadd.f32 %v98, %v127
    %v132 = vadd.f32 %v99, %v128
    %133 = vset.pattern.permute.xlu0 3
    %134 = vperm.xlu0 %133, %v40
    %v135 = vpop.permute.xlu0 %134
    %137 = vset.pattern.permute.xlu0 3
    %138 = vperm.xlu0 %137, %v41
    %v139 = vpop.permute.xlu0 %138
    %v141 = vadd.f32 %v129, %v135
    %v142 = vadd.f32 %v130, %v135
    %v143 = vadd.f32 %v131, %v139
    %v144 = vadd.f32 %v132, %v139
    %s145 = sld [smem:[#allocation2]]
    %vm146 = vcmp.ge.f32.partialorder %v141, 0.0
    %vm147 = vcmp.ge.f32.partialorder %v142, 0.0
    %vm148 = vcmp.ge.f32.partialorder %v143, 0.0
    %vm149 = vcmp.ge.f32.partialorder %v144, 0.0
    %v150 = vstv %s145
    %v151 = vmul.f32 %v150, %v141
    %v152 = vmul.f32 %v150, %v142
    %v153 = vmul.f32 %v150, %v143
    %v154 = vmul.f32 %v150, %v144
    %v155 = vsel %vm146, %v141, %v151
    %v156 = vsel %vm147, %v142, %v152
    %v157 = vsel %vm148, %v143, %v153
    %v158 = vsel %vm149, %v144, %v154
    %vm159 = vcmp.lt.s32.totalorder %v38, 73
    %vm160 = vcmp.lt.s32.totalorder %v39, 73
    %v161 = vsel %vm159, 1, 0
    %v162 = vsel %vm160, 1, 0
    %vm163 = vcmp.eq.s32.totalorder %v161, 1
    %vm164 = vcmp.eq.s32.totalorder %v162, 1
    %v165 = vsel %vm163, %v155, 0.0
    %v166 = vsel %vm164, %v156, 0.0
    %v167 = vsel %vm163, %v157, 0.0
    %v168 = vsel %vm164, %v158, 0.0
    %v169 = vld [vmem:[%s1 + $0x10] sm:$0xff]
    %v170 = vld [vmem:[%s1 + $0x18] sm:$0xff]
    %175 = vrot.lane.b32.xlu0 %v165, 1
    %v176 = vpop.permute.xlu0 %175
    %177 = vrot.lane.b32.xlu0 %v166, 1
    %v178 = vpop.permute.xlu0 %177
    %179 = vrot.lane.b32.xlu0 %v167, 1
    %v180 = vpop.permute.xlu0 %179
    %181 = vrot.lane.b32.xlu0 %v168, 1
    %v182 = vpop.permute.xlu0 %181
    %v183 = vsel %vm55, %v176, %v178
    %v184 = vsel %vm55, %v180, %v182
    %v189 = vsel %vm55, 0.0, %v176
    %v190 = vsel %vm55, 0.0, %v180
    %191 = vrot.lane.b32.xlu0 %v165, 127
    %v192 = vpop.permute.xlu0 %191
    %193 = vrot.lane.b32.xlu0 %v166, 127
    %v194 = vpop.permute.xlu0 %193
    %195 = vrot.lane.b32.xlu0 %v167, 127
    %v196 = vpop.permute.xlu0 %195
    %197 = vrot.lane.b32.xlu0 %v168, 127
    %v198 = vpop.permute.xlu0 %197
    %v199 = vsel %vm104, %v192, %v194
    %v200 = vsel %vm104, %v196, %v198
    %v205 = vsel %vm104, %v194, 0.0
    %v206 = vsel %vm104, %v198, 0.0
    %vm207 = vcmask 400384
    %v209 = vsel %vm207, %v169, 0
    %v212 = vsel %vm207, %v170, 0
    %vm214 = vcmask 1040384
    %v216 = vsel %vm214, 1.0, 0
    %218 = vmatprep.subr.mxu0 %v183
    %219 = vmatpush1.msra.mxu0 %v189
    %220 = vmatprep.subr.mxu0 %v184
    %221 = vmatpush1.msra.mxu0 %v190
    %222 = vmatprep.subr.mxu0 %v166
    %223 = vmatpush1.msra.mxu0 %v165
    %224 = vmatprep.subr.mxu0 %v168
    %225 = vmatpush1.msra.mxu0 %v167
    %226 = vmatprep.subr.mxu0 %v205
    %227 = vmatpush1.msra.mxu0 %v199
    %228 = vmatprep.subr.mxu0 %v206
    %229 = vmatpush1.msra.mxu0 %v200
    %230 = vmatprep.subr.mxu0 %v216
    %231 = vmatpush1.msra.mxu0 %v216
    %232 = vmatprep.subr.mxu0 0.0
    %233 = vmatpush1.msra.mxu0 0.0
    %234 = vmatprep.subr.mxu0 0.0
    %235 = vmatpush1.msra.mxu0 0.0
    %236 = vmatprep.subr.mxu0 0.0
    %237 = vmatpush1.msra.mxu0 0.0
    %238 = vmatprep.subr.mxu0 0.0
    %239 = vmatpush1.msra.mxu0 0.0
    %240 = vmatprep.subr.mxu0 0.0
    %241 = vmatpush1.msra.mxu0 0.0
    %242 = vmatprep.subr.mxu0 0.0
    %243 = vmatpush1.msra.mxu0 0.0
    %244 = vmatprep.subr.mxu0 0.0
    %245 = vmatpush1.msra.mxu0 0.0
    %246 = vmatprep.subr.mxu0 0.0
    %247 = vmatpush1.msra.mxu0 0.0
    %248 = vmatprep.subr.mxu0 0.0
    %249 = vmatpush1.msra.mxu0 0.0
    %250 = vmatprep.subr.mxu0 0.0
    %251 = vmatpush1.msra.mxu0 0.0
    %252 = vmatprep.subr.mxu0 0.0
    %253 = vmatpush1.msra.mxu0 0.0
    %254 = vmatprep.subr.mxu0 0.0
    %255 = vmatpush1.msra.mxu0 0.0
    %256 = vmatprep.subr.mxu0 0.0
    %257 = vmatpush1.msra.mxu0 0.0
    %258 = vmatprep.subr.mxu0 0.0
    %259 = vmatpush1.msra.mxu0 0.0
    %260 = vmatprep.subr.mxu0 0.0
    %261 = vmatpush1.msra.mxu0 0.0
    %262 = vmatprep.subr.mxu0 0.0
    %263 = vmatpush1.msra.mxu0 0.0
    %264 = vmatprep.subr.mxu0 0.0
    %265 = vmatpush1.msra.mxu0 0.0
    %266 = vmatprep.subr.mxu0 0.0
    %267 = vmatpush1.msra.mxu0 0.0
    %268 = vmatprep.subr.mxu0 0.0
    %269 = vmatpush1.msra.mxu0 0.0
    %270 = vmatprep.subr.mxu0 0.0
    %271 = vmatpush1.msra.mxu0 0.0
    %272 = vmatprep.subr.mxu0 0.0
    %273 = vmatpush1.msra.mxu0 0.0
    %274 = vmatprep.subr.mxu0 0.0
    %275 = vmatpush1.msra.mxu0 0.0
    %276 = vmatprep.subr.mxu0 0.0
    %277 = vmatpush1.msra.mxu0 0.0
    %278 = vmatprep.subr.mxu0 0.0
    %279 = vmatpush1.msra.mxu0 0.0
    %280 = vmatprep.subr.mxu0 0.0
    %281 = vmatpush1.msra.mxu0 0.0
    %282 = vmatprep.mubr.f32.mxu0 0.0
    %283 = vmatmul.mubr.f32.gmra.mrb[0].mxu0 %v209
    %v284 = vpop.f32.mrb[0].mxu0
    %v285 = vadd.f32 0.0, %v284
    %v286 = vpop.f32.mrb[0].mxu0
    %v287 = vadd.f32 0.0, %v286
    %288 = vmatprep.mubr.f32.mxu0 0.0
    %289 = vmatmul.mubr.f32.gmra.mrb[0].mxu0 %v212
    %v290 = vpop.f32.mrb[0].mxu0
    %v291 = vadd.f32 0.0, %v290
    %v292 = vpop.f32.mrb[0].mxu0
    %v293 = vadd.f32 0.0, %v292
    %294 = vdwg.mxu0
    %s295 = sld [smem:[#allocation2 + $0x1]]
    %vm296 = vcmp.ge.f32.partialorder %v285, 0.0
    %vm297 = vcmp.ge.f32.partialorder %v287, 0.0
    %vm298 = vcmp.ge.f32.partialorder %v291, 0.0
    %vm299 = vcmp.ge.f32.partialorder %v293, 0.0
    %v300 = vstv %s295
    %v301 = vmul.f32 %v300, %v285
    %v302 = vmul.f32 %v300, %v287
    %v303 = vmul.f32 %v300, %v291
    %v304 = vmul.f32 %v300, %v293
    %v305 = vsel %vm296, %v285, %v301
    %v306 = vsel %vm297, %v287, %v302
    %v307 = vsel %vm298, %v291, %v303
    %v308 = vsel %vm299, %v293, %v304
    %v309 = vsel %vm163, %v305, 0.0
    %v310 = vsel %vm164, %v306, 0.0
    %v311 = vsel %vm163, %v307, 0.0
    %v312 = vsel %vm164, %v308, 0.0
    %317 = vrot.lane.b32.xlu0 %v309, 127
    %v318 = vpop.permute.xlu0 %317
    %319 = vrot.lane.b32.xlu0 %v310, 127
    %v320 = vpop.permute.xlu0 %319
    %321 = vrot.lane.b32.xlu0 %v311, 127
    %v322 = vpop.permute.xlu0 %321
    %323 = vrot.lane.b32.xlu0 %v312, 127
    %v324 = vpop.permute.xlu0 %323
    %v325 = vsel %vm104, %v318, %v320
    %v326 = vsel %vm104, %v322, %v324
    %v331 = vsel %vm104, %v320, 0.0
    %v332 = vsel %vm104, %v324, 0.0
    %v333 = vmax.f32 %v309, %v325
    %v334 = vmax.f32 %v310, %v331
    %v335 = vmax.f32 %v311, %v326
    %v336 = vmax.f32 %v312, %v332
    %vm337 = vcmp.lt.s32.totalorder %v38, 72
    %vm338 = vcmp.lt.s32.totalorder %v39, 72
    %v339 = vsel %vm337, 1, 0
    %v340 = vsel %vm338, 1, 0
    %vm341 = vcmp.eq.s32.totalorder %v339, 1
    %vm342 = vcmp.eq.s32.totalorder %v340, 1
    %v343 = vsel %vm341, %v333, 0.0
    %v344 = vsel %vm342, %v334, 0.0
    %v345 = vsel %vm341, %v335, 0.0
    %v346 = vsel %vm342, %v336, 0.0
    %v347 = vld [vmem:[%s1 + $0x20] sm:$0xff]
    %v348 = vld [vmem:[%s1 + $0x28] sm:$0xff]
    %v349 = vld [vmem:[%s1 + $0x30] sm:$0xff]
    %v350 = vld [vmem:[%s1 + $0x38] sm:$0xff]
    %355 = vrot.lane.b32.xlu0 %v343, 1
    %v356 = vpop.permute.xlu0 %355
    %357 = vrot.lane.b32.xlu0 %v344, 1
    %v358 = vpop.permute.xlu0 %357
    %359 = vrot.lane.b32.xlu0 %v345, 1
    %v360 = vpop.permute.xlu0 %359
    %361 = vrot.lane.b32.xlu0 %v346, 1
    %v362 = vpop.permute.xlu0 %361
    %v363 = vsel %vm55, %v356, %v358
    %v364 = vsel %vm55, %v360, %v362
    %v369 = vsel %vm55, 0.0, %v356
    %v370 = vsel %vm55, 0.0, %v360
    %371 = vrot.lane.b32.xlu0 %v343, 127
    %v372 = vpop.permute.xlu0 %371
    %373 = vrot.lane.b32.xlu0 %v344, 127
    %v374 = vpop.permute.xlu0 %373
    %375 = vrot.lane.b32.xlu0 %v345, 127
    %v376 = vpop.permute.xlu0 %375
    %377 = vrot.lane.b32.xlu0 %v346, 127
    %v378 = vpop.permute.xlu0 %377
    %v379 = vsel %vm104, %v372, %v374
    %v380 = vsel %vm104, %v376, %v378
    %v385 = vsel %vm104, %v374, 0.0
    %v386 = vsel %vm104, %v378, 0.0
    %v388 = vsel %vm207, %v347, 0
    %v391 = vsel %vm207, %v348, 0
    %v394 = vsel %vm207, %v349, 0
    %v397 = vsel %vm207, %v350, 0
    %399 = vmatprep.subr.mxu0 %v363
    %400 = vmatpush1.msra.mxu0 %v369
    %401 = vmatprep.subr.mxu0 %v364
    %402 = vmatpush1.msra.mxu0 %v370
    %403 = vmatprep.subr.mxu0 %v344
    %404 = vmatpush1.msra.mxu0 %v343
    %405 = vmatprep.subr.mxu0 %v346
    %406 = vmatpush1.msra.mxu0 %v345
    %407 = vmatprep.subr.mxu0 %v385
    %408 = vmatpush1.msra.mxu0 %v379
    %409 = vmatprep.subr.mxu0 %v386
    %410 = vmatpush1.msra.mxu0 %v380
    %411 = vmatprep.subr.mxu0 %v216
    %412 = vmatpush1.msra.mxu0 %v216
    %413 = vmatprep.subr.mxu0 0.0
    %414 = vmatpush1.msra.mxu0 0.0
    %415 = vmatprep.subr.mxu0 0.0
    %416 = vmatpush1.msra.mxu0 0.0
    %417 = vmatprep.subr.mxu0 0.0
    %418 = vmatpush1.msra.mxu0 0.0
    %419 = vmatprep.subr.mxu0 0.0
    %420 = vmatpush1.msra.mxu0 0.0
    %421 = vmatprep.subr.mxu0 0.0
    %422 = vmatpush1.msra.mxu0 0.0
    %423 = vmatprep.subr.mxu0 0.0
    %424 = vmatpush1.msra.mxu0 0.0
    %425 = vmatprep.subr.mxu0 0.0
    %426 = vmatpush1.msra.mxu0 0.0
    %427 = vmatprep.subr.mxu0 0.0
    %428 = vmatpush1.msra.mxu0 0.0
    %429 = vmatprep.subr.mxu0 0.0
    %430 = vmatpush1.msra.mxu0 0.0
    %431 = vmatprep.subr.mxu0 0.0
    %432 = vmatpush1.msra.mxu0 0.0
    %433 = vmatprep.subr.mxu0 0.0
    %434 = vmatpush1.msra.mxu0 0.0
    %435 = vmatprep.subr.mxu0 0.0
    %436 = vmatpush1.msra.mxu0 0.0
    %437 = vmatprep.subr.mxu0 0.0
    %438 = vmatpush1.msra.mxu0 0.0
    %439 = vmatprep.subr.mxu0 0.0
    %440 = vmatpush1.msra.mxu0 0.0
    %441 = vmatprep.subr.mxu0 0.0
    %442 = vmatpush1.msra.mxu0 0.0
    %443 = vmatprep.subr.mxu0 0.0
    %444 = vmatpush1.msra.mxu0 0.0
    %445 = vmatprep.subr.mxu0 0.0
    %446 = vmatpush1.msra.mxu0 0.0
    %447 = vmatprep.subr.mxu0 0.0
    %448 = vmatpush1.msra.mxu0 0.0
    %449 = vmatprep.subr.mxu0 0.0
    %450 = vmatpush1.msra.mxu0 0.0
    %451 = vmatprep.subr.mxu0 0.0
    %452 = vmatpush1.msra.mxu0 0.0
    %453 = vmatprep.subr.mxu0 0.0
    %454 = vmatpush1.msra.mxu0 0.0
    %455 = vmatprep.subr.mxu0 0.0
    %456 = vmatpush1.msra.mxu0 0.0
    %457 = vmatprep.subr.mxu0 0.0
    %458 = vmatpush1.msra.mxu0 0.0
    %459 = vmatprep.subr.mxu0 0.0
    %460 = vmatpush1.msra.mxu0 0.0
    %461 = vmatprep.subr.mxu0 0.0
    %462 = vmatpush1.msra.mxu0 0.0
    %463 = vmatprep.mubr.f32.mxu0 0.0
    %464 = vmatmul.mubr.f32.gmra.mrb[0].mxu0 %v388
    %v465 = vpop.f32.mrb[0].mxu0
    %v466 = vadd.f32 0.0, %v465
    %v467 = vpop.f32.mrb[0].mxu0
    %v468 = vadd.f32 0.0, %v467
    %469 = vmatprep.mubr.f32.mxu0 0.0
    %470 = vmatmul.mubr.f32.gmra.mrb[0].mxu0 %v391
    %v471 = vpop.f32.mrb[0].mxu0
    %v472 = vadd.f32 0.0, %v471
    %v473 = vpop.f32.mrb[0].mxu0
    %v474 = vadd.f32 0.0, %v473
    %475 = vmatprep.mubr.f32.mxu0 0.0
    %476 = vmatmul.mubr.f32.gmra.mrb[0].mxu0 %v394
    %v477 = vpop.f32.mrb[0].mxu0
    %v478 = vadd.f32 0.0, %v477
    %v479 = vpop.f32.mrb[0].mxu0
    %v480 = vadd.f32 0.0, %v479
    %481 = vmatprep.mubr.f32.mxu0 0.0
    %482 = vmatmul.mubr.f32.gmra.mrb[0].mxu0 %v397
    %v483 = vpop.f32.mrb[0].mxu0
    %v484 = vadd.f32 0.0, %v483
    %v485 = vpop.f32.mrb[0].mxu0
    %v486 = vadd.f32 0.0, %v485
    %487 = vdwg.mxu0
    %s488 = sld [smem:[#allocation2 + $0x2]]
    %vm489 = vcmp.ge.f32.partialorder %v466, 0.0
    %vm490 = vcmp.ge.f32.partialorder %v468, 0.0
    %vm491 = vcmp.ge.f32.partialorder %v472, 0.0
    %vm492 = vcmp.ge.f32.partialorder %v474, 0.0
    %vm493 = vcmp.ge.f32.partialorder %v478, 0.0
    %vm494 = vcmp.ge.f32.partialorder %v480, 0.0
    %vm495 = vcmp.ge.f32.partialorder %v484, 0.0
    %vm496 = vcmp.ge.f32.partialorder %v486, 0.0
    %v497 = vstv %s488
    %v498 = vmul.f32 %v497, %v466
    %v499 = vmul.f32 %v497, %v468
    %v500 = vmul.f32 %v497, %v472
    %v501 = vmul.f32 %v497, %v474
    %v502 = vmul.f32 %v497, %v478
    %v503 = vmul.f32 %v497, %v480
    %v504 = vmul.f32 %v497, %v484
    %v505 = vmul.f32 %v497, %v486
    %v506 = vsel %vm489, %v466, %v498
    %v507 = vsel %vm490, %v468, %v499
    %v508 = vsel %vm491, %v472, %v500
    %v509 = vsel %vm492, %v474, %v501
    %v510 = vsel %vm493, %v478, %v502
    %v511 = vsel %vm494, %v480, %v503
    %v512 = vsel %vm495, %v484, %v504
    %v513 = vsel %vm496, %v486, %v505
    %v514 = vsel %vm341, %v506, 0.0
    %v515 = vsel %vm342, %v507, 0.0
    %v516 = vsel %vm341, %v508, 0.0
    %v517 = vsel %vm342, %v509, 0.0
    %v518 = vsel %vm341, %v510, 0.0
    %v519 = vsel %vm342, %v511, 0.0
    %v520 = vsel %vm341, %v512, 0.0
    %v521 = vsel %vm342, %v513, 0.0
    %v522 = vld [vmem:[%s1 + $0x40] sm:$0xff]
    %v523 = vld [vmem:[%s1 + $0x48] sm:$0xff]
    %v524 = vld [vmem:[%s1 + $0x50] sm:$0xff]
    %v525 = vld [vmem:[%s1 + $0x58] sm:$0xff]
    %534 = vrot.lane.b32.xlu0 %v514, 1
    %v535 = vpop.permute.xlu0 %534
    %536 = vrot.lane.b32.xlu0 %v515, 1
    %v537 = vpop.permute.xlu0 %536
    %538 = vrot.lane.b32.xlu0 %v516, 1
    %v539 = vpop.permute.xlu0 %538
    %540 = vrot.lane.b32.xlu0 %v517, 1
    %v541 = vpop.permute.xlu0 %540
    %542 = vrot.lane.b32.xlu0 %v518, 1
    %v543 = vpop.permute.xlu0 %542
    %544 = vrot.lane.b32.xlu0 %v519, 1
    %v545 = vpop.permute.xlu0 %544
    %546 = vrot.lane.b32.xlu0 %v520, 1
    %v547 = vpop.permute.xlu0 %546
    %548 = vrot.lane.b32.xlu0 %v521, 1
    %v549 = vpop.permute.xlu0 %548
    %v550 = vsel %vm55, %v535, %v537
    %v551 = vsel %vm55, %v539, %v541
    %v552 = vsel %vm55, %v543, %v545
    %v553 = vsel %vm55, %v547, %v549
    %v562 = vsel %vm55, 0.0, %v535
    %v563 = vsel %vm55, 0.0, %v539
    %v564 = vsel %vm55, 0.0, %v543
    %v565 = vsel %vm55, 0.0, %v547
    %566 = vrot.lane.b32.xlu0 %v514, 127
    %v567 = vpop.permute.xlu0 %566
    %568 = vrot.lane.b32.xlu0 %v515, 127
    %v569 = vpop.permute.xlu0 %568
    %570 = vrot.lane.b32.xlu0 %v516, 127
    %v571 = vpop.permute.xlu0 %570
    %572 = vrot.lane.b32.xlu0 %v517, 127
    %v573 = vpop.permute.xlu0 %572
    %574 = vrot.lane.b32.xlu0 %v518, 127
    %v575 = vpop.permute.xlu0 %574
    %576 = vrot.lane.b32.xlu0 %v519, 127
    %v577 = vpop.permute.xlu0 %576
    %578 = vrot.lane.b32.xlu0 %v520, 127
    %v579 = vpop.permute.xlu0 %578
    %580 = vrot.lane.b32.xlu0 %v521, 127
    %v581 = vpop.permute.xlu0 %580
    %v582 = vsel %vm104, %v567, %v569
    %v583 = vsel %vm104, %v571, %v573
    %v584 = vsel %vm104, %v575, %v577
    %v585 = vsel %vm104, %v579, %v581
    %v594 = vsel %vm104, %v569, 0.0
    %v595 = vsel %vm104, %v573, 0.0
    %v596 = vsel %vm104, %v577, 0.0
    %v597 = vsel %vm104, %v581, 0.0
    %vm598 = vcmask 793600
    %v600 = vsel %vm598, %v522, 0
    %v603 = vsel %vm598, %v523, 0
    %v606 = vsel %vm598, %v524, 0
    %v609 = vsel %vm598, %v525, 0
    %611 = vmatprep.subr.mxu0 %v550
    %612 = vmatpush1.msra.mxu0 %v562
    %613 = vmatprep.subr.mxu0 %v551
    %614 = vmatpush1.msra.mxu0 %v563
    %615 = vmatprep.subr.mxu0 %v552
    %616 = vmatpush1.msra.mxu0 %v564
    %617 = vmatprep.subr.mxu0 %v553
    %618 = vmatpush1.msra.mxu0 %v565
    %619 = vmatprep.subr.mxu0 %v515
    %620 = vmatpush1.msra.mxu0 %v514
    %621 = vmatprep.subr.mxu0 %v517
    %622 = vmatpush1.msra.mxu0 %v516
    %623 = vmatprep.subr.mxu0 %v519
    %624 = vmatpush1.msra.mxu0 %v518
    %625 = vmatprep.subr.mxu0 %v521
    %626 = vmatpush1.msra.mxu0 %v520
    %627 = vmatprep.subr.mxu0 %v594
    %628 = vmatpush1.msra.mxu0 %v582
    %629 = vmatprep.subr.mxu0 %v595
    %630 = vmatpush1.msra.mxu0 %v583
    %631 = vmatprep.subr.mxu0 %v596
    %632 = vmatpush1.msra.mxu0 %v584
    %633 = vmatprep.subr.mxu0 %v597
    %634 = vmatpush1.msra.mxu0 %v585
    %635 = vmatprep.subr.mxu0 %v216
    %636 = vmatpush1.msra.mxu0 %v216
    %637 = vmatprep.subr.mxu0 0.0
    %638 = vmatpush1.msra.mxu0 0.0
    %639 = vmatprep.subr.mxu0 0.0
    %640 = vmatpush1.msra.mxu0 0.0
    %641 = vmatprep.subr.mxu0 0.0
    %642 = vmatpush1.msra.mxu0 0.0
    %643 = vmatprep.subr.mxu0 0.0
    %644 = vmatpush1.msra.mxu0 0.0
    %645 = vmatprep.subr.mxu0 0.0
    %646 = vmatpush1.msra.mxu0 0.0
    %647 = vmatprep.subr.mxu0 0.0
    %648 = vmatpush1.msra.mxu0 0.0
    %649 = vmatprep.subr.mxu0 0.0
    %650 = vmatpush1.msra.mxu0 0.0
    %651 = vmatprep.subr.mxu0 0.0
    %652 = vmatpush1.msra.mxu0 0.0
    %653 = vmatprep.subr.mxu0 0.0
    %654 = vmatpush1.msra.mxu0 0.0
    %655 = vmatprep.subr.mxu0 0.0
    %656 = vmatpush1.msra.mxu0 0.0
    %657 = vmatprep.subr.mxu0 0.0
    %658 = vmatpush1.msra.mxu0 0.0
    %659 = vmatprep.subr.mxu0 0.0
    %660 = vmatpush1.msra.mxu0 0.0
    %661 = vmatprep.subr.mxu0 0.0
    %662 = vmatpush1.msra.mxu0 0.0
    %663 = vmatprep.subr.mxu0 0.0
    %664 = vmatpush1.msra.mxu0 0.0
    %665 = vmatprep.subr.mxu0 0.0
    %666 = vmatpush1.msra.mxu0 0.0
    %667 = vmatprep.subr.mxu0 0.0
    %668 = vmatpush1.msra.mxu0 0.0
    %669 = vmatprep.subr.mxu0 0.0
    %670 = vmatpush1.msra.mxu0 0.0
    %671 = vmatprep.subr.mxu0 0.0
    %672 = vmatpush1.msra.mxu0 0.0
    %673 = vmatprep.subr.mxu0 0.0
    %674 = vmatpush1.msra.mxu0 0.0
    %675 = vmatprep.mubr.f32.mxu0 0.0
    %676 = vmatmul.mubr.f32.gmra.mrb[0].mxu0 %v600
    %v677 = vpop.f32.mrb[0].mxu0
    %v678 = vadd.f32 0.0, %v677
    %v679 = vpop.f32.mrb[0].mxu0
    %v680 = vadd.f32 0.0, %v679
    %681 = vmatprep.mubr.f32.mxu0 0.0
    %682 = vmatmul.mubr.f32.gmra.mrb[0].mxu0 %v603
    %v683 = vpop.f32.mrb[0].mxu0
    %v684 = vadd.f32 0.0, %v683
    %v685 = vpop.f32.mrb[0].mxu0
    %v686 = vadd.f32 0.0, %v685
    %687 = vmatprep.mubr.f32.mxu0 0.0
    %688 = vmatmul.mubr.f32.gmra.mrb[0].mxu0 %v606
    %v689 = vpop.f32.mrb[0].mxu0
    %v690 = vadd.f32 0.0, %v689
    %v691 = vpop.f32.mrb[0].mxu0
    %v692 = vadd.f32 0.0, %v691
    %693 = vmatprep.mubr.f32.mxu0 0.0
    %694 = vmatmul.mubr.f32.gmra.mrb[0].mxu0 %v609
    %v695 = vpop.f32.mrb[0].mxu0
    %v696 = vadd.f32 0.0, %v695
    %v697 = vpop.f32.mrb[0].mxu0
    %v698 = vadd.f32 0.0, %v697
    %699 = vdwg.mxu0
    %s700 = sld [smem:[#allocation2 + $0x3]]
    %vm701 = vcmp.ge.f32.partialorder %v678, 0.0
    %vm702 = vcmp.ge.f32.partialorder %v680, 0.0
    %vm703 = vcmp.ge.f32.partialorder %v684, 0.0
    %vm704 = vcmp.ge.f32.partialorder %v686, 0.0
    %vm705 = vcmp.ge.f32.partialorder %v690, 0.0
    %vm706 = vcmp.ge.f32.partialorder %v692, 0.0
    %vm707 = vcmp.ge.f32.partialorder %v696, 0.0
    %vm708 = vcmp.ge.f32.partialorder %v698, 0.0
    %v709 = vstv %s700
    %v710 = vmul.f32 %v709, %v678
    %v711 = vmul.f32 %v709, %v680
    %v712 = vmul.f32 %v709, %v684
    %v713 = vmul.f32 %v709, %v686
    %v714 = vmul.f32 %v709, %v690
    %v715 = vmul.f32 %v709, %v692
    %v716 = vmul.f32 %v709, %v696
    %v717 = vmul.f32 %v709, %v698
    %v718 = vsel %vm701, %v678, %v710
    %v719 = vsel %vm702, %v680, %v711
    %v720 = vsel %vm703, %v684, %v712
    %v721 = vsel %vm704, %v686, %v713
    %v722 = vsel %vm705, %v690, %v714
    %v723 = vsel %vm706, %v692, %v715
    %v724 = vsel %vm707, %v696, %v716
    %v725 = vsel %vm708, %v698, %v717
    %v726 = vsel %vm341, %v718, 0.0
    %v727 = vsel %vm342, %v719, 0.0
    %v728 = vsel %vm341, %v720, 0.0
    %v729 = vsel %vm342, %v721, 0.0
    %v730 = vsel %vm341, %v722, 0.0
    %v731 = vsel %vm342, %v723, 0.0
    %v732 = vsel %vm341, %v724, 0.0
    %v733 = vsel %vm342, %v725, 0.0
    %742 = vrot.lane.b32.xlu0 %v726, 127
    %v743 = vpop.permute.xlu0 %742
    %744 = vrot.lane.b32.xlu0 %v727, 127
    %v745 = vpop.permute.xlu0 %744
    %746 = vrot.lane.b32.xlu0 %v728, 127
    %v747 = vpop.permute.xlu0 %746
    %748 = vrot.lane.b32.xlu0 %v729, 127
    %v749 = vpop.permute.xlu0 %748
    %750 = vrot.lane.b32.xlu0 %v730, 127
    %v751 = vpop.permute.xlu0 %750
    %752 = vrot.lane.b32.xlu0 %v731, 127
    %v753 = vpop.permute.xlu0 %752
    %754 = vrot.lane.b32.xlu0 %v732, 127
    %v755 = vpop.permute.xlu0 %754
    %756 = vrot.lane.b32.xlu0 %v733, 127
    %v757 = vpop.permute.xlu0 %756
    %v758 = vsel %vm104, %v743, %v745
    %v759 = vsel %vm104, %v747, %v749
    %v760 = vsel %vm104, %v751, %v753
    %v761 = vsel %vm104, %v755, %v757
    %v770 = vsel %vm104, %v745, 0.0
    %v771 = vsel %vm104, %v749, 0.0
    %v772 = vsel %vm104, %v753, 0.0
    %v773 = vsel %vm104, %v757, 0.0
    %v774 = vmax.f32 %v726, %v758
    %v775 = vmax.f32 %v727, %v770
    %v776 = vmax.f32 %v728, %v759
    %v777 = vmax.f32 %v729, %v771
    %v778 = vmax.f32 %v730, %v760
    %v779 = vmax.f32 %v731, %v772
    %v780 = vmax.f32 %v732, %v761
    %v781 = vmax.f32 %v733, %v773
    %vm782 = vcmp.lt.s32.totalorder %v38, 71
    %vm783 = vcmp.lt.s32.totalorder %v39, 71
    %v784 = vsel %vm782, 1, 0
    %v785 = vsel %vm783, 1, 0
    %vm786 = vcmp.eq.s32.totalorder %v784, 1
    %vm787 = vcmp.eq.s32.totalorder %v785, 1
    %v788 = vsel %vm786, %v774, 0.0
    %v789 = vsel %vm787, %v775, 0.0
    %v790 = vsel %vm786, %v776, 0.0
    %v791 = vsel %vm787, %v777, 0.0
    %v792 = vsel %vm786, %v778, 0.0
    %v793 = vsel %vm787, %v779, 0.0
    %v794 = vsel %vm786, %v780, 0.0
    %v795 = vsel %vm787, %v781, 0.0
    %v796 = vld [vmem:[%s1 + $0x60] sm:$0xff]
    %v797 = vld [vmem:[%s1 + $0x68] sm:$0xff]
    %v798 = vld [vmem:[%s1 + $0x70] sm:$0xff]
    %v799 = vld [vmem:[%s1 + $0x78] sm:$0xff]
    %808 = vrot.lane.b32.xlu0 %v788, 1
    %v809 = vpop.permute.xlu0 %808
    %810 = vrot.lane.b32.xlu0 %v789, 1
    %v811 = vpop.permute.xlu0 %810
    %812 = vrot.lane.b32.xlu0 %v790, 1
    %v813 = vpop.permute.xlu0 %812
    %814 = vrot.lane.b32.xlu0 %v791, 1
    %v815 = vpop.permute.xlu0 %814
    %816 = vrot.lane.b32.xlu0 %v792, 1
    %v817 = vpop.permute.xlu0 %816
    %818 = vrot.lane.b32.xlu0 %v793, 1
    %v819 = vpop.permute.xlu0 %818
    %820 = vrot.lane.b32.xlu0 %v794, 1
    %v821 = vpop.permute.xlu0 %820
    %822 = vrot.lane.b32.xlu0 %v795, 1
    %v823 = vpop.permute.xlu0 %822
    %v824 = vsel %vm55, %v809, %v811
    %v825 = vsel %vm55, %v813, %v815
    %v826 = vsel %vm55, %v817, %v819
    %v827 = vsel %vm55, %v821, %v823
    %v836 = vsel %vm55, 0.0, %v809
    %v837 = vsel %vm55, 0.0, %v813
    %v838 = vsel %vm55, 0.0, %v817
    %v839 = vsel %vm55, 0.0, %v821
    %840 = vrot.lane.b32.xlu0 %v788, 127
    %v841 = vpop.permute.xlu0 %840
    %842 = vrot.lane.b32.xlu0 %v789, 127
    %v843 = vpop.permute.xlu0 %842
    %844 = vrot.lane.b32.xlu0 %v790, 127
    %v845 = vpop.permute.xlu0 %844
    %846 = vrot.lane.b32.xlu0 %v791, 127
    %v847 = vpop.permute.xlu0 %846
    %848 = vrot.lane.b32.xlu0 %v792, 127
    %v849 = vpop.permute.xlu0 %848
    %850 = vrot.lane.b32.xlu0 %v793, 127
    %v851 = vpop.permute.xlu0 %850
    %852 = vrot.lane.b32.xlu0 %v794, 127
    %v853 = vpop.permute.xlu0 %852
    %854 = vrot.lane.b32.xlu0 %v795, 127
    %v855 = vpop.permute.xlu0 %854
    %v856 = vsel %vm104, %v841, %v843
    %v857 = vsel %vm104, %v845, %v847
    %v858 = vsel %vm104, %v849, %v851
    %v859 = vsel %vm104, %v853, %v855
    %v868 = vsel %vm104, %v843, 0.0
    %v869 = vsel %vm104, %v847, 0.0
    %v870 = vsel %vm104, %v851, 0.0
    %v871 = vsel %vm104, %v855, 0.0
    %v873 = vsel %vm598, %v796, 0
    %v876 = vsel %vm598, %v797, 0
    %v879 = vsel %vm598, %v798, 0
    %v882 = vsel %vm598, %v799, 0
    %884 = vmatprep.subr.mxu0 %v824
    %885 = vmatpush1.msra.mxu0 %v836
    %886 = vmatprep.subr.mxu0 %v825
    %887 = vmatpush1.msra.mxu0 %v837
    %888 = vmatprep.subr.mxu0 %v826
    %889 = vmatpush1.msra.mxu0 %v838
    %890 = vmatprep.subr.mxu0 %v827
    %891 = vmatpush1.msra.mxu0 %v839
    %892 = vmatprep.subr.mxu0 %v789
    %893 = vmatpush1.msra.mxu0 %v788
    %894 = vmatprep.subr.mxu0 %v791
    %895 = vmatpush1.msra.mxu0 %v790
    %896 = vmatprep.subr.mxu0 %v793
    %897 = vmatpush1.msra.mxu0 %v792
    %898 = vmatprep.subr.mxu0 %v795
    %899 = vmatpush1.msra.mxu0 %v794
    %900 = vmatprep.subr.mxu0 %v868
    %901 = vmatpush1.msra.mxu0 %v856
    %902 = vmatprep.subr.mxu0 %v869
    %903 = vmatpush1.msra.mxu0 %v857
    %904 = vmatprep.subr.mxu0 %v870
    %905 = vmatpush1.msra.mxu0 %v858
    %906 = vmatprep.subr.mxu0 %v871
    %907 = vmatpush1.msra.mxu0 %v859
    %908 = vmatprep.subr.mxu0 %v216
    %909 = vmatpush1.msra.mxu0 %v216
    %910 = vmatprep.subr.mxu0 0.0
    %911 = vmatpush1.msra.mxu0 0.0
    %912 = vmatprep.subr.mxu0 0.0
    %913 = vmatpush1.msra.mxu0 0.0
    %914 = vmatprep.subr.mxu0 0.0
    %915 = vmatpush1.msra.mxu0 0.0
    %916 = vmatprep.subr.mxu0 0.0
    %917 = vmatpush1.msra.mxu0 0.0
    %918 = vmatprep.subr.mxu0 0.0
    %919 = vmatpush1.msra.mxu0 0.0
    %920 = vmatprep.subr.mxu0 0.0
    %921 = vmatpush1.msra.mxu0 0.0
    %922 = vmatprep.subr.mxu0 0.0
    %923 = vmatpush1.msra.mxu0 0.0
    %924 = vmatprep.subr.mxu0 0.0
    %925 = vmatpush1.msra.mxu0 0.0
    %926 = vmatprep.subr.mxu0 0.0
    %927 = vmatpush1.msra.mxu0 0.0
    %928 = vmatprep.subr.mxu0 0.0
    %929 = vmatpush1.msra.mxu0 0.0
    %930 = vmatprep.subr.mxu0 0.0
    %931 = vmatpush1.msra.mxu0 0.0
    %932 = vmatprep.subr.mxu0 0.0
    %933 = vmatpush1.msra.mxu0 0.0
    %934 = vmatprep.subr.mxu0 0.0
    %935 = vmatpush1.msra.mxu0 0.0
    %936 = vmatprep.subr.mxu0 0.0
    %937 = vmatpush1.msra.mxu0 0.0
    %938 = vmatprep.subr.mxu0 0.0
    %939 = vmatpush1.msra.mxu0 0.0
    %940 = vmatprep.subr.mxu0 0.0
    %941 = vmatpush1.msra.mxu0 0.0
    %942 = vmatprep.subr.mxu0 0.0
    %943 = vmatpush1.msra.mxu0 0.0
    %944 = vmatprep.subr.mxu0 0.0
    %945 = vmatpush1.msra.mxu0 0.0
    %946 = vmatprep.subr.mxu0 0.0
    %947 = vmatpush1.msra.mxu0 0.0
    %948 = vmatprep.mubr.f32.mxu0 0.0
    %949 = vmatmul.mubr.f32.gmra.mrb[0].mxu0 %v873
    %v950 = vpop.f32.mrb[0].mxu0
    %v951 = vadd.f32 0.0, %v950
    %v952 = vpop.f32.mrb[0].mxu0
    %v953 = vadd.f32 0.0, %v952
    %954 = vmatprep.mubr.f32.mxu0 0.0
    %955 = vmatmul.mubr.f32.gmra.mrb[0].mxu0 %v876
    %v956 = vpop.f32.mrb[0].mxu0
    %v957 = vadd.f32 0.0, %v956
    %v958 = vpop.f32.mrb[0].mxu0
    %v959 = vadd.f32 0.0, %v958
    %960 = vmatprep.mubr.f32.mxu0 0.0
    %961 = vmatmul.mubr.f32.gmra.mrb[0].mxu0 %v879
    %v962 = vpop.f32.mrb[0].mxu0
    %v963 = vadd.f32 0.0, %v962
    %v964 = vpop.f32.mrb[0].mxu0
    %v965 = vadd.f32 0.0, %v964
    %966 = vmatprep.mubr.f32.mxu0 0.0
    %967 = vmatmul.mubr.f32.gmra.mrb[0].mxu0 %v882
    %v968 = vpop.f32.mrb[0].mxu0
    %v969 = vadd.f32 0.0, %v968
    %v970 = vpop.f32.mrb[0].mxu0
    %v971 = vadd.f32 0.0, %v970
    %972 = vdwg.mxu0
    %s973 = sld [smem:[#allocation2 + $0x4]]
    %vm974 = vcmp.ge.f32.partialorder %v951, 0.0
    %vm975 = vcmp.ge.f32.partialorder %v953, 0.0
    %vm976 = vcmp.ge.f32.partialorder %v957, 0.0
    %vm977 = vcmp.ge.f32.partialorder %v959, 0.0
    %vm978 = vcmp.ge.f32.partialorder %v963, 0.0
    %vm979 = vcmp.ge.f32.partialorder %v965, 0.0
    %vm980 = vcmp.ge.f32.partialorder %v969, 0.0
    %vm981 = vcmp.ge.f32.partialorder %v971, 0.0
    %v982 = vstv %s973
    %v983 = vmul.f32 %v982, %v951
    %v984 = vmul.f32 %v982, %v953
    %v985 = vmul.f32 %v982, %v957
    %v986 = vmul.f32 %v982, %v959
    %v987 = vmul.f32 %v982, %v963
    %v988 = vmul.f32 %v982, %v965
    %v989 = vmul.f32 %v982, %v969
    %v990 = vmul.f32 %v982, %v971
    %v991 = vsel %vm974, %v951, %v983
    %v992 = vsel %vm975, %v953, %v984
    %v993 = vsel %vm976, %v957, %v985
    %v994 = vsel %vm977, %v959, %v986
    %v995 = vsel %vm978, %v963, %v987
    %v996 = vsel %vm979, %v965, %v988
    %v997 = vsel %vm980, %v969, %v989
    %v998 = vsel %vm981, %v971, %v990
    %v999 = vsel %vm786, %v991, 0.0
    %v1000 = vsel %vm787, %v992, 0.0
    %v1001 = vsel %vm786, %v993, 0.0
    %v1002 = vsel %vm787, %v994, 0.0
    %v1003 = vsel %vm786, %v995, 0.0
    %v1004 = vsel %vm787, %v996, 0.0
    %v1005 = vsel %vm786, %v997, 0.0
    %v1006 = vsel %vm787, %v998, 0.0
    %v1007 = vld [vmem:[%s1 + $0x80] sm:$0xff]
    %v1008 = vld [vmem:[%s1 + $0x88] sm:$0xff]
    %v1009 = vld [vmem:[%s1 + $0x90] sm:$0xff]
    %v1010 = vld [vmem:[%s1 + $0x98] sm:$0xff]
    %1019 = vrot.lane.b32.xlu0 %v999, 1
    %v1020 = vpop.permute.xlu0 %1019
    %1021 = vrot.lane.b32.xlu0 %v1000, 1
    %v1022 = vpop.permute.xlu0 %1021
    %1023 = vrot.lane.b32.xlu0 %v1001, 1
    %v1024 = vpop.permute.xlu0 %1023
    %1025 = vrot.lane.b32.xlu0 %v1002, 1
    %v1026 = vpop.permute.xlu0 %1025
    %1027 = vrot.lane.b32.xlu0 %v1003, 1
    %v1028 = vpop.permute.xlu0 %1027
    %1029 = vrot.lane.b32.xlu0 %v1004, 1
    %v1030 = vpop.permute.xlu0 %1029
    %1031 = vrot.lane.b32.xlu0 %v1005, 1
    %v1032 = vpop.permute.xlu0 %1031
    %1033 = vrot.lane.b32.xlu0 %v1006, 1
    %v1034 = vpop.permute.xlu0 %1033
    %v1035 = vsel %vm55, %v1020, %v1022
    %v1036 = vsel %vm55, %v1024, %v1026
    %v1037 = vsel %vm55, %v1028, %v1030
    %v1038 = vsel %vm55, %v1032, %v1034
    %v1047 = vsel %vm55, 0.0, %v1020
    %v1048 = vsel %vm55, 0.0, %v1024
    %v1049 = vsel %vm55, 0.0, %v1028
    %v1050 = vsel %vm55, 0.0, %v1032
    %1051 = vrot.lane.b32.xlu0 %v999, 127
    %v1052 = vpop.permute.xlu0 %1051
    %1053 = vrot.lane.b32.xlu0 %v1000, 127
    %v1054 = vpop.permute.xlu0 %1053
    %1055 = vrot.lane.b32.xlu0 %v1001, 127
    %v1056 = vpop.permute.xlu0 %1055
    %1057 = vrot.lane.b32.xlu0 %v1002, 127
    %v1058 = vpop.permute.xlu0 %1057
    %1059 = vrot.lane.b32.xlu0 %v1003, 127
    %v1060 = vpop.permute.xlu0 %1059
    %1061 = vrot.lane.b32.xlu0 %v1004, 127
    %v1062 = vpop.permute.xlu0 %1061
    %1063 = vrot.lane.b32.xlu0 %v1005, 127
    %v1064 = vpop.permute.xlu0 %1063
    %1065 = vrot.lane.b32.xlu0 %v1006, 127
    %v1066 = vpop.permute.xlu0 %1065
    %v1067 = vsel %vm104, %v1052, %v1054
    %v1068 = vsel %vm104, %v1056, %v1058
    %v1069 = vsel %vm104, %v1060, %v1062
    %v1070 = vsel %vm104, %v1064, %v1066
    %v1079 = vsel %vm104, %v1054, 0.0
    %v1080 = vsel %vm104, %v1058, 0.0
    %v1081 = vsel %vm104, %v1062, 0.0
    %v1082 = vsel %vm104, %v1066, 0.0
    %v1084 = vsel %vm598, %v1007, 0
    %v1087 = vsel %vm598, %v1008, 0
    %v1090 = vsel %vm598, %v1009, 0
    %v1093 = vsel %vm598, %v1010, 0
    %1095 = vmatprep.subr.mxu0 %v1035
    %1096 = vmatpush1.msra.mxu0 %v1047
    %1097 = vmatprep.subr.mxu0 %v1036
    %1098 = vmatpush1.msra.mxu0 %v1048
    %1099 = vmatprep.subr.mxu0 %v1037
    %1100 = vmatpush1.msra.mxu0 %v1049
    %1101 = vmatprep.subr.mxu0 %v1038
    %1102 = vmatpush1.msra.mxu0 %v1050
    %1103 = vmatprep.subr.mxu0 %v1000
    %1104 = vmatpush1.msra.mxu0 %v999
    %1105 = vmatprep.subr.mxu0 %v1002
    %1106 = vmatpush1.msra.mxu0 %v1001
    %1107 = vmatprep.subr.mxu0 %v1004
    %1108 = vmatpush1.msra.mxu0 %v1003
    %1109 = vmatprep.subr.mxu0 %v1006
    %1110 = vmatpush1.msra.mxu0 %v1005
    %1111 = vmatprep.subr.mxu0 %v1079
    %1112 = vmatpush1.msra.mxu0 %v1067
    %1113 = vmatprep.subr.mxu0 %v1080
    %1114 = vmatpush1.msra.mxu0 %v1068
    %1115 = vmatprep.subr.mxu0 %v1081
    %1116 = vmatpush1.msra.mxu0 %v1069
    %1117 = vmatprep.subr.mxu0 %v1082
    %1118 = vmatpush1.msra.mxu0 %v1070
    %1119 = vmatprep.subr.mxu0 %v216
    %1120 = vmatpush1.msra.mxu0 %v216
    %1121 = vmatprep.subr.mxu0 0.0
    %1122 = vmatpush1.msra.mxu0 0.0
    %1123 = vmatprep.subr.mxu0 0.0
    %1124 = vmatpush1.msra.mxu0 0.0
    %1125 = vmatprep.subr.mxu0 0.0
    %1126 = vmatpush1.msra.mxu0 0.0
    %1127 = vmatprep.subr.mxu0 0.0
    %1128 = vmatpush1.msra.mxu0 0.0
    %1129 = vmatprep.subr.mxu0 0.0
    %1130 = vmatpush1.msra.mxu0 0.0
    %1131 = vmatprep.subr.mxu0 0.0
    %1132 = vmatpush1.msra.mxu0 0.0
    %1133 = vmatprep.subr.mxu0 0.0
    %1134 = vmatpush1.msra.mxu0 0.0
    %1135 = vmatprep.subr.mxu0 0.0
    %1136 = vmatpush1.msra.mxu0 0.0
    %1137 = vmatprep.subr.mxu0 0.0
    %1138 = vmatpush1.msra.mxu0 0.0
    %1139 = vmatprep.subr.mxu0 0.0
    %1140 = vmatpush1.msra.mxu0 0.0
    %1141 = vmatprep.subr.mxu0 0.0
    %1142 = vmatpush1.msra.mxu0 0.0
    %1143 = vmatprep.subr.mxu0 0.0
    %1144 = vmatpush1.msra.mxu0 0.0
    %1145 = vmatprep.subr.mxu0 0.0
    %1146 = vmatpush1.msra.mxu0 0.0
    %1147 = vmatprep.subr.mxu0 0.0
    %1148 = vmatpush1.msra.mxu0 0.0
    %1149 = vmatprep.subr.mxu0 0.0
    %1150 = vmatpush1.msra.mxu0 0.0
    %1151 = vmatprep.subr.mxu0 0.0
    %1152 = vmatpush1.msra.mxu0 0.0
    %1153 = vmatprep.subr.mxu0 0.0
    %1154 = vmatpush1.msra.mxu0 0.0
    %1155 = vmatprep.subr.mxu0 0.0
    %1156 = vmatpush1.msra.mxu0 0.0
    %1157 = vmatprep.subr.mxu0 0.0
    %1158 = vmatpush1.msra.mxu0 0.0
    %1159 = vmatprep.mubr.f32.mxu0 0.0
    %1160 = vmatmul.mubr.f32.gmra.mrb[0].mxu0 %v1084
    %v1161 = vpop.f32.mrb[0].mxu0
    %v1162 = vadd.f32 0.0, %v1161
    %v1163 = vpop.f32.mrb[0].mxu0
    %v1164 = vadd.f32 0.0, %v1163
    %1165 = vmatprep.mubr.f32.mxu0 0.0
    %1166 = vmatmul.mubr.f32.gmra.mrb[0].mxu0 %v1087
    %v1167 = vpop.f32.mrb[0].mxu0
    %v1168 = vadd.f32 0.0, %v1167
    %v1169 = vpop.f32.mrb[0].mxu0
    %v1170 = vadd.f32 0.0, %v1169
    %1171 = vmatprep.mubr.f32.mxu0 0.0
    %1172 = vmatmul.mubr.f32.gmra.mrb[0].mxu0 %v1090
    %v1173 = vpop.f32.mrb[0].mxu0
    %v1174 = vadd.f32 0.0, %v1173
    %v1175 = vpop.f32.mrb[0].mxu0
    %v1176 = vadd.f32 0.0, %v1175
    %1177 = vmatprep.mubr.f32.mxu0 0.0
    %1178 = vmatmul.mubr.f32.gmra.mrb[0].mxu0 %v1093
    %v1179 = vpop.f32.mrb[0].mxu0
    %v1180 = vadd.f32 0.0, %v1179
    %v1181 = vpop.f32.mrb[0].mxu0
    %v1182 = vadd.f32 0.0, %v1181
    %1183 = vdwg.mxu0
    %s1184 = sld [smem:[#allocation2 + $0x5]]
    %vm1185 = vcmp.ge.f32.partialorder %v1162, 0.0
    %vm1186 = vcmp.ge.f32.partialorder %v1164, 0.0
    %vm1187 = vcmp.ge.f32.partialorder %v1168, 0.0
    %vm1188 = vcmp.ge.f32.partialorder %v1170, 0.0
    %vm1189 = vcmp.ge.f32.partialorder %v1174, 0.0
    %vm1190 = vcmp.ge.f32.partialorder %v1176, 0.0
    %vm1191 = vcmp.ge.f32.partialorder %v1180, 0.0
    %vm1192 = vcmp.ge.f32.partialorder %v1182, 0.0
    %v1193 = vstv %s1184
    %v1194 = vmul.f32 %v1193, %v1162
    %v1195 = vmul.f32 %v1193, %v1164
    %v1196 = vmul.f32 %v1193, %v1168
    %v1197 = vmul.f32 %v1193, %v1170
    %v1198 = vmul.f32 %v1193, %v1174
    %v1199 = vmul.f32 %v1193, %v1176
    %v1200 = vmul.f32 %v1193, %v1180
    %v1201 = vmul.f32 %v1193, %v1182
    %v1202 = vsel %vm1185, %v1162, %v1194
    %v1203 = vsel %vm1186, %v1164, %v1195
    %v1204 = vsel %vm1187, %v1168, %v1196
    %v1205 = vsel %vm1188, %v1170, %v1197
    %v1206 = vsel %vm1189, %v1174, %v1198
    %v1207 = vsel %vm1190, %v1176, %v1199
    %v1208 = vsel %vm1191, %v1180, %v1200
    %v1209 = vsel %vm1192, %v1182, %v1201
    %v1210 = vsel %vm786, %v1202, 0.0
    %v1211 = vsel %vm787, %v1203, 0.0
    %v1212 = vsel %vm786, %v1204, 0.0
    %v1213 = vsel %vm787, %v1205, 0.0
    %v1214 = vsel %vm786, %v1206, 0.0
    %v1215 = vsel %vm787, %v1207, 0.0
    %v1216 = vsel %vm786, %v1208, 0.0
    %v1217 = vsel %vm787, %v1209, 0.0
    %1226 = vrot.lane.b32.xlu0 %v1210, 127
    %v1227 = vpop.permute.xlu0 %1226
    %1228 = vrot.lane.b32.xlu0 %v1211, 127
    %v1229 = vpop.permute.xlu0 %1228
    %1230 = vrot.lane.b32.xlu0 %v1212, 127
    %v1231 = vpop.permute.xlu0 %1230
    %1232 = vrot.lane.b32.xlu0 %v1213, 127
    %v1233 = vpop.permute.xlu0 %1232
    %1234 = vrot.lane.b32.xlu0 %v1214, 127
    %v1235 = vpop.permute.xlu0 %1234
    %1236 = vrot.lane.b32.xlu0 %v1215, 127
    %v1237 = vpop.permute.xlu0 %1236
    %1238 = vrot.lane.b32.xlu0 %v1216, 127
    %v1239 = vpop.permute.xlu0 %1238
    %1240 = vrot.lane.b32.xlu0 %v1217, 127
    %v1241 = vpop.permute.xlu0 %1240
    %v1242 = vsel %vm104, %v1227, %v1229
    %v1243 = vsel %vm104, %v1231, %v1233
    %v1244 = vsel %vm104, %v1235, %v1237
    %v1245 = vsel %vm104, %v1239, %v1241
    %v1254 = vsel %vm104, %v1229, 0.0
    %v1255 = vsel %vm104, %v1233, 0.0
    %v1256 = vsel %vm104, %v1237, 0.0
    %v1257 = vsel %vm104, %v1241, 0.0
    %v1258 = vmax.f32 %v1210, %v1242
    %v1259 = vmax.f32 %v1211, %v1254
    %v1260 = vmax.f32 %v1212, %v1243
    %v1261 = vmax.f32 %v1213, %v1255
    %v1262 = vmax.f32 %v1214, %v1244
    %v1263 = vmax.f32 %v1215, %v1256
    %v1264 = vmax.f32 %v1216, %v1245
    %v1265 = vmax.f32 %v1217, %v1257
    %vm1266 = vcmp.lt.s32.totalorder %v38, 70
    %vm1267 = vcmp.lt.s32.totalorder %v39, 70
    %v1268 = vsel %vm1266, 1, 0
    %v1269 = vsel %vm1267, 1, 0
    %vm1270 = vcmp.eq.s32.totalorder %v1268, 1
    %vm1271 = vcmp.eq.s32.totalorder %v1269, 1
    %v1272 = vsel %vm1270, %v1258, 0.0
    %v1273 = vsel %vm1271, %v1259, 0.0
    %v1274 = vsel %vm1270, %v1260, 0.0
    %v1275 = vsel %vm1271, %v1261, 0.0
    %v1276 = vsel %vm1270, %v1262, 0.0
    %v1277 = vsel %vm1271, %v1263, 0.0
    %v1278 = vsel %vm1270, %v1264, 0.0
    %v1279 = vsel %vm1271, %v1265, 0.0
    %v1280 = vld [vmem:[%s1 + $0xa0] sm:$0xf]
    %vm1281 = vcmask 269312
    %v1283 = vsel %vm1281, %v1280, 0
    %1285 = vmatprep.subr.mxu0 %v1273
    %1286 = vmatpush1.msra.mxu0 %v1272
    %1287 = vmatprep.subr.mxu0 %v1275
    %1288 = vmatpush1.msra.mxu0 %v1274
    %1289 = vmatprep.subr.mxu0 %v1277
    %1290 = vmatpush1.msra.mxu0 %v1276
    %1291 = vmatprep.subr.mxu0 %v1279
    %1292 = vmatpush1.msra.mxu0 %v1278
    %1293 = vmatprep.subr.mxu0 %v216
    %1294 = vmatpush1.msra.mxu0 %v216
    %1295 = vmatprep.subr.mxu0 0.0
    %1296 = vmatpush1.msra.mxu0 0.0
    %1297 = vmatprep.subr.mxu0 0.0
    %1298 = vmatpush1.msra.mxu0 0.0
    %1299 = vmatprep.subr.mxu0 0.0
    %1300 = vmatpush1.msra.mxu0 0.0
    %1301 = vmatprep.subr.mxu0 0.0
    %1302 = vmatpush1.msra.mxu0 0.0
    %1303 = vmatprep.subr.mxu0 0.0
    %1304 = vmatpush1.msra.mxu0 0.0
    %1305 = vmatprep.subr.mxu0 0.0
    %1306 = vmatpush1.msra.mxu0 0.0
    %1307 = vmatprep.subr.mxu0 0.0
    %1308 = vmatpush1.msra.mxu0 0.0
    %1309 = vmatprep.subr.mxu0 0.0
    %1310 = vmatpush1.msra.mxu0 0.0
    %1311 = vmatprep.subr.mxu0 0.0
    %1312 = vmatpush1.msra.mxu0 0.0
    %1313 = vmatprep.subr.mxu0 0.0
    %1314 = vmatpush1.msra.mxu0 0.0
    %1315 = vmatprep.subr.mxu0 0.0
    %1316 = vmatpush1.msra.mxu0 0.0
    %1317 = vmatprep.subr.mxu0 0.0
    %1318 = vmatpush1.msra.mxu0 0.0
    %1319 = vmatprep.subr.mxu0 0.0
    %1320 = vmatpush1.msra.mxu0 0.0
    %1321 = vmatprep.subr.mxu0 0.0
    %1322 = vmatpush1.msra.mxu0 0.0
    %1323 = vmatprep.subr.mxu0 0.0
    %1324 = vmatpush1.msra.mxu0 0.0
    %1325 = vmatprep.subr.mxu0 0.0
    %1326 = vmatpush1.msra.mxu0 0.0
    %1327 = vmatprep.subr.mxu0 0.0
    %1328 = vmatpush1.msra.mxu0 0.0
    %1329 = vmatprep.subr.mxu0 0.0
    %1330 = vmatpush1.msra.mxu0 0.0
    %1331 = vmatprep.subr.mxu0 0.0
    %1332 = vmatpush1.msra.mxu0 0.0
    %1333 = vmatprep.subr.mxu0 0.0
    %1334 = vmatpush1.msra.mxu0 0.0
    %1335 = vmatprep.subr.mxu0 0.0
    %1336 = vmatpush1.msra.mxu0 0.0
    %1337 = vmatprep.subr.mxu0 0.0
    %1338 = vmatpush1.msra.mxu0 0.0
    %1339 = vmatprep.subr.mxu0 0.0
    %1340 = vmatpush1.msra.mxu0 0.0
    %1341 = vmatprep.subr.mxu0 0.0
    %1342 = vmatpush1.msra.mxu0 0.0
    %1343 = vmatprep.subr.mxu0 0.0
    %1344 = vmatpush1.msra.mxu0 0.0
    %1345 = vmatprep.subr.mxu0 0.0
    %1346 = vmatpush1.msra.mxu0 0.0
    %1347 = vmatprep.subr.mxu0 0.0
    %1348 = vmatpush1.msra.mxu0 0.0
    %1349 = vmatprep.mubr.f32.mxu0 0.0
    %1350 = vmatmul.mubr.f32.gmra.mrb[0].mxu0 %v1283
    %v1351 = vpop.f32.mrb[0].mxu0
    %v1352 = vadd.f32 0.0, %v1351
    %v1353 = vpop.f32.mrb[0].mxu0
    %v1354 = vadd.f32 0.0, %v1353
    %1355 = vdwg.mxu0
    %s1356 = sld [smem:[#allocation2 + $0x6]]
    %vm1357 = vcmp.ge.f32.partialorder %v1352, 0.0
    %vm1358 = vcmp.ge.f32.partialorder %v1354, 0.0
    %v1359 = vstv %s1356
    %v1360 = vmul.f32 %v1359, %v1352
    %v1361 = vmul.f32 %v1359, %v1354
    %v1362 = vsel %vm1357, %v1352, %v1360
    %v1363 = vsel %vm1358, %v1354, %v1361
    %v1364 = vsel %vm1270, %v1362, 0.0
    %v1365 = vsel %vm1271, %v1363, 0.0
    %v1366 = vld [vmem:[%s1 + $0xe8] sm:$0xff]
    %1375 = vrot.lane.b32.xlu0 %v1272, 1
    %v1376 = vpop.permute.xlu0 %1375
    %1377 = vrot.lane.b32.xlu0 %v1273, 1
    %v1378 = vpop.permute.xlu0 %1377
    %1379 = vrot.lane.b32.xlu0 %v1274, 1
    %v1380 = vpop.permute.xlu0 %1379
    %1381 = vrot.lane.b32.xlu0 %v1275, 1
    %v1382 = vpop.permute.xlu0 %1381
    %1383 = vrot.lane.b32.xlu0 %v1276, 1
    %v1384 = vpop.permute.xlu0 %1383
    %1385 = vrot.lane.b32.xlu0 %v1277, 1
    %v1386 = vpop.permute.xlu0 %1385
    %1387 = vrot.lane.b32.xlu0 %v1278, 1
    %v1388 = vpop.permute.xlu0 %1387
    %1389 = vrot.lane.b32.xlu0 %v1279, 1
    %v1390 = vpop.permute.xlu0 %1389
    %v1391 = vsel %vm55, %v1376, %v1378
    %v1392 = vsel %vm55, %v1380, %v1382
    %v1393 = vsel %vm55, %v1384, %v1386
    %v1394 = vsel %vm55, %v1388, %v1390
    %v1403 = vsel %vm55, 0.0, %v1376
    %v1404 = vsel %vm55, 0.0, %v1380
    %v1405 = vsel %vm55, 0.0, %v1384
    %v1406 = vsel %vm55, 0.0, %v1388
    %1407 = vrot.lane.b32.xlu0 %v1272, 127
    %v1408 = vpop.permute.xlu0 %1407
    %1409 = vrot.lane.b32.xlu0 %v1273, 127
    %v1410 = vpop.permute.xlu0 %1409
    %1411 = vrot.lane.b32.xlu0 %v1274, 127
    %v1412 = vpop.permute.xlu0 %1411
    %1413 = vrot.lane.b32.xlu0 %v1275, 127
    %v1414 = vpop.permute.xlu0 %1413
    %1415 = vrot.lane.b32.xlu0 %v1276, 127
    %v1416 = vpop.permute.xlu0 %1415
    %1417 = vrot.lane.b32.xlu0 %v1277, 127
    %v1418 = vpop.permute.xlu0 %1417
    %1419 = vrot.lane.b32.xlu0 %v1278, 127
    %v1420 = vpop.permute.xlu0 %1419
    %1421 = vrot.lane.b32.xlu0 %v1279, 127
    %v1422 = vpop.permute.xlu0 %1421
    %v1423 = vsel %vm104, %v1408, %v1410
    %v1424 = vsel %vm104, %v1412, %v1414
    %v1425 = vsel %vm104, %v1416, %v1418
    %v1426 = vsel %vm104, %v1420, %v1422
    %v1435 = vsel %vm104, %v1410, 0.0
    %v1436 = vsel %vm104, %v1414, 0.0
    %v1437 = vsel %vm104, %v1418, 0.0
    %v1438 = vsel %vm104, %v1422, 0.0
    %v1440 = vsel %vm598, %v1366, 0
    %1442 = vmatprep.subr.mxu0 %v1391
    %1443 = vmatpush1.msra.mxu0 %v1403
    %1444 = vmatprep.subr.mxu0 %v1392
    %1445 = vmatpush1.msra.mxu0 %v1404
    %1446 = vmatprep.subr.mxu0 %v1393
    %1447 = vmatpush1.msra.mxu0 %v1405
    %1448 = vmatprep.subr.mxu0 %v1394
    %1449 = vmatpush1.msra.mxu0 %v1406
    %1450 = vmatprep.subr.mxu0 %v1273
    %1451 = vmatpush1.msra.mxu0 %v1272
    %1452 = vmatprep.subr.mxu0 %v1275
    %1453 = vmatpush1.msra.mxu0 %v1274
    %1454 = vmatprep.subr.mxu0 %v1277
    %1455 = vmatpush1.msra.mxu0 %v1276
    %1456 = vmatprep.subr.mxu0 %v1279
    %1457 = vmatpush1.msra.mxu0 %v1278
    %1458 = vmatprep.subr.mxu0 %v1435
    %1459 = vmatpush1.msra.mxu0 %v1423
    %1460 = vmatprep.subr.mxu0 %v1436
    %1461 = vmatpush1.msra.mxu0 %v1424
    %1462 = vmatprep.subr.mxu0 %v1437
    %1463 = vmatpush1.msra.mxu0 %v1425
    %1464 = vmatprep.subr.mxu0 %v1438
    %1465 = vmatpush1.msra.mxu0 %v1426
    %1466 = vmatprep.subr.mxu0 %v216
    %1467 = vmatpush1.msra.mxu0 %v216
    %1468 = vmatprep.subr.mxu0 0.0
    %1469 = vmatpush1.msra.mxu0 0.0
    %1470 = vmatprep.subr.mxu0 0.0
    %1471 = vmatpush1.msra.mxu0 0.0
    %1472 = vmatprep.subr.mxu0 0.0
    %1473 = vmatpush1.msra.mxu0 0.0
    %1474 = vmatprep.subr.mxu0 0.0
    %1475 = vmatpush1.msra.mxu0 0.0
    %1476 = vmatprep.subr.mxu0 0.0
    %1477 = vmatpush1.msra.mxu0 0.0
    %1478 = vmatprep.subr.mxu0 0.0
    %1479 = vmatpush1.msra.mxu0 0.0
    %1480 = vmatprep.subr.mxu0 0.0
    %1481 = vmatpush1.msra.mxu0 0.0
    %1482 = vmatprep.subr.mxu0 0.0
    %1483 = vmatpush1.msra.mxu0 0.0
    %1484 = vmatprep.subr.mxu0 0.0
    %1485 = vmatpush1.msra.mxu0 0.0
    %1486 = vmatprep.subr.mxu0 0.0
    %1487 = vmatpush1.msra.mxu0 0.0
    %1488 = vmatprep.subr.mxu0 0.0
    %1489 = vmatpush1.msra.mxu0 0.0
    %1490 = vmatprep.subr.mxu0 0.0
    %1491 = vmatpush1.msra.mxu0 0.0
    %1492 = vmatprep.subr.mxu0 0.0
    %1493 = vmatpush1.msra.mxu0 0.0
    %1494 = vmatprep.subr.mxu0 0.0
    %1495 = vmatpush1.msra.mxu0 0.0
    %1496 = vmatprep.subr.mxu0 0.0
    %1497 = vmatpush1.msra.mxu0 0.0
    %1498 = vmatprep.subr.mxu0 0.0
    %1499 = vmatpush1.msra.mxu0 0.0
    %1500 = vmatprep.subr.mxu0 0.0
    %1501 = vmatpush1.msra.mxu0 0.0
    %1502 = vmatprep.subr.mxu0 0.0
    %1503 = vmatpush1.msra.mxu0 0.0
    %1504 = vmatprep.subr.mxu0 0.0
    %1505 = vmatpush1.msra.mxu0 0.0
    %1506 = vmatprep.mubr.f32.mxu0 0.0
    %1507 = vmatmul.mubr.f32.gmra.mrb[0].mxu0 %v1440
    %v1508 = vpop.f32.mrb[0].mxu0
    %v1509 = vadd.f32 0.0, %v1508
    %v1510 = vpop.f32.mrb[0].mxu0
    %v1511 = vadd.f32 0.0, %v1510
    %1512 = vdwg.mxu0
    %s1513 = sld [smem:[#allocation2 + $0x9]]
    %vm1514 = vcmp.ge.f32.partialorder %v1509, 0.0
    %vm1515 = vcmp.ge.f32.partialorder %v1511, 0.0
    %v1516 = vstv %s1513
    %v1517 = vmul.f32 %v1516, %v1509
    %v1518 = vmul.f32 %v1516, %v1511
    %v1519 = vsel %vm1514, %v1509, %v1517
    %v1520 = vsel %vm1515, %v1511, %v1518
    %v1521 = vsel %vm1270, %v1519, 0.0
    %v1522 = vsel %vm1271, %v1520, 0.0
    %v1523 = vld [vmem:[%s1 + $0xc0] sm:$0xff]
    %v1525 = vsel %vm598, %v1523, 0
    %1527 = vmatprep.subr.mxu0 %v824
    %1528 = vmatpush1.msra.mxu0 %v836
    %1529 = vmatprep.subr.mxu0 %v825
    %1530 = vmatpush1.msra.mxu0 %v837
    %1531 = vmatprep.subr.mxu0 %v826
    %1532 = vmatpush1.msra.mxu0 %v838
    %1533 = vmatprep.subr.mxu0 %v827
    %1534 = vmatpush1.msra.mxu0 %v839
    %1535 = vmatprep.subr.mxu0 %v789
    %1536 = vmatpush1.msra.mxu0 %v788
    %1537 = vmatprep.subr.mxu0 %v791
    %1538 = vmatpush1.msra.mxu0 %v790
    %1539 = vmatprep.subr.mxu0 %v793
    %1540 = vmatpush1.msra.mxu0 %v792
    %1541 = vmatprep.subr.mxu0 %v795
    %1542 = vmatpush1.msra.mxu0 %v794
    %1543 = vmatprep.subr.mxu0 %v868
    %1544 = vmatpush1.msra.mxu0 %v856
    %1545 = vmatprep.subr.mxu0 %v869
    %1546 = vmatpush1.msra.mxu0 %v857
    %1547 = vmatprep.subr.mxu0 %v870
    %1548 = vmatpush1.msra.mxu0 %v858
    %1549 = vmatprep.subr.mxu0 %v871
    %1550 = vmatpush1.msra.mxu0 %v859
    %1551 = vmatprep.subr.mxu0 %v216
    %1552 = vmatpush1.msra.mxu0 %v216
    %1553 = vmatprep.subr.mxu0 0.0
    %1554 = vmatpush1.msra.mxu0 0.0
    %1555 = vmatprep.subr.mxu0 0.0
    %1556 = vmatpush1.msra.mxu0 0.0
    %1557 = vmatprep.subr.mxu0 0.0
    %1558 = vmatpush1.msra.mxu0 0.0
    %1559 = vmatprep.subr.mxu0 0.0
    %1560 = vmatpush1.msra.mxu0 0.0
    %1561 = vmatprep.subr.mxu0 0.0
    %1562 = vmatpush1.msra.mxu0 0.0
    %1563 = vmatprep.subr.mxu0 0.0
    %1564 = vmatpush1.msra.mxu0 0.0
    %1565 = vmatprep.subr.mxu0 0.0
    %1566 = vmatpush1.msra.mxu0 0.0
    %1567 = vmatprep.subr.mxu0 0.0
    %1568 = vmatpush1.msra.mxu0 0.0
    %1569 = vmatprep.subr.mxu0 0.0
    %1570 = vmatpush1.msra.mxu0 0.0
    %1571 = vmatprep.subr.mxu0 0.0
    %1572 = vmatpush1.msra.mxu0 0.0
    %1573 = vmatprep.subr.mxu0 0.0
    %1574 = vmatpush1.msra.mxu0 0.0
    %1575 = vmatprep.subr.mxu0 0.0
    %1576 = vmatpush1.msra.mxu0 0.0
    %1577 = vmatprep.subr.mxu0 0.0
    %1578 = vmatpush1.msra.mxu0 0.0
    %1579 = vmatprep.subr.mxu0 0.0
    %1580 = vmatpush1.msra.mxu0 0.0
    %1581 = vmatprep.subr.mxu0 0.0
    %1582 = vmatpush1.msra.mxu0 0.0
    %1583 = vmatprep.subr.mxu0 0.0
    %1584 = vmatpush1.msra.mxu0 0.0
    %1585 = vmatprep.subr.mxu0 0.0
    %1586 = vmatpush1.msra.mxu0 0.0
    %1587 = vmatprep.subr.mxu0 0.0
    %1588 = vmatpush1.msra.mxu0 0.0
    %1589 = vmatprep.subr.mxu0 0.0
    %1590 = vmatpush1.msra.mxu0 0.0
    %1591 = vmatprep.mubr.f32.mxu0 0.0
    %1592 = vmatmul.mubr.f32.gmra.mrb[0].mxu0 %v1525
    %v1593 = vpop.f32.mrb[0].mxu0
    %v1594 = vadd.f32 0.0, %v1593
    %v1595 = vpop.f32.mrb[0].mxu0
    %v1596 = vadd.f32 0.0, %v1595
    %1597 = vdwg.mxu0
    %s1598 = sld [smem:[#allocation2 + $0x8]]
    %vm1599 = vcmp.ge.f32.partialorder %v1594, 0.0
    %vm1600 = vcmp.ge.f32.partialorder %v1596, 0.0
    %v1601 = vstv %s1598
    %v1602 = vmul.f32 %v1601, %v1594
    %v1603 = vmul.f32 %v1601, %v1596
    %v1604 = vsel %vm1599, %v1594, %v1602
    %v1605 = vsel %vm1600, %v1596, %v1603
    %v1606 = vsel %vm786, %v1604, 0.0
    %v1607 = vsel %vm787, %v1605, 0.0
    %v1608 = vld [vmem:[%s1 + $0xa8] sm:$0x1]
    %v1610 = vsel %vm207, %v1608, 0
    %1612 = vmatprep.subr.mxu0 %v363
    %1613 = vmatpush1.msra.mxu0 %v369
    %1614 = vmatprep.subr.mxu0 %v364
    %1615 = vmatpush1.msra.mxu0 %v370
    %1616 = vmatprep.subr.mxu0 %v344
    %1617 = vmatpush1.msra.mxu0 %v343
    %1618 = vmatprep.subr.mxu0 %v346
    %1619 = vmatpush1.msra.mxu0 %v345
    %1620 = vmatprep.subr.mxu0 %v385
    %1621 = vmatpush1.msra.mxu0 %v379
    %1622 = vmatprep.subr.mxu0 %v386
    %1623 = vmatpush1.msra.mxu0 %v380
    %1624 = vmatprep.subr.mxu0 %v216
    %1625 = vmatpush1.msra.mxu0 %v216
    %1626 = vmatprep.subr.mxu0 0.0
    %1627 = vmatpush1.msra.mxu0 0.0
    %1628 = vmatprep.subr.mxu0 0.0
    %1629 = vmatpush1.msra.mxu0 0.0
    %1630 = vmatprep.subr.mxu0 0.0
    %1631 = vmatpush1.msra.mxu0 0.0
    %1632 = vmatprep.subr.mxu0 0.0
    %1633 = vmatpush1.msra.mxu0 0.0
    %1634 = vmatprep.subr.mxu0 0.0
    %1635 = vmatpush1.msra.mxu0 0.0
    %1636 = vmatprep.subr.mxu0 0.0
    %1637 = vmatpush1.msra.mxu0 0.0
    %1638 = vmatprep.subr.mxu0 0.0
    %1639 = vmatpush1.msra.mxu0 0.0
    %1640 = vmatprep.subr.mxu0 0.0
    %1641 = vmatpush1.msra.mxu0 0.0
    %1642 = vmatprep.subr.mxu0 0.0
    %1643 = vmatpush1.msra.mxu0 0.0
    %1644 = vmatprep.subr.mxu0 0.0
    %1645 = vmatpush1.msra.mxu0 0.0
    %1646 = vmatprep.subr.mxu0 0.0
    %1647 = vmatpush1.msra.mxu0 0.0
    %1648 = vmatprep.subr.mxu0 0.0
    %1649 = vmatpush1.msra.mxu0 0.0
    %1650 = vmatprep.subr.mxu0 0.0
    %1651 = vmatpush1.msra.mxu0 0.0
    %1652 = vmatprep.subr.mxu0 0.0
    %1653 = vmatpush1.msra.mxu0 0.0
    %1654 = vmatprep.subr.mxu0 0.0
    %1655 = vmatpush1.msra.mxu0 0.0
    %1656 = vmatprep.subr.mxu0 0.0
    %1657 = vmatpush1.msra.mxu0 0.0
    %1658 = vmatprep.subr.mxu0 0.0
    %1659 = vmatpush1.msra.mxu0 0.0
    %1660 = vmatprep.subr.mxu0 0.0
    %1661 = vmatpush1.msra.mxu0 0.0
    %1662 = vmatprep.subr.mxu0 0.0
    %1663 = vmatpush1.msra.mxu0 0.0
    %1664 = vmatprep.subr.mxu0 0.0
    %1665 = vmatpush1.msra.mxu0 0.0
    %1666 = vmatprep.subr.mxu0 0.0
    %1667 = vmatpush1.msra.mxu0 0.0
    %1668 = vmatprep.subr.mxu0 0.0
    %1669 = vmatpush1.msra.mxu0 0.0
    %1670 = vmatprep.subr.mxu0 0.0
    %1671 = vmatpush1.msra.mxu0 0.0
    %1672 = vmatprep.subr.mxu0 0.0
    %1673 = vmatpush1.msra.mxu0 0.0
    %1674 = vmatprep.subr.mxu0 0.0
    %1675 = vmatpush1.msra.mxu0 0.0
    %1676 = vmatprep.mubr.f32.mxu0 0.0
    %1677 = vmatmul.mubr.f32.gmra.mrb[0].mxu0 %v1610
    %v1678 = vpop.f32.mrb[0].mxu0
    %v1679 = vadd.f32 0.0, %v1678
    %v1680 = vpop.f32.mrb[0].mxu0
    %v1681 = vadd.f32 0.0, %v1680
    %1682 = vdwg.mxu0
    %s1683 = sld [smem:[#allocation2 + $0x7]]
    %vm1684 = vcmp.ge.f32.partialorder %v1679, 0.0
    %vm1685 = vcmp.ge.f32.partialorder %v1681, 0.0
    %v1686 = vstv %s1683
    %v1687 = vmul.f32 %v1686, %v1679
    %v1688 = vmul.f32 %v1686, %v1681
    %v1689 = vsel %vm1684, %v1679, %v1687
    %v1690 = vsel %vm1685, %v1681, %v1688
    %v1691 = vsel %vm337, %v1689, 0.0
    %v1692 = vsel %vm338, %v1690, 0.0
    %v1693 = vld [vmem:[%s1 + $0xf0] sm:$0xff]
    %v1694 = vld [vmem:[%s1 + $0xf8] sm:$0xff]
    %v1695 = vld [vmem:[%s1 + $0x100] sm:$0xff]
    %v1696 = vld [vmem:[%s1 + $0x108] sm:$0xff]
    %1699 = vrot.lane.b32.xlu0 %v1521, 1
    %v1700 = vpop.permute.xlu0 %1699
    %1701 = vrot.lane.b32.xlu0 %v1522, 1
    %v1702 = vpop.permute.xlu0 %1701
    %v1703 = vsel %vm55, %v1700, %v1702
    %v1706 = vsel %vm55, 0.0, %v1700
    %1707 = vrot.lane.b32.xlu0 %v1521, 127
    %v1708 = vpop.permute.xlu0 %1707
    %1709 = vrot.lane.b32.xlu0 %v1522, 127
    %v1710 = vpop.permute.xlu0 %1709
    %v1711 = vsel %vm104, %v1708, %v1710
    %v1714 = vsel %vm104, %v1710, 0.0
    %vm1715 = vcmask 203776
    %v1717 = vsel %vm1715, %v1693, 0
    %v1720 = vsel %vm1715, %v1694, 0
    %v1723 = vsel %vm1715, %v1695, 0
    %v1726 = vsel %vm1715, %v1696, 0
    %1728 = vmatprep.subr.mxu0 %v1703
    %1729 = vmatpush1.msra.mxu0 %v1706
    %1730 = vmatprep.subr.mxu0 %v1522
    %1731 = vmatpush1.msra.mxu0 %v1521
    %1732 = vmatprep.subr.mxu0 %v1714
    %1733 = vmatpush1.msra.mxu0 %v1711
    %1734 = vmatprep.subr.mxu0 %v216
    %1735 = vmatpush1.msra.mxu0 %v216
    %1736 = vmatprep.subr.mxu0 0.0
    %1737 = vmatpush1.msra.mxu0 0.0
    %1738 = vmatprep.subr.mxu0 0.0
    %1739 = vmatpush1.msra.mxu0 0.0
    %1740 = vmatprep.subr.mxu0 0.0
    %1741 = vmatpush1.msra.mxu0 0.0
    %1742 = vmatprep.subr.mxu0 0.0
    %1743 = vmatpush1.msra.mxu0 0.0
    %1744 = vmatprep.subr.mxu0 0.0
    %1745 = vmatpush1.msra.mxu0 0.0
    %1746 = vmatprep.subr.mxu0 0.0
    %1747 = vmatpush1.msra.mxu0 0.0
    %1748 = vmatprep.subr.mxu0 0.0
    %1749 = vmatpush1.msra.mxu0 0.0
    %1750 = vmatprep.subr.mxu0 0.0
    %1751 = vmatpush1.msra.mxu0 0.0
    %1752 = vmatprep.subr.mxu0 0.0
    %1753 = vmatpush1.msra.mxu0 0.0
    %1754 = vmatprep.subr.mxu0 0.0
    %1755 = vmatpush1.msra.mxu0 0.0
    %1756 = vmatprep.subr.mxu0 0.0
    %1757 = vmatpush1.msra.mxu0 0.0
    %1758 = vmatprep.subr.mxu0 0.0
    %1759 = vmatpush1.msra.mxu0 0.0
    %1760 = vmatprep.subr.mxu0 0.0
    %1761 = vmatpush1.msra.mxu0 0.0
    %1762 = vmatprep.subr.mxu0 0.0
    %1763 = vmatpush1.msra.mxu0 0.0
    %1764 = vmatprep.subr.mxu0 0.0
    %1765 = vmatpush1.msra.mxu0 0.0
    %1766 = vmatprep.subr.mxu0 0.0
    %1767 = vmatpush1.msra.mxu0 0.0
    %1768 = vmatprep.subr.mxu0 0.0
    %1769 = vmatpush1.msra.mxu0 0.0
    %1770 = vmatprep.subr.mxu0 0.0
    %1771 = vmatpush1.msra.mxu0 0.0
    %1772 = vmatprep.subr.mxu0 0.0
    %1773 = vmatpush1.msra.mxu0 0.0
    %1774 = vmatprep.subr.mxu0 0.0
    %1775 = vmatpush1.msra.mxu0 0.0
    %1776 = vmatprep.subr.mxu0 0.0
    %1777 = vmatpush1.msra.mxu0 0.0
    %1778 = vmatprep.subr.mxu0 0.0
    %1779 = vmatpush1.msra.mxu0 0.0
    %1780 = vmatprep.subr.mxu0 0.0
    %1781 = vmatpush1.msra.mxu0 0.0
    %1782 = vmatprep.subr.mxu0 0.0
    %1783 = vmatpush1.msra.mxu0 0.0
    %1784 = vmatprep.subr.mxu0 0.0
    %1785 = vmatpush1.msra.mxu0 0.0
    %1786 = vmatprep.subr.mxu0 0.0
    %1787 = vmatpush1.msra.mxu0 0.0
    %1788 = vmatprep.subr.mxu0 0.0
    %1789 = vmatpush1.msra.mxu0 0.0
    %1790 = vmatprep.subr.mxu0 0.0
    %1791 = vmatpush1.msra.mxu0 0.0
    %1792 = vmatprep.mubr.f32.mxu0 0.0
    %1793 = vmatmul.mubr.f32.gmra.mrb[0].mxu0 %v1717
    %v1794 = vpop.f32.mrb[0].mxu0
    %v1795 = vadd.f32 0.0, %v1794
    %v1796 = vpop.f32.mrb[0].mxu0
    %v1797 = vadd.f32 0.0, %v1796
    %1798 = vmatprep.mubr.f32.mxu0 0.0
    %1799 = vmatmul.mubr.f32.gmra.mrb[0].mxu0 %v1720
    %v1800 = vpop.f32.mrb[0].mxu0
    %v1801 = vadd.f32 0.0, %v1800
    %v1802 = vpop.f32.mrb[0].mxu0
    %v1803 = vadd.f32 0.0, %v1802
    %1804 = vmatprep.mubr.f32.mxu0 0.0
    %1805 = vmatmul.mubr.f32.gmra.mrb[0].mxu0 %v1723
    %v1806 = vpop.f32.mrb[0].mxu0
    %v1807 = vadd.f32 0.0, %v1806
    %v1808 = vpop.f32.mrb[0].mxu0
    %v1809 = vadd.f32 0.0, %v1808
    %1810 = vmatprep.mubr.f32.mxu0 0.0
    %1811 = vmatmul.mubr.f32.gmra.mrb[0].mxu0 %v1726
    %v1812 = vpop.f32.mrb[0].mxu0
    %v1813 = vadd.f32 0.0, %v1812
    %v1814 = vpop.f32.mrb[0].mxu0
    %v1815 = vadd.f32 0.0, %v1814
    %1816 = vdwg.mxu0
    %v1817 = vsel %vm1270, %v1795, 0.0
    %v1818 = vsel %vm1271, %v1797, 0.0
    %v1819 = vsel %vm1270, %v1801, 0.0
    %v1820 = vsel %vm1271, %v1803, 0.0
    %v1821 = vsel %vm1270, %v1807, 0.0
    %v1822 = vsel %vm1271, %v1809, 0.0
    %v1823 = vsel %vm1270, %v1813, 0.0
    %v1824 = vsel %vm1271, %v1815, 0.0
    %v1825 = vld [vmem:[%s1 + $0xc8] sm:$0xff]
    %v1826 = vld [vmem:[%s1 + $0xd0] sm:$0xff]
    %v1827 = vld [vmem:[%s1 + $0xd8] sm:$0xff]
    %v1828 = vld [vmem:[%s1 + $0xe0] sm:$0xff]
    %1831 = vrot.lane.b32.xlu0 %v1606, 1
    %v1832 = vpop.permute.xlu0 %1831
    %1833 = vrot.lane.b32.xlu0 %v1607, 1
    %v1834 = vpop.permute.xlu0 %1833
    %v1835 = vsel %vm55, %v1832, %v1834
    %v1838 = vsel %vm55, 0.0, %v1832
    %1839 = vrot.lane.b32.xlu0 %v1606, 127
    %v1840 = vpop.permute.xlu0 %1839
    %1841 = vrot.lane.b32.xlu0 %v1607, 127
    %v1842 = vpop.permute.xlu0 %1841
    %v1843 = vsel %vm104, %v1840, %v1842
    %v1846 = vsel %vm104, %v1842, 0.0
    %v1848 = vsel %vm1715, %v1825, 0
    %v1851 = vsel %vm1715, %v1826, 0
    %v1854 = vsel %vm1715, %v1827, 0
    %v1857 = vsel %vm1715, %v1828, 0
    %1859 = vmatprep.subr.mxu0 %v1835
    %1860 = vmatpush1.msra.mxu0 %v1838
    %1861 = vmatprep.subr.mxu0 %v1607
    %1862 = vmatpush1.msra.mxu0 %v1606
    %1863 = vmatprep.subr.mxu0 %v1846
    %1864 = vmatpush1.msra.mxu0 %v1843
    %1865 = vmatprep.subr.mxu0 %v216
    %1866 = vmatpush1.msra.mxu0 %v216
    %1867 = vmatprep.subr.mxu0 0.0
    %1868 = vmatpush1.msra.mxu0 0.0
    %1869 = vmatprep.subr.mxu0 0.0
    %1870 = vmatpush1.msra.mxu0 0.0
    %1871 = vmatprep.subr.mxu0 0.0
    %1872 = vmatpush1.msra.mxu0 0.0
    %1873 = vmatprep.subr.mxu0 0.0
    %1874 = vmatpush1.msra.mxu0 0.0
    %1875 = vmatprep.subr.mxu0 0.0
    %1876 = vmatpush1.msra.mxu0 0.0
    %1877 = vmatprep.subr.mxu0 0.0
    %1878 = vmatpush1.msra.mxu0 0.0
    %1879 = vmatprep.subr.mxu0 0.0
    %1880 = vmatpush1.msra.mxu0 0.0
    %1881 = vmatprep.subr.mxu0 0.0
    %1882 = vmatpush1.msra.mxu0 0.0
    %1883 = vmatprep.subr.mxu0 0.0
    %1884 = vmatpush1.msra.mxu0 0.0
    %1885 = vmatprep.subr.mxu0 0.0
    %1886 = vmatpush1.msra.mxu0 0.0
    %1887 = vmatprep.subr.mxu0 0.0
    %1888 = vmatpush1.msra.mxu0 0.0
    %1889 = vmatprep.subr.mxu0 0.0
    %1890 = vmatpush1.msra.mxu0 0.0
    %1891 = vmatprep.subr.mxu0 0.0
    %1892 = vmatpush1.msra.mxu0 0.0
    %1893 = vmatprep.subr.mxu0 0.0
    %1894 = vmatpush1.msra.mxu0 0.0
    %1895 = vmatprep.subr.mxu0 0.0
    %1896 = vmatpush1.msra.mxu0 0.0
    %1897 = vmatprep.subr.mxu0 0.0
    %1898 = vmatpush1.msra.mxu0 0.0
    %1899 = vmatprep.subr.mxu0 0.0
    %1900 = vmatpush1.msra.mxu0 0.0
    %1901 = vmatprep.subr.mxu0 0.0
    %1902 = vmatpush1.msra.mxu0 0.0
    %1903 = vmatprep.subr.mxu0 0.0
    %1904 = vmatpush1.msra.mxu0 0.0
    %1905 = vmatprep.subr.mxu0 0.0
    %1906 = vmatpush1.msra.mxu0 0.0
    %1907 = vmatprep.subr.mxu0 0.0
    %1908 = vmatpush1.msra.mxu0 0.0
    %1909 = vmatprep.subr.mxu0 0.0
    %1910 = vmatpush1.msra.mxu0 0.0
    %1911 = vmatprep.subr.mxu0 0.0
    %1912 = vmatpush1.msra.mxu0 0.0
    %1913 = vmatprep.subr.mxu0 0.0
    %1914 = vmatpush1.msra.mxu0 0.0
    %1915 = vmatprep.subr.mxu0 0.0
    %1916 = vmatpush1.msra.mxu0 0.0
    %1917 = vmatprep.subr.mxu0 0.0
    %1918 = vmatpush1.msra.mxu0 0.0
    %1919 = vmatprep.subr.mxu0 0.0
    %1920 = vmatpush1.msra.mxu0 0.0
    %1921 = vmatprep.subr.mxu0 0.0
    %1922 = vmatpush1.msra.mxu0 0.0
    %1923 = vmatprep.mubr.f32.mxu0 0.0
    %1924 = vmatmul.mubr.f32.gmra.mrb[0].mxu0 %v1848
    %v1925 = vpop.f32.mrb[0].mxu0
    %v1926 = vadd.f32 0.0, %v1925
    %v1927 = vpop.f32.mrb[0].mxu0
    %v1928 = vadd.f32 0.0, %v1927
    %1929 = vmatprep.mubr.f32.mxu0 0.0
    %1930 = vmatmul.mubr.f32.gmra.mrb[0].mxu0 %v1851
    %v1931 = vpop.f32.mrb[0].mxu0
    %v1932 = vadd.f32 0.0, %v1931
    %v1933 = vpop.f32.mrb[0].mxu0
    %v1934 = vadd.f32 0.0, %v1933
    %1935 = vmatprep.mubr.f32.mxu0 0.0
    %1936 = vmatmul.mubr.f32.gmra.mrb[0].mxu0 %v1854
    %v1937 = vpop.f32.mrb[0].mxu0
    %v1938 = vadd.f32 0.0, %v1937
    %v1939 = vpop.f32.mrb[0].mxu0
    %v1940 = vadd.f32 0.0, %v1939
    %1941 = vmatprep.mubr.f32.mxu0 0.0
    %1942 = vmatmul.mubr.f32.gmra.mrb[0].mxu0 %v1857
    %v1943 = vpop.f32.mrb[0].mxu0
    %v1944 = vadd.f32 0.0, %v1943
    %v1945 = vpop.f32.mrb[0].mxu0
    %v1946 = vadd.f32 0.0, %v1945
    %1947 = vdwg.mxu0
    %v1948 = vsel %vm786, %v1926, 0.0
    %v1949 = vsel %vm787, %v1928, 0.0
    %v1950 = vsel %vm786, %v1932, 0.0
    %v1951 = vsel %vm787, %v1934, 0.0
    %v1952 = vsel %vm786, %v1938, 0.0
    %v1953 = vsel %vm787, %v1940, 0.0
    %v1954 = vsel %vm786, %v1944, 0.0
    %v1955 = vsel %vm787, %v1946, 0.0
    %v1956 = vld [vmem:[%s1 + $0xb0] sm:$0xff]
    %v1957 = vld [vmem:[%s1 + $0xb8] sm:$0xff]
    %1960 = vrot.lane.b32.xlu0 %v1691, 1
    %v1961 = vpop.permute.xlu0 %1960
    %1962 = vrot.lane.b32.xlu0 %v1692, 1
    %v1963 = vpop.permute.xlu0 %1962
    %v1964 = vsel %vm55, %v1961, %v1963
    %v1967 = vsel %vm55, 0.0, %v1961
    %1969 = vset.pattern.permute.xlu0 0
    %1970 = vperm.xlu0 %1969, %v1956
    %v1971 = vpop.permute.xlu0 %1970
    %1974 = vset.pattern.permute.xlu0 0
    %1975 = vperm.xlu0 %1974, %v1957
    %v1976 = vpop.permute.xlu0 %1975
    %v1978 = vlaneseq
    %v1979 = vshrl.u32 %v1978, 7
    %v1980 = vsub.s32 0, %v1979
    %v1981 = vrot.slane %v1967, %v1980
    %v1982 = vlaneseq
    %v1983 = vshrl.u32 %v1982, 7
    %v1984 = vsub.s32 0, %v1983
    %v1985 = vrot.slane %v1964, %v1984
    %v1986 = vmul.f32 %v1971, %v1981
    %v1987 = vmul.f32 %v1971, %v1985
    %v1988 = vmul.f32 %v1976, %v1981
    %v1989 = vmul.f32 %v1976, %v1985
    %1990 = vset.pattern.permute.xlu0 1
    %1991 = vperm.xlu0 %1990, %v1956
    %v1992 = vpop.permute.xlu0 %1991
    %1994 = vset.pattern.permute.xlu0 1
    %1995 = vperm.xlu0 %1994, %v1957
    %v1996 = vpop.permute.xlu0 %1995
    %v1998 = vlaneseq
    %v1999 = vshrl.u32 %v1998, 7
    %v2000 = vsub.s32 0, %v1999
    %v2001 = vrot.slane %v1691, %v2000
    %v2002 = vlaneseq
    %v2003 = vshrl.u32 %v2002, 7
    %v2004 = vsub.s32 0, %v2003
    %v2005 = vrot.slane %v1692, %v2004
    %v2006 = vmul.f32 %v1992, %v2001
    %v2007 = vmul.f32 %v1992, %v2005
    %v2008 = vmul.f32 %v1996, %v2001
    %v2009 = vmul.f32 %v1996, %v2005
    %v2010 = vadd.f32 %v1986, %v2006
    %v2011 = vadd.f32 %v1987, %v2007
    %v2012 = vadd.f32 %v1988, %v2008
    %v2013 = vadd.f32 %v1989, %v2009
    %2014 = vrot.lane.b32.xlu0 %v1691, 127
    %v2015 = vpop.permute.xlu0 %2014
    %2016 = vrot.lane.b32.xlu0 %v1692, 127
    %v2017 = vpop.permute.xlu0 %2016
    %v2018 = vsel %vm104, %v2015, %v2017
    %v2021 = vsel %vm104, %v2017, 0.0
    %2022 = vset.pattern.permute.xlu0 2
    %2023 = vperm.xlu0 %2022, %v1956
    %v2024 = vpop.permute.xlu0 %2023
    %2026 = vset.pattern.permute.xlu0 2
    %2027 = vperm.xlu0 %2026, %v1957
    %v2028 = vpop.permute.xlu0 %2027
    %v2030 = vlaneseq
    %v2031 = vshrl.u32 %v2030, 7
    %v2032 = vsub.s32 0, %v2031
    %v2033 = vrot.slane %v2018, %v2032
    %v2034 = vlaneseq
    %v2035 = vshrl.u32 %v2034, 7
    %v2036 = vsub.s32 0, %v2035
    %v2037 = vrot.slane %v2021, %v2036
    %v2038 = vmul.f32 %v2024, %v2033
    %v2039 = vmul.f32 %v2024, %v2037
    %v2040 = vmul.f32 %v2028, %v2033
    %v2041 = vmul.f32 %v2028, %v2037
    %v2042 = vadd.f32 %v2010, %v2038
    %v2043 = vadd.f32 %v2011, %v2039
    %v2044 = vadd.f32 %v2012, %v2040
    %v2045 = vadd.f32 %v2013, %v2041
    %2046 = vset.pattern.permute.xlu0 3
    %2047 = vperm.xlu0 %2046, %v1956
    %v2048 = vpop.permute.xlu0 %2047
    %2050 = vset.pattern.permute.xlu0 3
    %2051 = vperm.xlu0 %2050, %v1957
    %v2052 = vpop.permute.xlu0 %2051
    %v2054 = vadd.f32 %v2042, %v2048
    %v2055 = vadd.f32 %v2043, %v2048
    %v2056 = vadd.f32 %v2044, %v2052
    %v2057 = vadd.f32 %v2045, %v2052
    %v2058 = vsel %vm341, %v2054, 0.0
    %v2059 = vsel %vm342, %v2055, 0.0
    %v2060 = vsel %vm341, %v2056, 0.0
    %v2061 = vsel %vm342, %v2057, 0.0
    %v2062 = vld [vmem:[%s1 + $0x138] sm:$0xff]
    %v2063 = vld [vmem:[%s1 + $0x140] sm:$0xff]
    %v2064 = vld [vmem:[%s1 + $0x148] sm:$0xff]
    %v2065 = vld [vmem:[%s1 + $0x150] sm:$0xff]
    %v2066 = vld [vmem:[%s1 + $0x158] sm:$0xff]
    %v2067 = vld [vmem:[%s1 + $0x160] sm:$0xff]
    %v2068 = vld [vmem:[%s1 + $0x168] sm:$0xff]
    %v2069 = vld [vmem:[%s1 + $0x170] sm:$0xff]
    %v2071 = vsel %vm1281, %v2062, 0
    %v2074 = vsel %vm1281, %v2063, 0
    %v2077 = vsel %vm1281, %v2064, 0
    %v2080 = vsel %vm1281, %v2065, 0
    %v2083 = vsel %vm1281, %v2066, 0
    %v2086 = vsel %vm1281, %v2067, 0
    %v2089 = vsel %vm1281, %v2068, 0
    %v2092 = vsel %vm1281, %v2069, 0
    %2094 = vmatprep.subr.mxu0 %v1818
    %2095 = vmatpush1.msra.mxu0 %v1817
    %2096 = vmatprep.subr.mxu0 %v1820
    %2097 = vmatpush1.msra.mxu0 %v1819
    %2098 = vmatprep.subr.mxu0 %v1822
    %2099 = vmatpush1.msra.mxu0 %v1821
    %2100 = vmatprep.subr.mxu0 %v1824
    %2101 = vmatpush1.msra.mxu0 %v1823
    %2102 = vmatprep.subr.mxu0 %v216
    %2103 = vmatpush1.msra.mxu0 %v216
    %2104 = vmatprep.subr.mxu0 0.0
    %2105 = vmatpush1.msra.mxu0 0.0
    %2106 = vmatprep.subr.mxu0 0.0
    %2107 = vmatpush1.msra.mxu0 0.0
    %2108 = vmatprep.subr.mxu0 0.0
    %2109 = vmatpush1.msra.mxu0 0.0
    %2110 = vmatprep.subr.mxu0 0.0
    %2111 = vmatpush1.msra.mxu0 0.0
    %2112 = vmatprep.subr.mxu0 0.0
    %2113 = vmatpush1.msra.mxu0 0.0
    %2114 = vmatprep.subr.mxu0 0.0
    %2115 = vmatpush1.msra.mxu0 0.0
    %2116 = vmatprep.subr.mxu0 0.0
    %2117 = vmatpush1.msra.mxu0 0.0
    %2118 = vmatprep.subr.mxu0 0.0
    %2119 = vmatpush1.msra.mxu0 0.0
    %2120 = vmatprep.subr.mxu0 0.0
    %2121 = vmatpush1.msra.mxu0 0.0
    %2122 = vmatprep.subr.mxu0 0.0
    %2123 = vmatpush1.msra.mxu0 0.0
    %2124 = vmatprep.subr.mxu0 0.0
    %2125 = vmatpush1.msra.mxu0 0.0
    %2126 = vmatprep.subr.mxu0 0.0
    %2127 = vmatpush1.msra.mxu0 0.0
    %2128 = vmatprep.subr.mxu0 0.0
    %2129 = vmatpush1.msra.mxu0 0.0
    %2130 = vmatprep.subr.mxu0 0.0
    %2131 = vmatpush1.msra.mxu0 0.0
    %2132 = vmatprep.subr.mxu0 0.0
    %2133 = vmatpush1.msra.mxu0 0.0
    %2134 = vmatprep.subr.mxu0 0.0
    %2135 = vmatpush1.msra.mxu0 0.0
    %2136 = vmatprep.subr.mxu0 0.0
    %2137 = vmatpush1.msra.mxu0 0.0
    %2138 = vmatprep.subr.mxu0 0.0
    %2139 = vmatpush1.msra.mxu0 0.0
    %2140 = vmatprep.subr.mxu0 0.0
    %2141 = vmatpush1.msra.mxu0 0.0
    %2142 = vmatprep.subr.mxu0 0.0
    %2143 = vmatpush1.msra.mxu0 0.0
    %2144 = vmatprep.subr.mxu0 0.0
    %2145 = vmatpush1.msra.mxu0 0.0
    %2146 = vmatprep.subr.mxu0 0.0
    %2147 = vmatpush1.msra.mxu0 0.0
    %2148 = vmatprep.subr.mxu0 0.0
    %2149 = vmatpush1.msra.mxu0 0.0
    %2150 = vmatprep.subr.mxu0 0.0
    %2151 = vmatpush1.msra.mxu0 0.0
    %2152 = vmatprep.subr.mxu0 0.0
    %2153 = vmatpush1.msra.mxu0 0.0
    %2154 = vmatprep.subr.mxu0 0.0
    %2155 = vmatpush1.msra.mxu0 0.0
    %2156 = vmatprep.subr.mxu0 0.0
    %2157 = vmatpush1.msra.mxu0 0.0
    %2158 = vmatprep.mubr.f32.mxu0 0.0
    %2159 = vmatmul.mubr.f32.gmra.mrb[0].mxu0 %v2071
    %v2160 = vpop.f32.mrb[0].mxu0
    %v2161 = vadd.f32 0.0, %v2160
    %v2162 = vpop.f32.mrb[0].mxu0
    %v2163 = vadd.f32 0.0, %v2162
    %2164 = vmatprep.mubr.f32.mxu0 0.0
    %2165 = vmatmul.mubr.f32.gmra.mrb[0].mxu0 %v2074
    %v2166 = vpop.f32.mrb[0].mxu0
    %v2167 = vadd.f32 0.0, %v2166
    %v2168 = vpop.f32.mrb[0].mxu0
    %v2169 = vadd.f32 0.0, %v2168
    %2170 = vmatprep.mubr.f32.mxu0 0.0
    %2171 = vmatmul.mubr.f32.gmra.mrb[0].mxu0 %v2077
    %v2172 = vpop.f32.mrb[0].mxu0
    %v2173 = vadd.f32 0.0, %v2172
    %v2174 = vpop.f32.mrb[0].mxu0
    %v2175 = vadd.f32 0.0, %v2174
    %2176 = vmatprep.mubr.f32.mxu0 0.0
    %2177 = vmatmul.mubr.f32.gmra.mrb[0].mxu0 %v2080
    %v2178 = vpop.f32.mrb[0].mxu0
    %v2179 = vadd.f32 0.0, %v2178
    %v2180 = vpop.f32.mrb[0].mxu0
    %v2181 = vadd.f32 0.0, %v2180
    %2182 = vmatprep.mubr.f32.mxu0 0.0
    %2183 = vmatmul.mubr.f32.gmra.mrb[0].mxu0 %v2083
    %v2184 = vpop.f32.mrb[0].mxu0
    %v2185 = vadd.f32 0.0, %v2184
    %v2186 = vpop.f32.mrb[0].mxu0
    %v2187 = vadd.f32 0.0, %v2186
    %2188 = vmatprep.mubr.f32.mxu0 0.0
    %2189 = vmatmul.mubr.f32.gmra.mrb[0].mxu0 %v2086
    %v2190 = vpop.f32.mrb[0].mxu0
    %v2191 = vadd.f32 0.0, %v2190
    %v2192 = vpop.f32.mrb[0].mxu0
    %v2193 = vadd.f32 0.0, %v2192
    %2194 = vmatprep.mubr.f32.mxu0 0.0
    %2195 = vmatmul.mubr.f32.gmra.mrb[0].mxu0 %v2089
    %v2196 = vpop.f32.mrb[0].mxu0
    %v2197 = vadd.f32 0.0, %v2196
    %v2198 = vpop.f32.mrb[0].mxu0
    %v2199 = vadd.f32 0.0, %v2198
    %2200 = vmatprep.mubr.f32.mxu0 0.0
    %2201 = vmatmul.mubr.f32.gmra.mrb[0].mxu0 %v2092
    %v2202 = vpop.f32.mrb[0].mxu0
    %v2203 = vadd.f32 0.0, %v2202
    %v2204 = vpop.f32.mrb[0].mxu0
    %v2205 = vadd.f32 0.0, %v2204
    %2206 = vdwg.mxu0
    %2215 = vrot.lane.b32.xlu0 %v2185, 1
    %v2216 = vpop.permute.xlu0 %2215
    %2217 = vrot.lane.b32.xlu0 %v2187, 1
    %v2218 = vpop.permute.xlu0 %2217
    %2219 = vrot.lane.b32.xlu0 %v2191, 1
    %v2220 = vpop.permute.xlu0 %2219
    %2221 = vrot.lane.b32.xlu0 %v2193, 1
    %v2222 = vpop.permute.xlu0 %2221
    %2223 = vrot.lane.b32.xlu0 %v2197, 1
    %v2224 = vpop.permute.xlu0 %2223
    %2225 = vrot.lane.b32.xlu0 %v2199, 1
    %v2226 = vpop.permute.xlu0 %2225
    %2227 = vrot.lane.b32.xlu0 %v2203, 1
    %v2228 = vpop.permute.xlu0 %2227
    %2229 = vrot.lane.b32.xlu0 %v2205, 1
    %v2230 = vpop.permute.xlu0 %2229
    %v2231 = vsel %vm55, %v2216, %v2218
    %v2232 = vsel %vm55, %v2220, %v2222
    %v2233 = vsel %vm55, %v2224, %v2226
    %v2234 = vsel %vm55, %v2228, %v2230
    %v2243 = vsel %vm55, 0.0, %v2216
    %v2244 = vsel %vm55, 0.0, %v2220
    %v2245 = vsel %vm55, 0.0, %v2224
    %v2246 = vsel %vm55, 0.0, %v2228
    %v2247 = vadd.f32 %v2161, %v2243
    %v2248 = vadd.f32 %v2163, %v2231
    %v2249 = vadd.f32 %v2167, %v2244
    %v2250 = vadd.f32 %v2169, %v2232
    %v2251 = vadd.f32 %v2173, %v2245
    %v2252 = vadd.f32 %v2175, %v2233
    %v2253 = vadd.f32 %v2179, %v2246
    %v2254 = vadd.f32 %v2181, %v2234
    %s2255 = sld [smem:[#allocation2 + $0xc]]
    %vm2256 = vcmp.ge.f32.partialorder %v2247, 0.0
    %vm2257 = vcmp.ge.f32.partialorder %v2248, 0.0
    %vm2258 = vcmp.ge.f32.partialorder %v2249, 0.0
    %vm2259 = vcmp.ge.f32.partialorder %v2250, 0.0
    %vm2260 = vcmp.ge.f32.partialorder %v2251, 0.0
    %vm2261 = vcmp.ge.f32.partialorder %v2252, 0.0
    %vm2262 = vcmp.ge.f32.partialorder %v2253, 0.0
    %vm2263 = vcmp.ge.f32.partialorder %v2254, 0.0
    %v2264 = vstv %s2255
    %v2265 = vmul.f32 %v2264, %v2247
    %v2266 = vmul.f32 %v2264, %v2248
    %v2267 = vmul.f32 %v2264, %v2249
    %v2268 = vmul.f32 %v2264, %v2250
    %v2269 = vmul.f32 %v2264, %v2251
    %v2270 = vmul.f32 %v2264, %v2252
    %v2271 = vmul.f32 %v2264, %v2253
    %v2272 = vmul.f32 %v2264, %v2254
    %v2273 = vsel %vm2256, %v2247, %v2265
    %v2274 = vsel %vm2257, %v2248, %v2266
    %v2275 = vsel %vm2258, %v2249, %v2267
    %v2276 = vsel %vm2259, %v2250, %v2268
    %v2277 = vsel %vm2260, %v2251, %v2269
    %v2278 = vsel %vm2261, %v2252, %v2270
    %v2279 = vsel %vm2262, %v2253, %v2271
    %v2280 = vsel %vm2263, %v2254, %v2272
    %v2281 = vsel %vm786, %v2273, 0.0
    %v2282 = vsel %vm787, %v2274, 0.0
    %v2283 = vsel %vm786, %v2275, 0.0
    %v2284 = vsel %vm787, %v2276, 0.0
    %v2285 = vsel %vm786, %v2277, 0.0
    %v2286 = vsel %vm787, %v2278, 0.0
    %v2287 = vsel %vm786, %v2279, 0.0
    %v2288 = vsel %vm787, %v2280, 0.0
    %v2289 = vadd.f32 %v1948, %v2281
    %v2290 = vadd.f32 %v1949, %v2282
    %v2291 = vadd.f32 %v1950, %v2283
    %v2292 = vadd.f32 %v1951, %v2284
    %v2293 = vadd.f32 %v1952, %v2285
    %v2294 = vadd.f32 %v1953, %v2286
    %v2295 = vadd.f32 %v1954, %v2287
    %v2296 = vadd.f32 %v1955, %v2288
    %v2297 = vld [vmem:[%s1 + $0x118] sm:$0xff]
    %v2298 = vld [vmem:[%s1 + $0x120] sm:$0xff]
    %v2299 = vld [vmem:[%s1 + $0x128] sm:$0xff]
    %v2300 = vld [vmem:[%s1 + $0x130] sm:$0xff]
    %v2302 = vsel %vm1281, %v2297, 0
    %v2305 = vsel %vm1281, %v2298, 0
    %v2308 = vsel %vm1281, %v2299, 0
    %v2311 = vsel %vm1281, %v2300, 0
    %2313 = vmatprep.subr.mxu0 %v2290
    %2314 = vmatpush1.msra.mxu0 %v2289
    %2315 = vmatprep.subr.mxu0 %v2292
    %2316 = vmatpush1.msra.mxu0 %v2291
    %2317 = vmatprep.subr.mxu0 %v2294
    %2318 = vmatpush1.msra.mxu0 %v2293
    %2319 = vmatprep.subr.mxu0 %v2296
    %2320 = vmatpush1.msra.mxu0 %v2295
    %2321 = vmatprep.subr.mxu0 %v216
    %2322 = vmatpush1.msra.mxu0 %v216
    %2323 = vmatprep.subr.mxu0 0.0
    %2324 = vmatpush1.msra.mxu0 0.0
    %2325 = vmatprep.subr.mxu0 0.0
    %2326 = vmatpush1.msra.mxu0 0.0
    %2327 = vmatprep.subr.mxu0 0.0
    %2328 = vmatpush1.msra.mxu0 0.0
    %2329 = vmatprep.subr.mxu0 0.0
    %2330 = vmatpush1.msra.mxu0 0.0
    %2331 = vmatprep.subr.mxu0 0.0
    %2332 = vmatpush1.msra.mxu0 0.0
    %2333 = vmatprep.subr.mxu0 0.0
    %2334 = vmatpush1.msra.mxu0 0.0
    %2335 = vmatprep.subr.mxu0 0.0
    %2336 = vmatpush1.msra.mxu0 0.0
    %2337 = vmatprep.subr.mxu0 0.0
    %2338 = vmatpush1.msra.mxu0 0.0
    %2339 = vmatprep.subr.mxu0 0.0
    %2340 = vmatpush1.msra.mxu0 0.0
    %2341 = vmatprep.subr.mxu0 0.0
    %2342 = vmatpush1.msra.mxu0 0.0
    %2343 = vmatprep.subr.mxu0 0.0
    %2344 = vmatpush1.msra.mxu0 0.0
    %2345 = vmatprep.subr.mxu0 0.0
    %2346 = vmatpush1.msra.mxu0 0.0
    %2347 = vmatprep.subr.mxu0 0.0
    %2348 = vmatpush1.msra.mxu0 0.0
    %2349 = vmatprep.subr.mxu0 0.0
    %2350 = vmatpush1.msra.mxu0 0.0
    %2351 = vmatprep.subr.mxu0 0.0
    %2352 = vmatpush1.msra.mxu0 0.0
    %2353 = vmatprep.subr.mxu0 0.0
    %2354 = vmatpush1.msra.mxu0 0.0
    %2355 = vmatprep.subr.mxu0 0.0
    %2356 = vmatpush1.msra.mxu0 0.0
    %2357 = vmatprep.subr.mxu0 0.0
    %2358 = vmatpush1.msra.mxu0 0.0
    %2359 = vmatprep.subr.mxu0 0.0
    %2360 = vmatpush1.msra.mxu0 0.0
    %2361 = vmatprep.subr.mxu0 0.0
    %2362 = vmatpush1.msra.mxu0 0.0
    %2363 = vmatprep.subr.mxu0 0.0
    %2364 = vmatpush1.msra.mxu0 0.0
    %2365 = vmatprep.subr.mxu0 0.0
    %2366 = vmatpush1.msra.mxu0 0.0
    %2367 = vmatprep.subr.mxu0 0.0
    %2368 = vmatpush1.msra.mxu0 0.0
    %2369 = vmatprep.subr.mxu0 0.0
    %2370 = vmatpush1.msra.mxu0 0.0
    %2371 = vmatprep.subr.mxu0 0.0
    %2372 = vmatpush1.msra.mxu0 0.0
    %2373 = vmatprep.subr.mxu0 0.0
    %2374 = vmatpush1.msra.mxu0 0.0
    %2375 = vmatprep.subr.mxu0 0.0
    %2376 = vmatpush1.msra.mxu0 0.0
    %2377 = vmatprep.mubr.f32.mxu0 0.0
    %2378 = vmatmul.mubr.f32.gmra.mrb[0].mxu0 %v2302
    %v2379 = vpop.f32.mrb[0].mxu0
    %v2380 = vadd.f32 0.0, %v2379
    %v2381 = vpop.f32.mrb[0].mxu0
    %v2382 = vadd.f32 0.0, %v2381
    %2383 = vmatprep.mubr.f32.mxu0 0.0
    %2384 = vmatmul.mubr.f32.gmra.mrb[0].mxu0 %v2305
    %v2385 = vpop.f32.mrb[0].mxu0
    %v2386 = vadd.f32 0.0, %v2385
    %v2387 = vpop.f32.mrb[0].mxu0
    %v2388 = vadd.f32 0.0, %v2387
    %2389 = vmatprep.mubr.f32.mxu0 0.0
    %2390 = vmatmul.mubr.f32.gmra.mrb[0].mxu0 %v2308
    %v2391 = vpop.f32.mrb[0].mxu0
    %v2392 = vadd.f32 0.0, %v2391
    %v2393 = vpop.f32.mrb[0].mxu0
    %v2394 = vadd.f32 0.0, %v2393
    %2395 = vmatprep.mubr.f32.mxu0 0.0
    %2396 = vmatmul.mubr.f32.gmra.mrb[0].mxu0 %v2311
    %v2397 = vpop.f32.mrb[0].mxu0
    %v2398 = vadd.f32 0.0, %v2397
    %v2399 = vpop.f32.mrb[0].mxu0
    %v2400 = vadd.f32 0.0, %v2399
    %2401 = vdwg.mxu0
    %2406 = vrot.lane.b32.xlu0 %v2392, 1
    %v2407 = vpop.permute.xlu0 %2406
    %2408 = vrot.lane.b32.xlu0 %v2394, 1
    %v2409 = vpop.permute.xlu0 %2408
    %2410 = vrot.lane.b32.xlu0 %v2398, 1
    %v2411 = vpop.permute.xlu0 %2410
    %2412 = vrot.lane.b32.xlu0 %v2400, 1
    %v2413 = vpop.permute.xlu0 %2412
    %v2414 = vsel %vm55, %v2407, %v2409
    %v2415 = vsel %vm55, %v2411, %v2413
    %v2420 = vsel %vm55, 0.0, %v2407
    %v2421 = vsel %vm55, 0.0, %v2411
    %v2422 = vadd.f32 %v2380, %v2420
    %v2423 = vadd.f32 %v2382, %v2414
    %v2424 = vadd.f32 %v2386, %v2421
    %v2425 = vadd.f32 %v2388, %v2415
    %s2426 = sld [smem:[#allocation2 + $0xb]]
    %vm2427 = vcmp.ge.f32.partialorder %v2422, 0.0
    %vm2428 = vcmp.ge.f32.partialorder %v2423, 0.0
    %vm2429 = vcmp.ge.f32.partialorder %v2424, 0.0
    %vm2430 = vcmp.ge.f32.partialorder %v2425, 0.0
    %v2431 = vstv %s2426
    %v2432 = vmul.f32 %v2431, %v2422
    %v2433 = vmul.f32 %v2431, %v2423
    %v2434 = vmul.f32 %v2431, %v2424
    %v2435 = vmul.f32 %v2431, %v2425
    %v2436 = vsel %vm2427, %v2422, %v2432
    %v2437 = vsel %vm2428, %v2423, %v2433
    %v2438 = vsel %vm2429, %v2424, %v2434
    %v2439 = vsel %vm2430, %v2425, %v2435
    %v2440 = vsel %vm341, %v2436, 0.0
    %v2441 = vsel %vm342, %v2437, 0.0
    %v2442 = vsel %vm341, %v2438, 0.0
    %v2443 = vsel %vm342, %v2439, 0.0
    %v2444 = vadd.f32 %v2058, %v2440
    %v2445 = vadd.f32 %v2059, %v2441
    %v2446 = vadd.f32 %v2060, %v2442
    %v2447 = vadd.f32 %v2061, %v2443
    %v2448 = vld [vmem:[%s1 + $0x110] sm:$0x3]
    %vm2449 = vcmask 138240
    %v2451 = vsel %vm2449, %v2448, 0
    %2453 = vmatprep.subr.mxu0 %v2445
    %2454 = vmatpush1.msra.mxu0 %v2444
    %2455 = vmatprep.subr.mxu0 %v2447
    %2456 = vmatpush1.msra.mxu0 %v2446
    %2457 = vmatprep.subr.mxu0 %v216
    %2458 = vmatpush1.msra.mxu0 %v216
    %2459 = vmatprep.subr.mxu0 0.0
    %2460 = vmatpush1.msra.mxu0 0.0
    %2461 = vmatprep.subr.mxu0 0.0
    %2462 = vmatpush1.msra.mxu0 0.0
    %2463 = vmatprep.subr.mxu0 0.0
    %2464 = vmatpush1.msra.mxu0 0.0
    %2465 = vmatprep.subr.mxu0 0.0
    %2466 = vmatpush1.msra.mxu0 0.0
    %2467 = vmatprep.subr.mxu0 0.0
    %2468 = vmatpush1.msra.mxu0 0.0
    %2469 = vmatprep.subr.mxu0 0.0
    %2470 = vmatpush1.msra.mxu0 0.0
    %2471 = vmatprep.subr.mxu0 0.0
    %2472 = vmatpush1.msra.mxu0 0.0
    %2473 = vmatprep.subr.mxu0 0.0
    %2474 = vmatpush1.msra.mxu0 0.0
    %2475 = vmatprep.subr.mxu0 0.0
    %2476 = vmatpush1.msra.mxu0 0.0
    %2477 = vmatprep.subr.mxu0 0.0
    %2478 = vmatpush1.msra.mxu0 0.0
    %2479 = vmatprep.subr.mxu0 0.0
    %2480 = vmatpush1.msra.mxu0 0.0
    %2481 = vmatprep.subr.mxu0 0.0
    %2482 = vmatpush1.msra.mxu0 0.0
    %2483 = vmatprep.subr.mxu0 0.0
    %2484 = vmatpush1.msra.mxu0 0.0
    %2485 = vmatprep.subr.mxu0 0.0
    %2486 = vmatpush1.msra.mxu0 0.0
    %2487 = vmatprep.subr.mxu0 0.0
    %2488 = vmatpush1.msra.mxu0 0.0
    %2489 = vmatprep.subr.mxu0 0.0
    %2490 = vmatpush1.msra.mxu0 0.0
    %2491 = vmatprep.subr.mxu0 0.0
    %2492 = vmatpush1.msra.mxu0 0.0
    %2493 = vmatprep.subr.mxu0 0.0
    %2494 = vmatpush1.msra.mxu0 0.0
    %2495 = vmatprep.subr.mxu0 0.0
    %2496 = vmatpush1.msra.mxu0 0.0
    %2497 = vmatprep.subr.mxu0 0.0
    %2498 = vmatpush1.msra.mxu0 0.0
    %2499 = vmatprep.subr.mxu0 0.0
    %2500 = vmatpush1.msra.mxu0 0.0
    %2501 = vmatprep.subr.mxu0 0.0
    %2502 = vmatpush1.msra.mxu0 0.0
    %2503 = vmatprep.subr.mxu0 0.0
    %2504 = vmatpush1.msra.mxu0 0.0
    %2505 = vmatprep.subr.mxu0 0.0
    %2506 = vmatpush1.msra.mxu0 0.0
    %2507 = vmatprep.subr.mxu0 0.0
    %2508 = vmatpush1.msra.mxu0 0.0
    %2509 = vmatprep.subr.mxu0 0.0
    %2510 = vmatpush1.msra.mxu0 0.0
    %2511 = vmatprep.subr.mxu0 0.0
    %2512 = vmatpush1.msra.mxu0 0.0
    %2513 = vmatprep.subr.mxu0 0.0
    %2514 = vmatpush1.msra.mxu0 0.0
    %2515 = vmatprep.subr.mxu0 0.0
    %2516 = vmatpush1.msra.mxu0 0.0
    %2517 = vmatprep.mubr.f32.mxu0 0.0
    %2518 = vmatmul.mubr.f32.gmra.mrb[0].mxu0 %v2451
    %v2519 = vpop.f32.mrb[0].mxu0
    %v2520 = vadd.f32 0.0, %v2519
    %v2521 = vpop.f32.mrb[0].mxu0
    %v2522 = vadd.f32 0.0, %v2521
    %2523 = vdwg.mxu0
    %v2526 = vrot.slane %v2520, 1
    %v2527 = vrot.slane %v2522, 1
    %2528 = vrot.lane.b32.xlu0 %v2526, 1
    %v2529 = vpop.permute.xlu0 %2528
    %2530 = vrot.lane.b32.xlu0 %v2527, 1
    %v2531 = vpop.permute.xlu0 %2530
    %v2532 = vsel %vm55, %v2529, %v2531
    %v2535 = vsel %vm55, 0.0, %v2529
    %v2536 = vadd.f32 %v2520, %v2535
    %v2537 = vadd.f32 %v2522, %v2532
    %s2538 = sld [smem:[#allocation2 + $0xa]]
    %vm2539 = vcmp.ge.f32.partialorder %v2536, 0.0
    %vm2540 = vcmp.ge.f32.partialorder %v2537, 0.0
    %v2541 = vstv %s2538
    %v2542 = vmul.f32 %v2541, %v2536
    %v2543 = vmul.f32 %v2541, %v2537
    %v2544 = vsel %vm2539, %v2536, %v2542
    %v2545 = vsel %vm2540, %v2537, %v2543
    %v2546 = vsel %vm159, %v2544, 0.0
    %v2547 = vsel %vm160, %v2545, 0.0
    %v2550 = vcombine.low %v1364, %v1365
    %2552 = vst [vmem:[%s3] sm:$0xff] %v2550
    %v2555 = vcombine.low %v2546, %v2547
    %v2557 = vunpack.c.l.s4 1966171168
    %v2558 = vunpack.c.0.s8 %v2557
    %v2559 = vlaneseq
    %v2560 = vshrl.u32 %v2559, 7
    %v2561 = vsub.s32 %v2558, %v2560
    %v2562 = vrot.slane %v2555, %v2561
    %v2564 = vunpack.c.l.s4 1966171168
    %v2565 = vunpack.c.0.s8 %v2564
    %v2566 = vlaneseq
    %v2567 = vshrl.u32 %v2566, 7
    %v2568 = vsub.s32 %v2565, %v2567
    %v2569 = vrot.slane %v2562, %v2568
    %v2571 = vlaneseq
    %vm2572 = vcmp.ge.s32.totalorder %v2571, 0
    %vm2573 = vcmp.lt.s32.totalorder %v2571, 256
    %vm2574 = vmand %vm2572, %vm2573
    %2575 = vst.msk [vmem:[#allocation5] sm:$0x3] %vm2574, %v2569
    %2576 = vst [vmem:[%s5] sm:$0xff] %v1521
    %2577 = vst [vmem:[%s5 + $0x8] sm:$0xff] %v1522
    %2578 = vst [vmem:[%s6] sm:$0xff] %v1606
    %2579 = vst [vmem:[%s6 + $0x8] sm:$0xff] %v1607
    %v2580 = vcombine.low %v1691, %v1692
    %v2582 = vunpack.c.l.s4 1966171168
    %v2583 = vunpack.c.0.s8 %v2582
    %v2584 = vlaneseq
    %v2585 = vshrl.u32 %v2584, 7
    %v2586 = vsub.s32 %v2583, %v2585
    %v2587 = vrot.slane %v2580, %v2586
    %v2589 = vunpack.c.l.s4 1966171168
    %v2590 = vunpack.c.0.s8 %v2589
    %v2591 = vlaneseq
    %v2592 = vshrl.u32 %v2591, 7
    %v2593 = vsub.s32 %v2590, %v2592
    %v2594 = vrot.slane %v2587, %v2593
    %2596 = vst.msk [vmem:[#allocation6] sm:$0x3] %vm2574, %v2594
    // Predicated region
    $region18: #{dhrnet_forward.1} parent=1 // pred_check
      _
    $region19: #{dhrnet_forward.1} parent=1 // pred_check_branch
      %2598 = sbr.rel (0) target = $region21
    $region20: #{dhrnet_forward.1} parent=1 // pred_region
      _
    $region21: #{dhrnet_forward.1} parent=1 // pred_fallthru
      _
    // Predicated region
    $region22: #{dhrnet_forward.1} parent=1 // pred_check
      _
    $region23: #{dhrnet_forward.1} parent=1 // pred_check_branch
      %2600 = sbr.rel (0) target = $region25
    $region24: #{dhrnet_forward.1} parent=1 // pred_region
      %s2602 = ssub.s32 32, 32
      %2603 = vsyncadd [#allocation3], %s2602
      %s2605 = sshll.u32 [#allocation5], 4
      %s2606 = int_to_ptr.vmem [resolvable:$true] %s2605
      %2608 = dma.vmem_to_hbm [thread:$0]  %s2606, 32, %s4, [#allocation3]
    $region25: #{dhrnet_forward.1} parent=1 // pred_fallthru
      _
    // Predicated region
    $region26: #{dhrnet_forward.1} parent=1 // pred_check
      _
    $region27: #{dhrnet_forward.1} parent=1 // pred_check_branch
      %2610 = sbr.rel (0) target = $region29
    $region28: #{dhrnet_forward.1} parent=1 // pred_region
      _
    $region29: #{dhrnet_forward.1} parent=1 // pred_fallthru
      _
    // Predicated region
    $region30: #{dhrnet_forward.1} parent=1 // pred_check
      _
    $region31: #{dhrnet_forward.1} parent=1 // pred_check_branch
      %2612 = sbr.rel (0) target = $region33
    $region32: #{dhrnet_forward.1} parent=1 // pred_region
      _
    $region33: #{dhrnet_forward.1} parent=1 // pred_fallthru
      _
    // Predicated region
    $region34: #{dhrnet_forward.1} parent=1 // pred_check
      _
    $region35: #{dhrnet_forward.1} parent=1 // pred_check_branch
      %2614 = sbr.rel (0) target = $region37
    $region36: #{dhrnet_forward.1} parent=1 // pred_region
      %s2616 = ssub.s32 32, 32
      %2617 = vsyncadd [#allocation7], %s2616
      %s2619 = sshll.u32 [#allocation6], 4
      %s2620 = int_to_ptr.vmem [resolvable:$true] %s2619
      %2622 = dma.vmem_to_hbm [thread:$0]  %s2620, 32, %s7, [#allocation7]
    $region37: #{dhrnet_forward.1} parent=1 // pred_fallthru
      _
    // Predicated region
    $region38: #{dhrnet_forward.1} parent=1 // pred_check
      _
    $region39: #{dhrnet_forward.1} parent=1 // pred_check_branch
      %2624 = sbr.rel (0) target = $region41
    $region40: #{dhrnet_forward.1} parent=1 // pred_region
      _
    $region41: #{dhrnet_forward.1} parent=1 // pred_fallthru
      _
    // Predicated region
    $region42: #{dhrnet_forward.1} parent=1 // pred_check
      _
    $region43: #{dhrnet_forward.1} parent=1 // pred_check_branch
      %2626 = sbr.rel (0) target = $region45
    $region44: #{dhrnet_forward.1} parent=1 // pred_region
      %2627 = dma.done [#allocation3], 32
    $region45: #{dhrnet_forward.1} parent=1 // pred_fallthru
      _
    // Predicated region
    $region46: #{dhrnet_forward.1} parent=1 // pred_check
      _
    $region47: #{dhrnet_forward.1} parent=1 // pred_check_branch
      %2629 = sbr.rel (0) target = $region49
    $region48: #{dhrnet_forward.1} parent=1 // pred_region
      _
    $region49: #{dhrnet_forward.1} parent=1 // pred_fallthru
      _
    // Predicated region
    $region50: #{dhrnet_forward.1} parent=1 // pred_check
      _
    $region51: #{dhrnet_forward.1} parent=1 // pred_check_branch
      %2631 = sbr.rel (0) target = $region53
    $region52: #{dhrnet_forward.1} parent=1 // pred_region
      _
    $region53: #{dhrnet_forward.1} parent=1 // pred_fallthru
      _
    // Predicated region
    $region54: #{dhrnet_forward.1} parent=1 // pred_check
      _
    $region55: #{dhrnet_forward.1} parent=1 // pred_check_branch
      %2633 = sbr.rel (0) target = $region57
    $region56: #{dhrnet_forward.1} parent=1 // pred_region
      %2634 = dma.done [#allocation7], 32
    $region57: #{dhrnet_forward.1} parent=1 // pred_fallthru
      _
    %2635 = vsyncpa [#allocation3], 1
    %2636 = vsyncpa [#allocation7], 1
    %2637 = vsyncpa [#allocation4], 1

</llo_original>
